<compile_context>
chip_gen: v7x
topology: tpu7x:2x2x1
jax: 0.10.0
libtpu: 0.0.40
codegen_flags: <defaults>
</compile_context>

<pallas_src>
import functools

import numpy as np
import jax
import jax.numpy as jnp
from jax.experimental import pallas as pl
from jax.experimental.pallas import tpu as pltpu


def _cross_attn_block_kernel(
    x_ref, y_ref,              # (1, N, C), (1, TM, C)
    g1_ref, b1_ref,            # (1, C) shared norm1 gamma / beta (as in the module)
    wq_ref, wkv_ref,           # (C, C), (C, 2C)  pre-transposed: proj == act @ W
    wph_ref, bp_ref,           # (H, Dh, C), (1, C)
    yout_ref, attn_ref,        # (1, TM, C), (1, H, TM, N)
    kh_ref, vh_ref,            # VMEM scratch (H, N, Dh): persists across the m grid axis
    *, num_heads, scale, eps, mxu_dtype, head_chunk, hoist_kv,
):
    cdt = mxu_dtype                       # MXU operand dtype (bf16 when inputs are f32)
    C = wq_ref.shape[0]
    Dh = C // num_heads
    N = x_ref.shape[1]
    TM = y_ref.shape[1]

    gamma = g1_ref[...].astype(jnp.float32)    # (1, C)
    beta = b1_ref[...].astype(jnp.float32)     # (1, C)

    def layernorm(t):
        t32 = t.astype(jnp.float32)
        mu = jnp.mean(t32, axis=-1, keepdims=True)
        d = t32 - mu
        var = jnp.mean(d * d, axis=-1, keepdims=True)
        return (d * jax.lax.rsqrt(var + eps) * gamma + beta).astype(cdt)

    def compute_kv():
        # LN(x) + fused K/V projection + head relayout -- done once per batch index
        # (when hoisted), results live in VMEM scratch for every query tile.
        xn = layernorm(x_ref[0])                                           # (N, C) cdt
        kv = jnp.dot(xn, wkv_ref[...].astype(cdt),
                     preferred_element_type=jnp.float32)                   # (N, 2C) f32
        k = kv[:, :C]
        v = kv[:, C:]
        kh_ref[...] = jnp.transpose(k.reshape(N, num_heads, Dh), (1, 0, 2)).astype(cdt)
        vh_ref[...] = jnp.transpose(v.reshape(N, num_heads, Dh), (1, 0, 2)).astype(cdt)

    if hoist_kv:
        # m grid axis is 'arbitrary' -> scratch persists; recompute only when b changes
        # (m resets to 0 for each new batch index).
        pl.when(pl.program_id(1) == 0)(compute_kv)
    else:
        compute_kv()

    # Query path (per query tile).  q is pre-scaled (TM*C muls, cheaper than scaling
    # the (H, TM, N) score tensor).
    y = y_ref[0]                                                           # (TM, C)
    yn = layernorm(y)
    q = jnp.dot(yn, wq_ref[...].astype(cdt),
                preferred_element_type=jnp.float32) * scale                # (TM, C) f32
    qh = jnp.transpose(q.reshape(TM, num_heads, Dh), (1, 0, 2)).astype(cdt)  # (H, TM, Dh)

    attn_is_cdt = np.dtype(attn_ref.dtype) == np.dtype(cdt)
    o_acc = jnp.zeros((TM, C), jnp.float32)

    # Head-chunked attention: bounds the live f32 (hc, TM, N) softmax slab.
    for h0 in range(0, num_heads, head_chunk):
        hc = min(head_chunk, num_heads - h0)
        sl = slice(h0, h0 + hc)
        kc = kh_ref[sl]                                                    # (hc, N, Dh) cdt
        vc = vh_ref[sl]                                                    # (hc, N, Dh) cdt

        s = jnp.einsum("hmd,hnd->hmn", qh[sl], kc,
                       preferred_element_type=jnp.float32)                 # (hc, TM, N) f32
        s = s - jnp.max(s, axis=-1, keepdims=True)
        e = jnp.exp(s)
        # Exact normalization (EUP reciprocal, full precision) so exported attention
        # rows sum to 1 like torch.softmax.
        p = e * pl.reciprocal(jnp.sum(e, axis=-1, keepdims=True))

        pc = p.astype(cdt)                                                 # reused below
        attn_ref[0, sl] = pc if attn_is_cdt else p.astype(attn_ref.dtype)

        oc = jnp.einsum("hmn,hnd->hmd", pc, vc,
                        preferred_element_type=jnp.float32)                # (hc, TM, Dh)
        # Head-merge fused into the output projection: per-head matmul against
        # wp[h] (Dh, C), summed over heads -- no (H,TM,Dh)->(TM,H*Dh) relayout.
        oc = jnp.einsum("hmd,hdc->hmc", oc.astype(cdt), wph_ref[sl].astype(cdt),
                        preferred_element_type=jnp.float32)                # (hc, TM, C)
        o_acc = o_acc + jnp.sum(oc, axis=0)

    o_acc = o_acc + bp_ref[...].astype(jnp.float32)
    # Residual: y + drop_path(attn_out); drop_path == Identity.
    yout_ref[0] = (y.astype(jnp.float32) + o_acc).astype(yout_ref.dtype)


# ----------------------------- tiling / VMEM heuristics -----------------------------

def _vmem_budget_bytes():
    try:
        info = pltpu.get_tpu_info()
        cap = int(getattr(info, "vmem_capacity_bytes", 64 * 1024 * 1024))
    except Exception:
        cap = 64 * 1024 * 1024  # conservative: v7x per-TensorCore VMEM
    return int(0.85 * min(cap, 128 * 1024 * 1024))


def _auto_head_chunk(num_heads, tm, n, cap_bytes=4 * 1024 * 1024):
    # Largest divisor of H whose f32 (hc, TM, N) score slab stays under a few MiB.
    for hc in range(num_heads, 0, -1):
        if num_heads % hc == 0 and hc * tm * n * 4 <= cap_bytes:
            return hc
    return 1


def _vmem_estimate(tm, hc, n, c, num_heads, in_dt, mxu_dt):
    ib = np.dtype(in_dt).itemsize
    cb = np.dtype(mxu_dt).itemsize
    dh = c // num_heads
    blocks = 2 * (tm * c * ib + tm * c * ib + num_heads * tm * n * ib)  # y, y_out, attn (x2 bufs)
    blocks += 2 * n * c * ib                                            # x block (resident over m)
    blocks += 2 * (4 * c * c + 3 * c) * ib                              # weights / LN params (worst case x2)
    scratch = 2 * num_heads * n * dh * cb                               # hoisted K/V scratch
    live = (2 * hc * tm * n * 4 + hc * tm * n * cb                      # scores/probs f32 + cast
            + hc * tm * c * 4                                           # per-chunk projected f32
            + 4 * tm * c * 4                                            # q / o_acc / temporaries
            + 2 * n * c * 4)                                            # fused K/V projection f32
    return blocks + scratch + live


def _auto_query_tile(m, n, c, num_heads, in_dt, mxu_dt, budget):
    # Candidates are M itself (full extent, always legal) and multiples of 8 dividing M.
    cands = sorted({t for t in (1024, 512, 256, 128, 64, 32, 16, 8)
                    if t < m and m % t == 0} | {m}, reverse=True)
    for tm in cands:
        hc = _auto_head_chunk(num_heads, tm, n)
        if _vmem_estimate(tm, hc, n, c, num_heads, in_dt, mxu_dt) <= budget:
            return tm
    return cands[-1]


# ------------------------------------ wrapper ----------------------------------------

def cross_attention_block(x, y, params, *, num_heads, eps=1e-5,
                          query_tile=None, head_chunk=None, mxu_dtype=None):
    """x: (B, N, C) key/value source, y: (B, M, C) query source / residual stream.

    Returns (y + proj(softmax(q k^T / sqrt(Dh)) v), attn) exactly like
    CrossAttentionBlock.forward (all dropouts are 0, DropPath is Identity).
    """
    B, N, C = x.shape
    _, M, _ = y.shape
    assert C % num_heads == 0
    Dh = C // num_heads
    scale = Dh ** (-0.5)

    g1, b1, wq, wk, wv, wp, bp = params
    # Fuse K and V projections host-side into one (C, 2C) weight (single MXU pass in-kernel).
    wkv = jnp.concatenate([wk, wv], axis=1)
    # Head-split proj weight so the head merge fuses into the output projection.
    wph = wp.reshape(num_heads, Dh, C)

    in_dt = x.dtype
    if mxu_dtype is None:
        # f32 matmuls run multi-pass on the MXU; bf16 operands (f32 accumulation)
        # recover the full MXU rate.
        mxu_dtype = jnp.bfloat16 if in_dt == jnp.float32 else in_dt

    budget = _vmem_budget_bytes()
    TM = query_tile if query_tile is not None else _auto_query_tile(
        M, N, C, num_heads, in_dt, mxu_dtype, budget)
    assert M % TM == 0, "query tile must divide M"
    assert TM == M or TM % 8 == 0, "query tile must be M or a multiple of 8"
    if head_chunk is None:
        head_chunk = _auto_head_chunk(num_heads, TM, N)
    head_chunk = max(1, min(int(head_chunk), num_heads))

    m_tiles = M // TM
    # Hoist K/V across the query-tile axis unless B == 1 with several m tiles, where
    # keeping m 'parallel' (both TCs busy on v7x) beats the hoist.
    hoist_kv = (B > 1) or (m_tiles == 1)
    dim_sem = ("parallel", "arbitrary") if hoist_kv else ("parallel", "parallel")

    kernel = functools.partial(
        _cross_attn_block_kernel, num_heads=num_heads, scale=scale, eps=eps,
        mxu_dtype=mxu_dtype, head_chunk=head_chunk, hoist_kv=hoist_kv)

    out_shapes = (
        jax.ShapeDtypeStruct((B, M, C), x.dtype),
        jax.ShapeDtypeStruct((B, num_heads, M, N), x.dtype),
    )

    def build(single_buffer_consts):
        def const_spec(shape):
            nd = len(shape)
            idx = lambda b, m: (0,) * nd
            if single_buffer_consts:
                # Grid-invariant blocks: the second pipeline buffer is pure VMEM waste.
                return pl.BlockSpec(shape, idx, pipeline_mode=pl.Buffered(1))
            return pl.BlockSpec(shape, idx)

        grid_spec = pltpu.PrefetchScalarGridSpec(
            num_scalar_prefetch=0,
            grid=(B, m_tiles),
            in_specs=[
                pl.BlockSpec((1, N, C), lambda b, m: (b, 0, 0)),     # x (resident across m)
                pl.BlockSpec((1, TM, C), lambda b, m: (b, m, 0)),    # y query tile
                const_spec((1, C)),                                  # norm1 gamma
                const_spec((1, C)),                                  # norm1 beta
                const_spec((C, C)),                                  # Wq^T
                const_spec((C, 2 * C)),                              # [Wk^T | Wv^T]
                const_spec((num_heads, Dh, C)),                      # Wproj^T, head-split
                const_spec((1, C)),                                  # proj bias
            ],
            out_specs=[
                pl.BlockSpec((1, TM, C), lambda b, m: (b, m, 0)),
                pl.BlockSpec((1, num_heads, TM, N), lambda b, m: (b, 0, m, 0)),
            ],
            scratch_shapes=[
                pltpu.VMEM((num_heads, N, Dh), mxu_dtype),           # hoisted K (head-batched)
                pltpu.VMEM((num_heads, N, Dh), mxu_dtype),           # hoisted V (head-batched)
            ],
        )
        return pl.pallas_call(
            kernel,
            out_shape=out_shapes,
            grid_spec=grid_spec,
            input_output_aliases={1: 0},     # residual stream y aliased into y_out
            compiler_params=pltpu.CompilerParams(
                dimension_semantics=dim_sem,
                vmem_limit_bytes=budget,
            ),
        )

    args = (x, y, g1, b1, wq, wkv, wph, bp)
    try:
        return build(single_buffer_consts=True)(*args)
    except Exception:
        # pipeline_mode=pl.Buffered(1) is only a VMEM-headroom optimization; fall back to
        # default double-buffering if this JAX/Mosaic build rejects it.
        return build(single_buffer_consts=False)(*args)


# ----------------------------------- reference ---------------------------------------

def reference_jax(x, y, params, *, num_heads, eps=1e-5):
    """Pure-JAX reference mirroring the PyTorch forward (full-precision matmuls)."""
    g1, b1, wq, wk, wv, wp, bp = params
    B, N, C = x.shape
    _, M, _ = y.shape
    Dh = C // num_heads
    scale = Dh ** (-0.5)

    def ln(t):
        mu = jnp.mean(t, axis=-1, keepdims=True)
        var = jnp.mean((t - mu) ** 2, axis=-1, keepdims=True)
        return (t - mu) / jnp.sqrt(var + eps) * g1[0] + b1[0]

    with jax.default_matmul_precision("float32"):
        xn, yn = ln(x), ln(y)
        q = (yn @ wq).reshape(B, M, num_heads, Dh).transpose(0, 2, 1, 3)
        k = (xn @ wk).reshape(B, N, num_heads, Dh).transpose(0, 2, 1, 3)
        v = (xn @ wv).reshape(B, N, num_heads, Dh).transpose(0, 2, 1, 3)
        attn = jax.nn.softmax(jnp.einsum("bhmd,bhnd->bhmn", q, k) * scale, axis=-1)
        o = jnp.einsum("bhmn,bhnd->bhmd", attn, v).transpose(0, 2, 1, 3).reshape(B, M, C)
        o = o @ wp + bp[0]
    return y + o, attn


if __name__ == "__main__":
    B, N, M, C, H = 2, 16, 16, 32, 2

    key = jax.random.PRNGKey(0)
    ks = jax.random.split(key, 8)

    x = jax.random.normal(ks[0], (B, N, C), dtype=jnp.float32)
    y = jax.random.normal(ks[1], (B, M, C), dtype=jnp.float32)

    # Deterministic synthetic parameters (no checkpoint loading).
    g1 = jnp.ones((1, C), jnp.float32) + 0.1 * jax.random.normal(ks[2], (1, C))
    b1 = 0.1 * jax.random.normal(ks[3], (1, C))
    # Weights stored pre-transposed: activation @ W == PyTorch Linear(x) = x @ W_torch.T
    wq = 0.05 * jax.random.normal(ks[4], (C, C), dtype=jnp.float32)
    wk = 0.05 * jax.random.normal(ks[5], (C, C), dtype=jnp.float32)
    wv = 0.05 * jax.random.normal(ks[6], (C, C), dtype=jnp.float32)
    wp = 0.05 * jax.random.normal(ks[7], (C, C), dtype=jnp.float32)
    bp = 0.01 * jnp.ones((1, C), jnp.float32)
    params = (g1, b1, wq, wk, wv, wp, bp)

    y_ref, a_ref = reference_jax(x, y, params, num_heads=H)

    # Exact-mode run (f32 MXU operands) on a multi-tile query grid: exercises the
    # hoisted K/V scratch path (pl.program_id(1) > 0 reuses scratch).
    y0, a0 = cross_attention_block(x, y, params, num_heads=H,
                                   query_tile=8, mxu_dtype=jnp.float32)
    jax.block_until_ready((y0, a0))
    assert jnp.allclose(y0, y_ref, rtol=5e-3, atol=5e-3), "y_out mismatch (f32 mode)"
    assert jnp.allclose(a0, a_ref, rtol=5e-3, atol=5e-3), "attn mismatch (f32 mode)"

    # Default performance config: bf16 MXU operands with f32 accumulation, auto tile.
    y1, a1 = cross_attention_block(x, y, params, num_heads=H)
    jax.block_until_ready((y1, a1))
    assert jnp.allclose(y1, y_ref, rtol=1e-2, atol=1e-2), "y_out mismatch (bf16 mode)"
    assert jnp.allclose(a1, a_ref, rtol=1e-2, atol=1e-2), "attn mismatch (bf16 mode)"

    print("KERNEL_OK")
</pallas_src>

<mosaic_0001>
module attributes {stable_mosaic.version = 11 : i64} {
  func.func @_cross_attn_block_kernel(%arg0: i32, %arg1: i32, %arg2: memref<1x16x32xf32, #tpu.memory_space<vmem>>, %arg3: memref<1x8x32xf32, #tpu.memory_space<vmem>>, %arg4: memref<1x32xf32, #tpu.memory_space<vmem>>, %arg5: memref<1x32xf32, #tpu.memory_space<vmem>>, %arg6: memref<32x32xf32, #tpu.memory_space<vmem>>, %arg7: memref<32x64xf32, #tpu.memory_space<vmem>>, %arg8: memref<2x16x32xf32, #tpu.memory_space<vmem>>, %arg9: memref<1x32xf32, #tpu.memory_space<vmem>>, %arg10: memref<1x8x32xf32, #tpu.memory_space<vmem>>, %arg11: memref<1x2x8x16xf32, #tpu.memory_space<vmem>>, %arg12: memref<2x16x16xf32, #tpu.memory_space<vmem>>, %arg13: memref<2x16x16xf32, #tpu.memory_space<vmem>>) attributes {dimension_semantics = [#tpu.dimension_semantics<parallel>, #tpu.dimension_semantics<arbitrary>], iteration_bounds = array<i64: 2, 2>, scalar_prefetch = 0 : i64, scratch_operands = 2 : i64, tpu.core_type = #tpu.core_type<tc>, window_params = [{transform_indices = @transform_0, window_bounds = array<i64: 1, 16, 32>}, {transform_indices = @transform_1, window_bounds = array<i64: 1, 8, 32>}, {pipeline_mode = #tpu.pipeline_mode<synchronous>, transform_indices = @transform_2, window_bounds = array<i64: 1, 32>}, {pipeline_mode = #tpu.pipeline_mode<synchronous>, transform_indices = @transform_3, window_bounds = array<i64: 1, 32>}, {pipeline_mode = #tpu.pipeline_mode<synchronous>, transform_indices = @transform_4, window_bounds = array<i64: 32, 32>}, {pipeline_mode = #tpu.pipeline_mode<synchronous>, transform_indices = @transform_5, window_bounds = array<i64: 32, 64>}, {pipeline_mode = #tpu.pipeline_mode<synchronous>, transform_indices = @transform_6, window_bounds = array<i64: 2, 16, 32>}, {pipeline_mode = #tpu.pipeline_mode<synchronous>, transform_indices = @transform_7, window_bounds = array<i64: 1, 32>}, {transform_indices = @transform_8, window_bounds = array<i64: 1, 8, 32>}, {transform_indices = @transform_9, window_bounds = array<i64: 1, 2, 8, 16>}]} {
    %c0 = arith.constant 0 : index
    %c0_0 = arith.constant 0 : index
    %0 = vector.load %arg4[%c0, %c0_0] : memref<1x32xf32, #tpu.memory_space<vmem>>, vector<1x32xf32>
    %c0_1 = arith.constant 0 : index
    %c0_2 = arith.constant 0 : index
    %1 = vector.load %arg5[%c0_1, %c0_2] : memref<1x32xf32, #tpu.memory_space<vmem>>, vector<1x32xf32>
    %c0_i32 = arith.constant 0 : i32
    %2 = arith.cmpi eq, %arg1, %c0_i32 : i32
    %3 = arith.extui %2 : i1 to i32
    %c0_i32_3 = arith.constant 0 : i32
    %4 = arith.cmpi ne, %3, %c0_i32_3 : i32
    scf.if %4 {
      %c0_40 = arith.constant 0 : index
      %c0_41 = arith.constant 0 : index
      %c0_42 = arith.constant 0 : index
      %62 = vector.load %arg2[%c0_40, %c0_41, %c0_42] : memref<1x16x32xf32, #tpu.memory_space<vmem>>, vector<1x16x32xf32>
      %63 = vector.shape_cast %62 : vector<1x16x32xf32> to vector<16x32xf32>
      %cst_43 = arith.constant dense<0.000000e+00> : vector<16xf32>
      %64 = vector.multi_reduction <add>, %63, %cst_43 [1] : vector<16x32xf32> to vector<16xf32>
      %65 = vector.shape_cast %64 : vector<16xf32> to vector<16x1xf32>
      %cst_44 = arith.constant 3.200000e+01 : f32
      %66 = vector.broadcast %cst_44 : f32 to vector<16x1xf32>
      %67 = arith.divf %65, %66 : vector<16x1xf32>
      %68 = vector.broadcast %67 : vector<16x1xf32> to vector<16x32xf32>
      %69 = arith.subf %63, %68 : vector<16x32xf32>
      %70 = arith.mulf %69, %69 : vector<16x32xf32>
      %cst_45 = arith.constant dense<0.000000e+00> : vector<16xf32>
      %71 = vector.multi_reduction <add>, %70, %cst_45 [1] : vector<16x32xf32> to vector<16xf32>
      %72 = vector.shape_cast %71 : vector<16xf32> to vector<16x1xf32>
      %cst_46 = arith.constant 3.200000e+01 : f32
      %73 = vector.broadcast %cst_46 : f32 to vector<16x1xf32>
      %74 = arith.divf %72, %73 : vector<16x1xf32>
      %cst_47 = arith.constant 9.99999974E-6 : f32
      %75 = vector.broadcast %cst_47 : f32 to vector<16x1xf32>
      %76 = arith.addf %74, %75 : vector<16x1xf32>
      %77 = math.rsqrt %76 : vector<16x1xf32>
      %78 = vector.broadcast %77 : vector<16x1xf32> to vector<16x32xf32>
      %79 = arith.mulf %69, %78 : vector<16x32xf32>
      %80 = vector.broadcast %0 : vector<1x32xf32> to vector<16x32xf32>
      %81 = arith.mulf %79, %80 : vector<16x32xf32>
      %82 = vector.broadcast %1 : vector<1x32xf32> to vector<16x32xf32>
      %83 = arith.addf %81, %82 : vector<16x32xf32>
      %c0_48 = arith.constant 0 : index
      %c0_49 = arith.constant 0 : index
      %84 = vector.load %arg7[%c0_48, %c0_49] : memref<32x64xf32, #tpu.memory_space<vmem>>, vector<32x64xf32>
      %cst_50 = arith.constant dense<0.000000e+00> : vector<16x64xf32>
      %85 = tpu.matmul %83, %84, %cst_50 {dimension_numbers = #tpu.dot_dimension_numbers<[1], [0], [0], [1], [0, 0, 1, 1], [], []>} : vector<16x32xf32>, vector<32x64xf32>, vector<16x64xf32> -> vector<16x64xf32>
      %86 = vector.extract_strided_slice %85 {offsets = [0, 0], sizes = [16, 32], strides = [1, 1]} : vector<16x64xf32> to vector<16x32xf32>
      %87 = vector.extract_strided_slice %85 {offsets = [0, 32], sizes = [16, 32], strides = [1, 1]} : vector<16x64xf32> to vector<16x32xf32>
      %88 = vector.shape_cast %86 : vector<16x32xf32> to vector<16x2x16xf32>
      %89 = tpu.transpose %88, [1, 0, 2] : vector<16x2x16xf32> -> vector<2x16x16xf32>
      %c0_51 = arith.constant 0 : index
      %c0_52 = arith.constant 0 : index
      %c0_53 = arith.constant 0 : index
      %90 = vector.load %arg12[%c0_51, %c0_52, %c0_53] : memref<2x16x16xf32, #tpu.memory_space<vmem>>, vector<2x16x16xf32>
      tpu.vector_store %arg12[%c0_51, %c0_52, %c0_53], %89 {strides = array<i32>} : memref<2x16x16xf32, #tpu.memory_space<vmem>>, vector<2x16x16xf32>,
      %91 = vector.shape_cast %87 : vector<16x32xf32> to vector<16x2x16xf32>
      %92 = tpu.transpose %91, [1, 0, 2] : vector<16x2x16xf32> -> vector<2x16x16xf32>
      %c0_54 = arith.constant 0 : index
      %c0_55 = arith.constant 0 : index
      %c0_56 = arith.constant 0 : index
      %93 = vector.load %arg13[%c0_54, %c0_55, %c0_56] : memref<2x16x16xf32, #tpu.memory_space<vmem>>, vector<2x16x16xf32>
      tpu.vector_store %arg13[%c0_54, %c0_55, %c0_56], %92 {strides = array<i32>} : memref<2x16x16xf32, #tpu.memory_space<vmem>>, vector<2x16x16xf32>,
    } else {
    }
    %c0_4 = arith.constant 0 : index
    %c0_5 = arith.constant 0 : index
    %c0_6 = arith.constant 0 : index
    %5 = vector.load %arg3[%c0_4, %c0_5, %c0_6] : memref<1x8x32xf32, #tpu.memory_space<vmem>>, vector<1x8x32xf32>
    %6 = vector.shape_cast %5 : vector<1x8x32xf32> to vector<8x32xf32>
    %cst = arith.constant dense<0.000000e+00> : vector<8xf32>
    %7 = vector.multi_reduction <add>, %6, %cst [1] : vector<8x32xf32> to vector<8xf32>
    %8 = vector.shape_cast %7 : vector<8xf32> to vector<8x1xf32>
    %cst_7 = arith.constant 3.200000e+01 : f32
    %9 = vector.broadcast %cst_7 : f32 to vector<8x1xf32>
    %10 = arith.divf %8, %9 : vector<8x1xf32>
    %11 = vector.broadcast %10 : vector<8x1xf32> to vector<8x32xf32>
    %12 = arith.subf %6, %11 : vector<8x32xf32>
    %13 = arith.mulf %12, %12 : vector<8x32xf32>
    %cst_8 = arith.constant dense<0.000000e+00> : vector<8xf32>
    %14 = vector.multi_reduction <add>, %13, %cst_8 [1] : vector<8x32xf32> to vector<8xf32>
    %15 = vector.shape_cast %14 : vector<8xf32> to vector<8x1xf32>
    %cst_9 = arith.constant 3.200000e+01 : f32
    %16 = vector.broadcast %cst_9 : f32 to vector<8x1xf32>
    %17 = arith.divf %15, %16 : vector<8x1xf32>
    %cst_10 = arith.constant 9.99999974E-6 : f32
    %18 = vector.broadcast %cst_10 : f32 to vector<8x1xf32>
    %19 = arith.addf %17, %18 : vector<8x1xf32>
    %20 = math.rsqrt %19 : vector<8x1xf32>
    %21 = vector.broadcast %20 : vector<8x1xf32> to vector<8x32xf32>
    %22 = arith.mulf %12, %21 : vector<8x32xf32>
    %23 = vector.broadcast %0 : vector<1x32xf32> to vector<8x32xf32>
    %24 = arith.mulf %22, %23 : vector<8x32xf32>
    %25 = vector.broadcast %1 : vector<1x32xf32> to vector<8x32xf32>
    %26 = arith.addf %24, %25 : vector<8x32xf32>
    %c0_11 = arith.constant 0 : index
    %c0_12 = arith.constant 0 : index
    %27 = vector.load %arg6[%c0_11, %c0_12] : memref<32x32xf32, #tpu.memory_space<vmem>>, vector<32x32xf32>
    %cst_13 = arith.constant dense<0.000000e+00> : vector<8x32xf32>
    %28 = tpu.matmul %26, %27, %cst_13 {dimension_numbers = #tpu.dot_dimension_numbers<[1], [0], [0], [1], [0, 0, 1, 1], [], []>} : vector<8x32xf32>, vector<32x32xf32>, vector<8x32xf32> -> vector<8x32xf32>
    %cst_14 = arith.constant 2.500000e-01 : f32
    %29 = vector.broadcast %cst_14 : f32 to vector<8x32xf32>
    %30 = arith.mulf %28, %29 : vector<8x32xf32>
    %31 = vector.shape_cast %30 : vector<8x32xf32> to vector<8x2x16xf32>
    %32 = tpu.transpose %31, [1, 0, 2] : vector<8x2x16xf32> -> vector<2x8x16xf32>
    %cst_15 = arith.constant 0.000000e+00 : f32
    %33 = vector.broadcast %cst_15 : f32 to vector<8x32xf32>
    %c0_16 = arith.constant 0 : index
    %c0_17 = arith.constant 0 : index
    %c0_18 = arith.constant 0 : index
    %34 = vector.load %arg12[%c0_16, %c0_17, %c0_18] : memref<2x16x16xf32, #tpu.memory_space<vmem>>, vector<2x16x16xf32>
    %c0_19 = arith.constant 0 : index
    %c0_20 = arith.constant 0 : index
    %c0_21 = arith.constant 0 : index
    %35 = vector.load %arg13[%c0_19, %c0_20, %c0_21] : memref<2x16x16xf32, #tpu.memory_space<vmem>>, vector<2x16x16xf32>
    "tpu.trace_start"() <{level = 10 : i32, message = "hmd,hnd->hmn"}> : () -> ()
    %cst_22 = arith.constant dense<0.000000e+00> : vector<2x8x16xf32>
    %36 = tpu.matmul %32, %34, %cst_22 {dimension_numbers = #tpu.dot_dimension_numbers<[2], [2], [1], [1], [0, 0, 0, 1, 1, 1], [0], [0]>} : vector<2x8x16xf32>, vector<2x16x16xf32>, vector<2x8x16xf32> -> vector<2x8x16xf32>
    "tpu.trace_stop"() : () -> ()
    %cst_23 = arith.constant dense<0xFF800000> : vector<2x8xf32>
    %37 = vector.multi_reduction <maximumf>, %36, %cst_23 [2] : vector<2x8x16xf32> to vector<2x8xf32>
    %38 = vector.shape_cast %37 : vector<2x8xf32> to vector<2x8x1xf32>
    %39 = vector.broadcast %38 : vector<2x8x1xf32> to vector<2x8x16xf32>
    %40 = arith.subf %36, %39 : vector<2x8x16xf32>
    %41 = math.exp %40 : vector<2x8x16xf32>
    %cst_24 = arith.constant dense<0.000000e+00> : vector<2x8xf32>
    %42 = vector.multi_reduction <add>, %41, %cst_24 [2] : vector<2x8x16xf32> to vector<2x8xf32>
    %43 = vector.shape_cast %42 : vector<2x8xf32> to vector<2x8x1xf32>
    %44 = tpu.reciprocal %43 : vector<2x8x1xf32> -> vector<2x8x1xf32>
    %45 = vector.broadcast %44 : vector<2x8x1xf32> to vector<2x8x16xf32>
    %46 = arith.mulf %41, %45 : vector<2x8x16xf32>
    %c0_25 = arith.constant 0 : index
    %c0_26 = arith.constant 0 : index
    %c0_27 = arith.constant 0 : index
    %c0_28 = arith.constant 0 : index
    %47 = vector.load %arg11[%c0_25, %c0_26, %c0_27, %c0_28] : memref<1x2x8x16xf32, #tpu.memory_space<vmem>>, vector<1x2x8x16xf32>
    %48 = vector.shape_cast %47 : vector<1x2x8x16xf32> to vector<2x8x16xf32>
    %49 = vector.shape_cast %46 : vector<2x8x16xf32> to vector<1x2x8x16xf32>
    tpu.vector_store %arg11[%c0_25, %c0_26, %c0_27, %c0_28], %49 {strides = array<i32>} : memref<1x2x8x16xf32, #tpu.memory_space<vmem>>, vector<1x2x8x16xf32>,
    "tpu.trace_start"() <{level = 10 : i32, message = "hmn,hnd->hmd"}> : () -> ()
    %cst_29 = arith.constant dense<0.000000e+00> : vector<2x8x16xf32>
    %50 = tpu.matmul %46, %35, %cst_29 {dimension_numbers = #tpu.dot_dimension_numbers<[2], [1], [1], [2], [0, 0, 0, 1, 1, 2], [0], [0]>} : vector<2x8x16xf32>, vector<2x16x16xf32>, vector<2x8x16xf32> -> vector<2x8x16xf32>
    "tpu.trace_stop"() : () -> ()
    %c0_30 = arith.constant 0 : index
    %c0_31 = arith.constant 0 : index
    %c0_32 = arith.constant 0 : index
    %51 = vector.load %arg8[%c0_30, %c0_31, %c0_32] : memref<2x16x32xf32, #tpu.memory_space<vmem>>, vector<2x16x32xf32>
    "tpu.trace_start"() <{level = 10 : i32, message = "hmd,hdc->hmc"}> : () -> ()
    %cst_33 = arith.constant dense<0.000000e+00> : vector<2x8x32xf32>
    %52 = tpu.matmul %50, %51, %cst_33 {dimension_numbers = #tpu.dot_dimension_numbers<[2], [1], [1], [2], [0, 0, 0, 1, 1, 2], [0], [0]>} : vector<2x8x16xf32>, vector<2x16x32xf32>, vector<2x8x32xf32> -> vector<2x8x32xf32>
    "tpu.trace_stop"() : () -> ()
    %cst_34 = arith.constant dense<0.000000e+00> : vector<8x32xf32>
    %53 = vector.multi_reduction <add>, %52, %cst_34 [0] : vector<2x8x32xf32> to vector<8x32xf32>
    %54 = arith.addf %33, %53 : vector<8x32xf32>
    %c0_35 = arith.constant 0 : index
    %c0_36 = arith.constant 0 : index
    %55 = vector.load %arg9[%c0_35, %c0_36] : memref<1x32xf32, #tpu.memory_space<vmem>>, vector<1x32xf32>
    %56 = vector.broadcast %55 : vector<1x32xf32> to vector<8x32xf32>
    %57 = arith.addf %54, %56 : vector<8x32xf32>
    %58 = arith.addf %6, %57 : vector<8x32xf32>
    %c0_37 = arith.constant 0 : index
    %c0_38 = arith.constant 0 : index
    %c0_39 = arith.constant 0 : index
    %59 = vector.load %arg10[%c0_37, %c0_38, %c0_39] : memref<1x8x32xf32, #tpu.memory_space<vmem>>, vector<1x8x32xf32>
    %60 = vector.shape_cast %59 : vector<1x8x32xf32> to vector<8x32xf32>
    %61 = vector.shape_cast %58 : vector<8x32xf32> to vector<1x8x32xf32>
    tpu.vector_store %arg10[%c0_37, %c0_38, %c0_39], %61 {strides = array<i32>} : memref<1x8x32xf32, #tpu.memory_space<vmem>>, vector<1x8x32xf32>,
    return
  }
  func.func @transform_0(%arg0: i32, %arg1: i32) -> (i32, i32, i32) {
    %c0_i32 = arith.constant 0 : i32
    %c0_i32_0 = arith.constant 0 : i32
    %c0_i32_1 = arith.constant 0 : i32
    return %arg0, %c0_i32, %c0_i32_0 : i32, i32, i32
  }
  func.func @transform_1(%arg0: i32, %arg1: i32) -> (i32, i32, i32) {
    %c0_i32 = arith.constant 0 : i32
    %c0_i32_0 = arith.constant 0 : i32
    return %arg0, %arg1, %c0_i32 : i32, i32, i32
  }
  func.func @transform_2(%arg0: i32, %arg1: i32) -> (i32, i32) {
    %c0_i32 = arith.constant 0 : i32
    %c0_i32_0 = arith.constant 0 : i32
    %c0_i32_1 = arith.constant 0 : i32
    return %c0_i32, %c0_i32_0 : i32, i32
  }
  func.func @transform_3(%arg0: i32, %arg1: i32) -> (i32, i32) {
    %c0_i32 = arith.constant 0 : i32
    %c0_i32_0 = arith.constant 0 : i32
    %c0_i32_1 = arith.constant 0 : i32
    return %c0_i32, %c0_i32_0 : i32, i32
  }
  func.func @transform_4(%arg0: i32, %arg1: i32) -> (i32, i32) {
    %c0_i32 = arith.constant 0 : i32
    %c0_i32_0 = arith.constant 0 : i32
    %c0_i32_1 = arith.constant 0 : i32
    return %c0_i32, %c0_i32_0 : i32, i32
  }
  func.func @transform_5(%arg0: i32, %arg1: i32) -> (i32, i32) {
    %c0_i32 = arith.constant 0 : i32
    %c0_i32_0 = arith.constant 0 : i32
    %c0_i32_1 = arith.constant 0 : i32
    return %c0_i32, %c0_i32_0 : i32, i32
  }
  func.func @transform_6(%arg0: i32, %arg1: i32) -> (i32, i32, i32) {
    %c0_i32 = arith.constant 0 : i32
    %c0_i32_0 = arith.constant 0 : i32
    %c0_i32_1 = arith.constant 0 : i32
    %c0_i32_2 = arith.constant 0 : i32
    return %c0_i32, %c0_i32_0, %c0_i32_1 : i32, i32, i32
  }
  func.func @transform_7(%arg0: i32, %arg1: i32) -> (i32, i32) {
    %c0_i32 = arith.constant 0 : i32
    %c0_i32_0 = arith.constant 0 : i32
    %c0_i32_1 = arith.constant 0 : i32
    return %c0_i32, %c0_i32_0 : i32, i32
  }
  func.func @transform_8(%arg0: i32, %arg1: i32) -> (i32, i32, i32) {
    %c0_i32 = arith.constant 0 : i32
    %c0_i32_0 = arith.constant 0 : i32
    return %arg0, %arg1, %c0_i32 : i32, i32, i32
  }
  func.func @transform_9(%arg0: i32, %arg1: i32) -> (i32, i32, i32, i32) {
    %c0_i32 = arith.constant 0 : i32
    %c0_i32_0 = arith.constant 0 : i32
    %c0_i32_1 = arith.constant 0 : i32
    return %arg0, %c0_i32, %arg1, %c0_i32_0 : i32, i32, i32, i32
  }
}

module attributes {stable_mosaic.version = 11 : i64} {
  func.func @_cross_attn_block_kernel(%arg0: i32, %arg1: i32, %arg2: memref<1x16x32xf32, #tpu.memory_space<vmem>>, %arg3: memref<1x8x32xf32, #tpu.memory_space<vmem>>, %arg4: memref<1x32xf32, #tpu.memory_space<vmem>>, %arg5: memref<1x32xf32, #tpu.memory_space<vmem>>, %arg6: memref<32x32xf32, #tpu.memory_space<vmem>>, %arg7: memref<32x64xf32, #tpu.memory_space<vmem>>, %arg8: memref<2x16x32xf32, #tpu.memory_space<vmem>>, %arg9: memref<1x32xf32, #tpu.memory_space<vmem>>, %arg10: memref<1x8x32xf32, #tpu.memory_space<vmem>>, %arg11: memref<1x2x8x16xf32, #tpu.memory_space<vmem>>, %arg12: memref<2x16x16xf32, #tpu.memory_space<vmem>>, %arg13: memref<2x16x16xf32, #tpu.memory_space<vmem>>) attributes {dimension_semantics = [#tpu.dimension_semantics<parallel>, #tpu.dimension_semantics<arbitrary>], iteration_bounds = array<i64: 2, 2>, scalar_prefetch = 0 : i64, scratch_operands = 2 : i64, tpu.core_type = #tpu.core_type<tc>, window_params = [{transform_indices = @transform_0, window_bounds = array<i64: 1, 16, 32>}, {transform_indices = @transform_1, window_bounds = array<i64: 1, 8, 32>}, {pipeline_mode = #tpu.pipeline_mode<synchronous>, transform_indices = @transform_2, window_bounds = array<i64: 1, 32>}, {pipeline_mode = #tpu.pipeline_mode<synchronous>, transform_indices = @transform_3, window_bounds = array<i64: 1, 32>}, {pipeline_mode = #tpu.pipeline_mode<synchronous>, transform_indices = @transform_4, window_bounds = array<i64: 32, 32>}, {pipeline_mode = #tpu.pipeline_mode<synchronous>, transform_indices = @transform_5, window_bounds = array<i64: 32, 64>}, {pipeline_mode = #tpu.pipeline_mode<synchronous>, transform_indices = @transform_6, window_bounds = array<i64: 2, 16, 32>}, {pipeline_mode = #tpu.pipeline_mode<synchronous>, transform_indices = @transform_7, window_bounds = array<i64: 1, 32>}, {transform_indices = @transform_8, window_bounds = array<i64: 1, 8, 32>}, {transform_indices = @transform_9, window_bounds = array<i64: 1, 2, 8, 16>}]} {
    %c0 = arith.constant 0 : index
    %c0_0 = arith.constant 0 : index
    %0 = vector.load %arg4[%c0, %c0_0] : memref<1x32xf32, #tpu.memory_space<vmem>>, vector<1x32xf32>
    %c0_1 = arith.constant 0 : index
    %c0_2 = arith.constant 0 : index
    %1 = vector.load %arg5[%c0_1, %c0_2] : memref<1x32xf32, #tpu.memory_space<vmem>>, vector<1x32xf32>
    %c0_i32 = arith.constant 0 : i32
    %2 = arith.cmpi eq, %arg1, %c0_i32 : i32
    %3 = arith.extui %2 : i1 to i32
    %c0_i32_3 = arith.constant 0 : i32
    %4 = arith.cmpi ne, %3, %c0_i32_3 : i32
    scf.if %4 {
      %c0_40 = arith.constant 0 : index
      %c0_41 = arith.constant 0 : index
      %c0_42 = arith.constant 0 : index
      %62 = vector.load %arg2[%c0_40, %c0_41, %c0_42] : memref<1x16x32xf32, #tpu.memory_space<vmem>>, vector<1x16x32xf32>
      %63 = vector.shape_cast %62 : vector<1x16x32xf32> to vector<16x32xf32>
      %cst_43 = arith.constant dense<0.000000e+00> : vector<16xf32>
      %64 = vector.multi_reduction <add>, %63, %cst_43 [1] : vector<16x32xf32> to vector<16xf32>
      %65 = vector.shape_cast %64 : vector<16xf32> to vector<16x1xf32>
      %cst_44 = arith.constant 3.200000e+01 : f32
      %66 = vector.broadcast %cst_44 : f32 to vector<16x1xf32>
      %67 = arith.divf %65, %66 : vector<16x1xf32>
      %68 = vector.broadcast %67 : vector<16x1xf32> to vector<16x32xf32>
      %69 = arith.subf %63, %68 : vector<16x32xf32>
      %70 = arith.mulf %69, %69 : vector<16x32xf32>
      %cst_45 = arith.constant dense<0.000000e+00> : vector<16xf32>
      %71 = vector.multi_reduction <add>, %70, %cst_45 [1] : vector<16x32xf32> to vector<16xf32>
      %72 = vector.shape_cast %71 : vector<16xf32> to vector<16x1xf32>
      %cst_46 = arith.constant 3.200000e+01 : f32
      %73 = vector.broadcast %cst_46 : f32 to vector<16x1xf32>
      %74 = arith.divf %72, %73 : vector<16x1xf32>
      %cst_47 = arith.constant 9.99999974E-6 : f32
      %75 = vector.broadcast %cst_47 : f32 to vector<16x1xf32>
      %76 = arith.addf %74, %75 : vector<16x1xf32>
      %77 = math.rsqrt %76 : vector<16x1xf32>
      %78 = vector.broadcast %77 : vector<16x1xf32> to vector<16x32xf32>
      %79 = arith.mulf %69, %78 : vector<16x32xf32>
      %80 = vector.broadcast %0 : vector<1x32xf32> to vector<16x32xf32>
      %81 = arith.mulf %79, %80 : vector<16x32xf32>
      %82 = vector.broadcast %1 : vector<1x32xf32> to vector<16x32xf32>
      %83 = arith.addf %81, %82 : vector<16x32xf32>
      %c0_48 = arith.constant 0 : index
      %c0_49 = arith.constant 0 : index
      %84 = vector.load %arg7[%c0_48, %c0_49] : memref<32x64xf32, #tpu.memory_space<vmem>>, vector<32x64xf32>
      %cst_50 = arith.constant dense<0.000000e+00> : vector<16x64xf32>
      %85 = tpu.matmul %83, %84, %cst_50 {dimension_numbers = #tpu.dot_dimension_numbers<[1], [0], [0], [1], [0, 0, 1, 1], [], []>} : vector<16x32xf32>, vector<32x64xf32>, vector<16x64xf32> -> vector<16x64xf32>
      %86 = vector.extract_strided_slice %85 {offsets = [0, 0], sizes = [16, 32], strides = [1, 1]} : vector<16x64xf32> to vector<16x32xf32>
      %87 = vector.extract_strided_slice %85 {offsets = [0, 32], sizes = [16, 32], strides = [1, 1]} : vector<16x64xf32> to vector<16x32xf32>
      %88 = vector.shape_cast %86 : vector<16x32xf32> to vector<16x2x16xf32>
      %89 = tpu.transpose %88, [1, 0, 2] : vector<16x2x16xf32> -> vector<2x16x16xf32>
      %c0_51 = arith.constant 0 : index
      %c0_52 = arith.constant 0 : index
      %c0_53 = arith.constant 0 : index
      %90 = vector.load %arg12[%c0_51, %c0_52, %c0_53] : memref<2x16x16xf32, #tpu.memory_space<vmem>>, vector<2x16x16xf32>
      tpu.vector_store %arg12[%c0_51, %c0_52, %c0_53], %89 {strides = array<i32>} : memref<2x16x16xf32, #tpu.memory_space<vmem>>, vector<2x16x16xf32>,
      %91 = vector.shape_cast %87 : vector<16x32xf32> to vector<16x2x16xf32>
      %92 = tpu.transpose %91, [1, 0, 2] : vector<16x2x16xf32> -> vector<2x16x16xf32>
      %c0_54 = arith.constant 0 : index
      %c0_55 = arith.constant 0 : index
      %c0_56 = arith.constant 0 : index
      %93 = vector.load %arg13[%c0_54, %c0_55, %c0_56] : memref<2x16x16xf32, #tpu.memory_space<vmem>>, vector<2x16x16xf32>
      tpu.vector_store %arg13[%c0_54, %c0_55, %c0_56], %92 {strides = array<i32>} : memref<2x16x16xf32, #tpu.memory_space<vmem>>, vector<2x16x16xf32>,
    } else {
    }
    %c0_4 = arith.constant 0 : index
    %c0_5 = arith.constant 0 : index
    %c0_6 = arith.constant 0 : index
    %5 = vector.load %arg3[%c0_4, %c0_5, %c0_6] : memref<1x8x32xf32, #tpu.memory_space<vmem>>, vector<1x8x32xf32>
    %6 = vector.shape_cast %5 : vector<1x8x32xf32> to vector<8x32xf32>
    %cst = arith.constant dense<0.000000e+00> : vector<8xf32>
    %7 = vector.multi_reduction <add>, %6, %cst [1] : vector<8x32xf32> to vector<8xf32>
    %8 = vector.shape_cast %7 : vector<8xf32> to vector<8x1xf32>
    %cst_7 = arith.constant 3.200000e+01 : f32
    %9 = vector.broadcast %cst_7 : f32 to vector<8x1xf32>
    %10 = arith.divf %8, %9 : vector<8x1xf32>
    %11 = vector.broadcast %10 : vector<8x1xf32> to vector<8x32xf32>
    %12 = arith.subf %6, %11 : vector<8x32xf32>
    %13 = arith.mulf %12, %12 : vector<8x32xf32>
    %cst_8 = arith.constant dense<0.000000e+00> : vector<8xf32>
    %14 = vector.multi_reduction <add>, %13, %cst_8 [1] : vector<8x32xf32> to vector<8xf32>
    %15 = vector.shape_cast %14 : vector<8xf32> to vector<8x1xf32>
    %cst_9 = arith.constant 3.200000e+01 : f32
    %16 = vector.broadcast %cst_9 : f32 to vector<8x1xf32>
    %17 = arith.divf %15, %16 : vector<8x1xf32>
    %cst_10 = arith.constant 9.99999974E-6 : f32
    %18 = vector.broadcast %cst_10 : f32 to vector<8x1xf32>
    %19 = arith.addf %17, %18 : vector<8x1xf32>
    %20 = math.rsqrt %19 : vector<8x1xf32>
    %21 = vector.broadcast %20 : vector<8x1xf32> to vector<8x32xf32>
    %22 = arith.mulf %12, %21 : vector<8x32xf32>
    %23 = vector.broadcast %0 : vector<1x32xf32> to vector<8x32xf32>
    %24 = arith.mulf %22, %23 : vector<8x32xf32>
    %25 = vector.broadcast %1 : vector<1x32xf32> to vector<8x32xf32>
    %26 = arith.addf %24, %25 : vector<8x32xf32>
    %c0_11 = arith.constant 0 : index
    %c0_12 = arith.constant 0 : index
    %27 = vector.load %arg6[%c0_11, %c0_12] : memref<32x32xf32, #tpu.memory_space<vmem>>, vector<32x32xf32>
    %cst_13 = arith.constant dense<0.000000e+00> : vector<8x32xf32>
    %28 = tpu.matmul %26, %27, %cst_13 {dimension_numbers = #tpu.dot_dimension_numbers<[1], [0], [0], [1], [0, 0, 1, 1], [], []>} : vector<8x32xf32>, vector<32x32xf32>, vector<8x32xf32> -> vector<8x32xf32>
    %cst_14 = arith.constant 2.500000e-01 : f32
    %29 = vector.broadcast %cst_14 : f32 to vector<8x32xf32>
    %30 = arith.mulf %28, %29 : vector<8x32xf32>
    %31 = vector.shape_cast %30 : vector<8x32xf32> to vector<8x2x16xf32>
    %32 = tpu.transpose %31, [1, 0, 2] : vector<8x2x16xf32> -> vector<2x8x16xf32>
    %cst_15 = arith.constant 0.000000e+00 : f32
    %33 = vector.broadcast %cst_15 : f32 to vector<8x32xf32>
    %c0_16 = arith.constant 0 : index
    %c0_17 = arith.constant 0 : index
    %c0_18 = arith.constant 0 : index
    %34 = vector.load %arg12[%c0_16, %c0_17, %c0_18] : memref<2x16x16xf32, #tpu.memory_space<vmem>>, vector<2x16x16xf32>
    %c0_19 = arith.constant 0 : index
    %c0_20 = arith.constant 0 : index
    %c0_21 = arith.constant 0 : index
    %35 = vector.load %arg13[%c0_19, %c0_20, %c0_21] : memref<2x16x16xf32, #tpu.memory_space<vmem>>, vector<2x16x16xf32>
    "tpu.trace_start"() <{level = 10 : i32, message = "hmd,hnd->hmn"}> : () -> ()
    %cst_22 = arith.constant dense<0.000000e+00> : vector<2x8x16xf32>
    %36 = tpu.matmul %32, %34, %cst_22 {dimension_numbers = #tpu.dot_dimension_numbers<[2], [2], [1], [1], [0, 0, 0, 1, 1, 1], [0], [0]>} : vector<2x8x16xf32>, vector<2x16x16xf32>, vector<2x8x16xf32> -> vector<2x8x16xf32>
    "tpu.trace_stop"() : () -> ()
    %cst_23 = arith.constant dense<0xFF800000> : vector<2x8xf32>
    %37 = vector.multi_reduction <maximumf>, %36, %cst_23 [2] : vector<2x8x16xf32> to vector<2x8xf32>
    %38 = vector.shape_cast %37 : vector<2x8xf32> to vector<2x8x1xf32>
    %39 = vector.broadcast %38 : vector<2x8x1xf32> to vector<2x8x16xf32>
    %40 = arith.subf %36, %39 : vector<2x8x16xf32>
    %41 = math.exp %40 : vector<2x8x16xf32>
    %cst_24 = arith.constant dense<0.000000e+00> : vector<2x8xf32>
    %42 = vector.multi_reduction <add>, %41, %cst_24 [2] : vector<2x8x16xf32> to vector<2x8xf32>
    %43 = vector.shape_cast %42 : vector<2x8xf32> to vector<2x8x1xf32>
    %44 = tpu.reciprocal %43 : vector<2x8x1xf32> -> vector<2x8x1xf32>
    %45 = vector.broadcast %44 : vector<2x8x1xf32> to vector<2x8x16xf32>
    %46 = arith.mulf %41, %45 : vector<2x8x16xf32>
    %c0_25 = arith.constant 0 : index
    %c0_26 = arith.constant 0 : index
    %c0_27 = arith.constant 0 : index
    %c0_28 = arith.constant 0 : index
    %47 = vector.load %arg11[%c0_25, %c0_26, %c0_27, %c0_28] : memref<1x2x8x16xf32, #tpu.memory_space<vmem>>, vector<1x2x8x16xf32>
    %48 = vector.shape_cast %47 : vector<1x2x8x16xf32> to vector<2x8x16xf32>
    %49 = vector.shape_cast %46 : vector<2x8x16xf32> to vector<1x2x8x16xf32>
    tpu.vector_store %arg11[%c0_25, %c0_26, %c0_27, %c0_28], %49 {strides = array<i32>} : memref<1x2x8x16xf32, #tpu.memory_space<vmem>>, vector<1x2x8x16xf32>,
    "tpu.trace_start"() <{level = 10 : i32, message = "hmn,hnd->hmd"}> : () -> ()
    %cst_29 = arith.constant dense<0.000000e+00> : vector<2x8x16xf32>
    %50 = tpu.matmul %46, %35, %cst_29 {dimension_numbers = #tpu.dot_dimension_numbers<[2], [1], [1], [2], [0, 0, 0, 1, 1, 2], [0], [0]>} : vector<2x8x16xf32>, vector<2x16x16xf32>, vector<2x8x16xf32> -> vector<2x8x16xf32>
    "tpu.trace_stop"() : () -> ()
    %c0_30 = arith.constant 0 : index
    %c0_31 = arith.constant 0 : index
    %c0_32 = arith.constant 0 : index
    %51 = vector.load %arg8[%c0_30, %c0_31, %c0_32] : memref<2x16x32xf32, #tpu.memory_space<vmem>>, vector<2x16x32xf32>
    "tpu.trace_start"() <{level = 10 : i32, message = "hmd,hdc->hmc"}> : () -> ()
    %cst_33 = arith.constant dense<0.000000e+00> : vector<2x8x32xf32>
    %52 = tpu.matmul %50, %51, %cst_33 {dimension_numbers = #tpu.dot_dimension_numbers<[2], [1], [1], [2], [0, 0, 0, 1, 1, 2], [0], [0]>} : vector<2x8x16xf32>, vector<2x16x32xf32>, vector<2x8x32xf32> -> vector<2x8x32xf32>
    "tpu.trace_stop"() : () -> ()
    %cst_34 = arith.constant dense<0.000000e+00> : vector<8x32xf32>
    %53 = vector.multi_reduction <add>, %52, %cst_34 [0] : vector<2x8x32xf32> to vector<8x32xf32>
    %54 = arith.addf %33, %53 : vector<8x32xf32>
    %c0_35 = arith.constant 0 : index
    %c0_36 = arith.constant 0 : index
    %55 = vector.load %arg9[%c0_35, %c0_36] : memref<1x32xf32, #tpu.memory_space<vmem>>, vector<1x32xf32>
    %56 = vector.broadcast %55 : vector<1x32xf32> to vector<8x32xf32>
    %57 = arith.addf %54, %56 : vector<8x32xf32>
    %58 = arith.addf %6, %57 : vector<8x32xf32>
    %c0_37 = arith.constant 0 : index
    %c0_38 = arith.constant 0 : index
    %c0_39 = arith.constant 0 : index
    %59 = vector.load %arg10[%c0_37, %c0_38, %c0_39] : memref<1x8x32xf32, #tpu.memory_space<vmem>>, vector<1x8x32xf32>
    %60 = vector.shape_cast %59 : vector<1x8x32xf32> to vector<8x32xf32>
    %61 = vector.shape_cast %58 : vector<8x32xf32> to vector<1x8x32xf32>
    tpu.vector_store %arg10[%c0_37, %c0_38, %c0_39], %61 {strides = array<i32>} : memref<1x8x32xf32, #tpu.memory_space<vmem>>, vector<1x8x32xf32>,
    return
  }
  func.func @transform_0(%arg0: i32, %arg1: i32) -> (i32, i32, i32) {
    %c0_i32 = arith.constant 0 : i32
    %c0_i32_0 = arith.constant 0 : i32
    %c0_i32_1 = arith.constant 0 : i32
    return %arg0, %c0_i32, %c0_i32_0 : i32, i32, i32
  }
  func.func @transform_1(%arg0: i32, %arg1: i32) -> (i32, i32, i32) {
    %c0_i32 = arith.constant 0 : i32
    %c0_i32_0 = arith.constant 0 : i32
    return %arg0, %arg1, %c0_i32 : i32, i32, i32
  }
  func.func @transform_2(%arg0: i32, %arg1: i32) -> (i32, i32) {
    %c0_i32 = arith.constant 0 : i32
    %c0_i32_0 = arith.constant 0 : i32
    %c0_i32_1 = arith.constant 0 : i32
    return %c0_i32, %c0_i32_0 : i32, i32
  }
  func.func @transform_3(%arg0: i32, %arg1: i32) -> (i32, i32) {
    %c0_i32 = arith.constant 0 : i32
    %c0_i32_0 = arith.constant 0 : i32
    %c0_i32_1 = arith.constant 0 : i32
    return %c0_i32, %c0_i32_0 : i32, i32
  }
  func.func @transform_4(%arg0: i32, %arg1: i32) -> (i32, i32) {
    %c0_i32 = arith.constant 0 : i32
    %c0_i32_0 = arith.constant 0 : i32
    %c0_i32_1 = arith.constant 0 : i32
    return %c0_i32, %c0_i32_0 : i32, i32
  }
  func.func @transform_5(%arg0: i32, %arg1: i32) -> (i32, i32) {
    %c0_i32 = arith.constant 0 : i32
    %c0_i32_0 = arith.constant 0 : i32
    %c0_i32_1 = arith.constant 0 : i32
    return %c0_i32, %c0_i32_0 : i32, i32
  }
  func.func @transform_6(%arg0: i32, %arg1: i32) -> (i32, i32, i32) {
    %c0_i32 = arith.constant 0 : i32
    %c0_i32_0 = arith.constant 0 : i32
    %c0_i32_1 = arith.constant 0 : i32
    %c0_i32_2 = arith.constant 0 : i32
    return %c0_i32, %c0_i32_0, %c0_i32_1 : i32, i32, i32
  }
  func.func @transform_7(%arg0: i32, %arg1: i32) -> (i32, i32) {
    %c0_i32 = arith.constant 0 : i32
    %c0_i32_0 = arith.constant 0 : i32
    %c0_i32_1 = arith.constant 0 : i32
    return %c0_i32, %c0_i32_0 : i32, i32
  }
  func.func @transform_8(%arg0: i32, %arg1: i32) -> (i32, i32, i32) {
    %c0_i32 = arith.constant 0 : i32
    %c0_i32_0 = arith.constant 0 : i32
    return %arg0, %arg1, %c0_i32 : i32, i32, i32
  }
  func.func @transform_9(%arg0: i32, %arg1: i32) -> (i32, i32, i32, i32) {
    %c0_i32 = arith.constant 0 : i32
    %c0_i32_0 = arith.constant 0 : i32
    %c0_i32_1 = arith.constant 0 : i32
    return %arg0, %c0_i32, %arg1, %c0_i32_0 : i32, i32, i32, i32
  }
}

</mosaic_0001>

<llo_original>
// kernel: tpu_custom_call.1
$region0: #{tpu_custom_call.1}
  #allocation0 [shape = 'u32[]', space=smem, size = 0x4, offset = 0x4, fixed_abs, tag = 'smem constant byte address 0x4 - core index']
  #allocation1 [shape = 'u32[144,128]{1,0:T(1,128)}', space=vmem, size = 0x12000, scoped, tag = 'internal scratch']
  #allocation2 [shape = 'f32[2,16,16]{2,1,0:T(8,128)}', space=vmem, size = 0x4000, scoped, tag = 'scratch operand']
  #allocation3 [shape = 'f32[2,16,16]{2,1,0:T(8,128)}', space=vmem, size = 0x4000, scoped, tag = 'scratch operand']
  %s0 = inlined_call_operand.vmem [shape: f32[2,16,32], index: 0, kind: input, shape index: {}]
  %s1 = inlined_call_operand.hbm [shape: f32[2,16,32], index: 1, kind: input, shape index: {}, may-alias: {1,8}]
  %s2 = inlined_call_operand.vmem [shape: f32[1,32], index: 2, kind: input, shape index: {}]
  %s3 = inlined_call_operand.vmem [shape: f32[1,32], index: 3, kind: input, shape index: {}]
  %s4 = inlined_call_operand.vmem [shape: f32[32,32], index: 4, kind: input, shape index: {}]
  %s5 = inlined_call_operand.hbm [shape: f32[32,64], index: 5, kind: input, shape index: {}]
  %s6 = inlined_call_operand.hbm [shape: f32[2,16,32], index: 6, kind: input, shape index: {}]
  %s7 = inlined_call_operand.hbm [shape: f32[1,32], index: 7, kind: input, shape index: {}]
  %s8 = inlined_call_operand.hbm [shape: f32[2,16,32], index: 8, kind: output, shape index: {0}, may-alias: {1,8}]
  %s9 = inlined_call_operand.hbm [shape: f32[2,2,16,16], index: 9, kind: output, shape index: {1}]
  %10 = xla_tuple %s8, %s9
  %s11 = sld [smem:[#allocation0]]
  $region93: #{tpu_custom_call.1} parent=0
    _
  %s13 = ssub.s32 1, %s11
  %s14 = scalar_select 0, %s13, %s11
  $region1: #{tpu_custom_call.1} parent=0
    #allocation4 [shape = 'u8[8192]{0}', space=vmem, size = 0x2000, scoped, tag = 'input window, operand 1']
    #allocation5 [shape = 's32[2]{0}', space=sflag, size = 0x8, scoped, tag = 'scoped memory for tpu_custom_call.1']
    #allocation6 [shape = 's32[2]{0}', space=sflag, size = 0x8, scoped, tag = 'scoped memory for tpu_custom_call.1']
    #allocation7 [shape = 'u8[16384]{0}', space=vmem, size = 0x4000, scoped, tag = 'input window, operand 5, single buffered']
    #allocation8 [shape = 's32[1]{0}', space=sflag, size = 0x4, scoped, tag = 'scoped memory for tpu_custom_call.1']
    #allocation9 [shape = 'u8[16384]{0}', space=vmem, size = 0x4000, scoped, tag = 'input window, operand 6, single buffered']
    #allocation10 [shape = 'u8[512]{0}', space=vmem, size = 0x400, scoped, tag = 'input window, operand 7, single buffered']
    #allocation11 [shape = 's32[1]{0}', space=sflag, size = 0x4, scoped, tag = 'scoped memory for tpu_custom_call.1']
    #allocation12 [shape = 'u8[8192]{0}', space=vmem, size = 0x2000, scoped, tag = 'output window, operand 0']
    #allocation13 [shape = 'u8[16384]{0}', space=vmem, size = 0x4000, scoped, tag = 'output window, operand 1']
    #allocation14 [shape = 's32[2]{0}', space=sflag, size = 0x8, scoped, tag = 'scoped memory for tpu_custom_call.1']
    %15 = vsyncpa [#allocation5], 0
    %s16 = scalar_lea.sflag [#allocation5], 1
    %17 = vsyncpa %s16, 0
    %18 = vsyncpa [#allocation8], 0
    %19 = vsyncpa [#allocation11], 0
    %20 = vsyncpa [#allocation6], 0
    %s21 = scalar_lea.sflag [#allocation6], 1
    %22 = vsyncpa %s21, 0
    %23 = vsyncpa [#allocation14], 0
    %s24 = scalar_lea.sflag [#allocation14], 1
    %25 = vsyncpa %s24, 0
    loop: start=0, step=1, limit=6
    $region2: #{tpu_custom_call.1} parent=1 // loop_pre_header
      _
    $region3: #{tpu_custom_call.1} parent=1 // loop_header
      %s27 = sphi 0, %s31
      %p28 = scmp.ge.s32.totalorder %s27, 6
      %s34 = sphi 0, %s46
      %s35 = sphi 0, %s42
      %s36 = sphi 0, %s34
      %s37 = sphi 0, %s35
      %s38 = sphi 0, %s36
      %s39 = sphi 0, %s37
      %s49 = sphi 0, %s51
      %s52 = sphi 0, %s49
      %s53 = sphi 0, %s52
      %s69 = sphi 0, %s53
      %s77 = sphi 0, %s79
      %s80 = sphi 0, %s77
      %s81 = sphi 0, %s80
      %s97 = sphi 0, %s81
      %s101 = sphi 0, %s101
      %s103 = sphi 0, %s101
      %s104 = sphi 0, %s103
      %s118 = sphi 0, %s104
      %s122 = sphi 0, %s122
      %s124 = sphi 0, %s122
      %s125 = sphi 0, %s124
      %s139 = sphi 0, %s125
      %s143 = sphi 0, %s143
      %s145 = sphi 0, %s143
      %s146 = sphi 0, %s145
      %s160 = sphi 0, %s146
      %s164 = sphi 0, %s164
      %s166 = sphi 0, %s164
      %s167 = sphi 0, %s166
      %s181 = sphi 0, %s167
      %s185 = sphi 0, %s185
      %s187 = sphi 0, %s185
      %s188 = sphi 0, %s187
      %s202 = sphi 0, %s188
      %s206 = sphi 0, %s206
      %s208 = sphi 0, %s206
      %s209 = sphi 0, %s208
      %s223 = sphi 0, %s209
      %s231 = sphi 0, %s233
      %s234 = sphi 0, %s231
      %s235 = sphi 0, %s234
      %s251 = sphi 0, %s235
      %s259 = sphi 0, %s261
      %s262 = sphi 0, %s259
      %s263 = sphi 0, %s262
      %s279 = sphi 0, %s263
    $region4: #{tpu_custom_call.1} parent=1 // loop_header_branch
      %30 = sbr.rel (%p28) target = $region8
    $region5: #{tpu_custom_call.1} parent=1 // loop_body
      %s32 = ssub.s32 %s27, 1
      %s33 = ssub.s32 %s27, 2
      %s40 = sadd.s32 1, %s35
      %p41 = scmp.ge.s32.totalorder %s40, 2
      %s42 = scalar_select %p41, 0, %s40
      %s43 = sadd.s32 1, %s34
      %s44 = scalar_select %p41, %s43, %s34
      %p45 = scmp.ge.s32.totalorder %s44, 2
      %s46 = scalar_select %p45, 0, %s44
      %s47 = ssub.s32 %s34, %s46
      %p48 = scmp.eq.s32.totalorder %s47, 0
      %s50 = sadd.s32 %s49, 1
      %s51 = scalar_select %p48, %s49, %s50
      %p54 = pneg %p48
      %p55 = scmp.eq.s32.totalorder %s27, 3
      %p56 = por %p54, %p55
      %p57 = scmp.ne.s32.totalorder %s49, %s52
      %p58 = scmp.eq.s32.totalorder %s27, 0
      %p59 = por %p57, %p58
      %p60 = scmp.ne.s32.totalorder %s49, %s52
      %p61 = scmp.eq.s32.totalorder %s32, 3
      %p62 = por %p60, %p61
      %p63 = scmp.ne.s32.totalorder %s52, %s53
      %p64 = scmp.eq.s32.totalorder %s32, 0
      %p65 = por %p63, %p64
      %p66 = scmp.ne.s32.totalorder %s52, %s53
      %p67 = scmp.eq.s32.totalorder %s33, 3
      %p68 = por %p66, %p67
      %p70 = scmp.ne.s32.totalorder %s53, %s69
      %p71 = scmp.eq.s32.totalorder %s33, 0
      %p72 = por %p70, %p71
      %s73 = ssub.s32 %s34, %s46
      %s74 = ssub.s32 %s35, %s42
      %s75 = sor.u32 %s73, %s74
      %p76 = scmp.eq.s32.totalorder %s75, 0
      %s78 = sadd.s32 %s77, 1
      %s79 = scalar_select %p76, %s77, %s78
      %p82 = pneg %p76
      %p83 = scmp.eq.s32.totalorder %s27, 3
      %p84 = por %p82, %p83
      %p85 = scmp.ne.s32.totalorder %s77, %s80
      %p86 = scmp.eq.s32.totalorder %s27, 0
      %p87 = por %p85, %p86
      %p88 = scmp.ne.s32.totalorder %s77, %s80
      %p89 = scmp.eq.s32.totalorder %s32, 3
      %p90 = por %p88, %p89
      %p91 = scmp.ne.s32.totalorder %s80, %s81
      %p92 = scmp.eq.s32.totalorder %s32, 0
      %p93 = por %p91, %p92
      %p94 = scmp.ne.s32.totalorder %s80, %s81
      %p95 = scmp.eq.s32.totalorder %s33, 3
      %p96 = por %p94, %p95
      %p98 = scmp.ne.s32.totalorder %s81, %s97
      %p99 = scmp.eq.s32.totalorder %s33, 0
      %p100 = por %p98, %p99
      %s102 = sadd.s32 %s101, 1
      %p105 = scmp.eq.s32.totalorder %s27, 3
      %p106 = scmp.ne.s32.totalorder %s101, %s103
      %p107 = scmp.eq.s32.totalorder %s27, 0
      %p108 = por %p106, %p107
      %p109 = scmp.ne.s32.totalorder %s101, %s103
      %p110 = scmp.eq.s32.totalorder %s32, 3
      %p111 = por %p109, %p110
      %p112 = scmp.ne.s32.totalorder %s103, %s104
      %p113 = scmp.eq.s32.totalorder %s32, 0
      %p114 = por %p112, %p113
      %p115 = scmp.ne.s32.totalorder %s103, %s104
      %p116 = scmp.eq.s32.totalorder %s33, 3
      %p117 = por %p115, %p116
      %p119 = scmp.ne.s32.totalorder %s104, %s118
      %p120 = scmp.eq.s32.totalorder %s33, 0
      %p121 = por %p119, %p120
      %s123 = sadd.s32 %s122, 1
      %p126 = scmp.eq.s32.totalorder %s27, 3
      %p127 = scmp.ne.s32.totalorder %s122, %s124
      %p128 = scmp.eq.s32.totalorder %s27, 0
      %p129 = por %p127, %p128
      %p130 = scmp.ne.s32.totalorder %s122, %s124
      %p131 = scmp.eq.s32.totalorder %s32, 3
      %p132 = por %p130, %p131
      %p133 = scmp.ne.s32.totalorder %s124, %s125
      %p134 = scmp.eq.s32.totalorder %s32, 0
      %p135 = por %p133, %p134
      %p136 = scmp.ne.s32.totalorder %s124, %s125
      %p137 = scmp.eq.s32.totalorder %s33, 3
      %p138 = por %p136, %p137
      %p140 = scmp.ne.s32.totalorder %s125, %s139
      %p141 = scmp.eq.s32.totalorder %s33, 0
      %p142 = por %p140, %p141
      %s144 = sadd.s32 %s143, 1
      %p147 = scmp.eq.s32.totalorder %s27, 3
      %p148 = scmp.ne.s32.totalorder %s143, %s145
      %p149 = scmp.eq.s32.totalorder %s27, 0
      %p150 = por %p148, %p149
      %p151 = scmp.ne.s32.totalorder %s143, %s145
      %p152 = scmp.eq.s32.totalorder %s32, 3
      %p153 = por %p151, %p152
      %p154 = scmp.ne.s32.totalorder %s145, %s146
      %p155 = scmp.eq.s32.totalorder %s32, 0
      %p156 = por %p154, %p155
      %p157 = scmp.ne.s32.totalorder %s145, %s146
      %p158 = scmp.eq.s32.totalorder %s33, 3
      %p159 = por %p157, %p158
      %p161 = scmp.ne.s32.totalorder %s146, %s160
      %p162 = scmp.eq.s32.totalorder %s33, 0
      %p163 = por %p161, %p162
      %s165 = sadd.s32 %s164, 1
      %p168 = scmp.eq.s32.totalorder %s27, 3
      %p169 = scmp.ne.s32.totalorder %s164, %s166
      %p170 = scmp.eq.s32.totalorder %s27, 0
      %p171 = por %p169, %p170
      %p172 = scmp.ne.s32.totalorder %s164, %s166
      %p173 = scmp.eq.s32.totalorder %s32, 3
      %p174 = por %p172, %p173
      %p175 = scmp.ne.s32.totalorder %s166, %s167
      %p176 = scmp.eq.s32.totalorder %s32, 0
      %p177 = por %p175, %p176
      %p178 = scmp.ne.s32.totalorder %s166, %s167
      %p179 = scmp.eq.s32.totalorder %s33, 3
      %p180 = por %p178, %p179
      %p182 = scmp.ne.s32.totalorder %s167, %s181
      %p183 = scmp.eq.s32.totalorder %s33, 0
      %p184 = por %p182, %p183
      %s186 = sadd.s32 %s185, 1
      %p189 = scmp.eq.s32.totalorder %s27, 3
      %p190 = scmp.ne.s32.totalorder %s185, %s187
      %p191 = scmp.eq.s32.totalorder %s27, 0
      %p192 = por %p190, %p191
      %p193 = scmp.ne.s32.totalorder %s185, %s187
      %p194 = scmp.eq.s32.totalorder %s32, 3
      %p195 = por %p193, %p194
      %p196 = scmp.ne.s32.totalorder %s187, %s188
      %p197 = scmp.eq.s32.totalorder %s32, 0
      %p198 = por %p196, %p197
      %p199 = scmp.ne.s32.totalorder %s187, %s188
      %p200 = scmp.eq.s32.totalorder %s33, 3
      %p201 = por %p199, %p200
      %p203 = scmp.ne.s32.totalorder %s188, %s202
      %p204 = scmp.eq.s32.totalorder %s33, 0
      %p205 = por %p203, %p204
      %s207 = sadd.s32 %s206, 1
      %p210 = scmp.eq.s32.totalorder %s27, 3
      %p211 = scmp.ne.s32.totalorder %s206, %s208
      %p212 = scmp.eq.s32.totalorder %s27, 0
      %p213 = por %p211, %p212
      %p214 = scmp.ne.s32.totalorder %s206, %s208
      %p215 = scmp.eq.s32.totalorder %s32, 3
      %p216 = por %p214, %p215
      %p217 = scmp.ne.s32.totalorder %s208, %s209
      %p218 = scmp.eq.s32.totalorder %s32, 0
      %p219 = por %p217, %p218
      %p220 = scmp.ne.s32.totalorder %s208, %s209
      %p221 = scmp.eq.s32.totalorder %s33, 3
      %p222 = por %p220, %p221
      %p224 = scmp.ne.s32.totalorder %s209, %s223
      %p225 = scmp.eq.s32.totalorder %s33, 0
      %p226 = por %p224, %p225
      %s227 = ssub.s32 %s34, %s46
      %s228 = ssub.s32 %s35, %s42
      %s229 = sor.u32 %s227, %s228
      %p230 = scmp.eq.s32.totalorder %s229, 0
      %s232 = sadd.s32 %s231, 1
      %s233 = scalar_select %p230, %s231, %s232
      %p236 = pneg %p230
      %p237 = scmp.eq.s32.totalorder %s27, 3
      %p238 = por %p236, %p237
      %p239 = scmp.ne.s32.totalorder %s231, %s234
      %p240 = scmp.eq.s32.totalorder %s27, 0
      %p241 = por %p239, %p240
      %p242 = scmp.ne.s32.totalorder %s231, %s234
      %p243 = scmp.eq.s32.totalorder %s32, 3
      %p244 = por %p242, %p243
      %p245 = scmp.ne.s32.totalorder %s234, %s235
      %p246 = scmp.eq.s32.totalorder %s32, 0
      %p247 = por %p245, %p246
      %p248 = scmp.ne.s32.totalorder %s234, %s235
      %p249 = scmp.eq.s32.totalorder %s33, 3
      %p250 = por %p248, %p249
      %p252 = scmp.ne.s32.totalorder %s235, %s251
      %p253 = scmp.eq.s32.totalorder %s33, 0
      %p254 = por %p252, %p253
      %s255 = ssub.s32 %s34, %s46
      %s256 = ssub.s32 %s35, %s42
      %s257 = sor.u32 %s255, %s256
      %p258 = scmp.eq.s32.totalorder %s257, 0
      %s260 = sadd.s32 %s259, 1
      %s261 = scalar_select %p258, %s259, %s260
      %p264 = pneg %p258
      %p265 = scmp.eq.s32.totalorder %s27, 3
      %p266 = por %p264, %p265
      %p267 = scmp.ne.s32.totalorder %s259, %s262
      %p268 = scmp.eq.s32.totalorder %s27, 0
      %p269 = por %p267, %p268
      %p270 = scmp.ne.s32.totalorder %s259, %s262
      %p271 = scmp.eq.s32.totalorder %s32, 3
      %p272 = por %p270, %p271
      %p273 = scmp.ne.s32.totalorder %s262, %s263
      %p274 = scmp.eq.s32.totalorder %s32, 0
      %p275 = por %p273, %p274
      %p276 = scmp.ne.s32.totalorder %s262, %s263
      %p277 = scmp.eq.s32.totalorder %s33, 3
      %p278 = por %p276, %p277
      %p280 = scmp.ne.s32.totalorder %s263, %s279
      %p281 = scmp.eq.s32.totalorder %s33, 0
      %p282 = por %p280, %p281
      %p283 = scmp.le.s32.totalorder 1, %s27
      %p284 = scmp.lt.s32.totalorder %s27, 5
      %p285 = pnand %p283, %p284
      %p286 = pneg %p285
      // Predicated region
      $region9: #{tpu_custom_call.1} parent=5 // pred_check
        _
      $region10: #{tpu_custom_call.1} parent=5 // pred_check_branch
        %288 = sbr.rel (%p285) target = $region12
      $region11: #{tpu_custom_call.1} parent=5 // pred_region
        %s289 = ssub.s32 %s27, 1
        // Predicated region
        $region13: #{tpu_custom_call.1} parent=11 // pred_check
          %p290 = pneg %p114
        $region14: #{tpu_custom_call.1} parent=11 // pred_check_branch
          %292 = sbr.rel (%p290) target = $region16
        $region15: #{tpu_custom_call.1} parent=11 // pred_region
          _
        $region16: #{tpu_custom_call.1} parent=11 // pred_fallthru
          _
        // Predicated region
        $region17: #{tpu_custom_call.1} parent=11 // pred_check
          %p293 = pneg %p135
        $region18: #{tpu_custom_call.1} parent=11 // pred_check_branch
          %295 = sbr.rel (%p293) target = $region20
        $region19: #{tpu_custom_call.1} parent=11 // pred_region
          _
        $region20: #{tpu_custom_call.1} parent=11 // pred_fallthru
          _
        // Predicated region
        $region21: #{tpu_custom_call.1} parent=11 // pred_check
          %p296 = pneg %p156
        $region22: #{tpu_custom_call.1} parent=11 // pred_check_branch
          %298 = sbr.rel (%p296) target = $region24
        $region23: #{tpu_custom_call.1} parent=11 // pred_region
          _
        $region24: #{tpu_custom_call.1} parent=11 // pred_fallthru
          _
        // Predicated region
        $region25: #{tpu_custom_call.1} parent=11 // pred_check
          %p299 = pneg %p177
        $region26: #{tpu_custom_call.1} parent=11 // pred_check_branch
          %301 = sbr.rel (%p299) target = $region28
        $region27: #{tpu_custom_call.1} parent=11 // pred_region
          %s303 = ssub.s32 512, 512
          %304 = vsyncadd [#allocation8], %s303
          %s305 = sshll.u32 [#allocation7], 4
          %s306 = int_to_ptr.vmem [resolvable:$true] %s305
          %311 = dma.hbm_to_vmem [thread:$0]  %s5, 512, %s306, [#allocation8], 128, 128, 8
        $region28: #{tpu_custom_call.1} parent=11 // pred_fallthru
          _
        // Predicated region
        $region29: #{tpu_custom_call.1} parent=11 // pred_check
          %p312 = pneg %p198
        $region30: #{tpu_custom_call.1} parent=11 // pred_check_branch
          %314 = sbr.rel (%p312) target = $region32
        $region31: #{tpu_custom_call.1} parent=11 // pred_region
          %s316 = ssub.s32 512, 512
          %317 = vsyncadd [#allocation8], %s316
          %s318 = sshll.u32 [#allocation9], 4
          %s319 = int_to_ptr.vmem [resolvable:$true] %s318
          %324 = dma.hbm_to_vmem [thread:$0]  %s6, 512, %s319, [#allocation8], 128, 128, 8
        $region32: #{tpu_custom_call.1} parent=11 // pred_fallthru
          _
        // Predicated region
        $region33: #{tpu_custom_call.1} parent=11 // pred_check
          %p325 = pneg %p219
        $region34: #{tpu_custom_call.1} parent=11 // pred_check_branch
          %327 = sbr.rel (%p325) target = $region36
        $region35: #{tpu_custom_call.1} parent=11 // pred_region
          %s329 = ssub.s32 16, 16
          %330 = vsyncadd [#allocation11], %s329
          %s332 = sshll.u32 [#allocation10], 4
          %s333 = int_to_ptr.vmem [resolvable:$true] %s332
          %335 = dma.hbm_to_vmem [thread:$0]  %s7, 16, %s333, [#allocation11]
        $region36: #{tpu_custom_call.1} parent=11 // pred_fallthru
          _
      $region12: #{tpu_custom_call.1} parent=5 // pred_fallthru
        _
      %p336 = scmp.lt.s32.totalorder %s27, 4
      // Predicated region
      $region37: #{tpu_custom_call.1} parent=5 // pred_check
        %p337 = pneg %p336
      $region38: #{tpu_custom_call.1} parent=5 // pred_check_branch
        %339 = sbr.rel (%p337) target = $region40
      $region39: #{tpu_custom_call.1} parent=5 // pred_region
        // Predicated region
        $region41: #{tpu_custom_call.1} parent=39 // pred_check
          %p340 = pneg %p59
        $region42: #{tpu_custom_call.1} parent=39 // pred_check_branch
          %342 = sbr.rel (%p340) target = $region44
        $region43: #{tpu_custom_call.1} parent=39 // pred_region
          %p343 = scmp.lt.s32.totalorder %s34, 1
          %s344 = scalar_select %p343, %s34, 1
          %s345 = smul.addr %s344, 2
          %s346 = smul.addr %s345, 8
          %s347 = scalar_lea.vmem %s0, %s346
        $region44: #{tpu_custom_call.1} parent=39 // pred_fallthru
          _
        // Predicated region
        $region45: #{tpu_custom_call.1} parent=39 // pred_check
          %p348 = pneg %p87
        $region46: #{tpu_custom_call.1} parent=39 // pred_check_branch
          %350 = sbr.rel (%p348) target = $region48
        $region47: #{tpu_custom_call.1} parent=39 // pred_region
          %s351 = sand.u32 %s77, 1
          %s352 = scalar_lea.sflag [#allocation5], %s351
          %s353 = sand.u32 %s77, 1
          %s354 = smul.addr %s353, 8
          %s355 = scalar_lea.vmem [#allocation4], %s354
          %s357 = ssub.s32 128, 128
          %358 = vsyncadd %s352, %s357
          %s359 = smul.addr %s34, 2
          %s360 = sadd.s32 %s35, %s359
          %s361 = smul.addr %s360, 128
          %s362 = scalar_lea.hbm %s1, %s361
          %s364 = sshll.u32 %s355, 4
          %s365 = int_to_ptr.vmem [resolvable:$true] %s364
          %367 = dma.hbm_to_vmem [thread:$0]  %s362, 128, %s365, %s352
        $region48: #{tpu_custom_call.1} parent=39 // pred_fallthru
          _
      $region40: #{tpu_custom_call.1} parent=5 // pred_fallthru
        _
      %p368 = scmp.le.s32.totalorder 1, %s27
      %p369 = scmp.lt.s32.totalorder %s27, 5
      %p370 = pnand %p368, %p369
      %p371 = pneg %p370
      // Predicated region
      $region49: #{tpu_custom_call.1} parent=5 // pred_check
        _
      $region50: #{tpu_custom_call.1} parent=5 // pred_check_branch
        %373 = sbr.rel (%p370) target = $region52
      $region51: #{tpu_custom_call.1} parent=5 // pred_region
        %s374 = ssub.s32 %s27, 1
        %s375 = sand.u32 %s80, 1
        %s376 = scalar_lea.sflag [#allocation5], %s375
        %s377 = sand.u32 %s80, 1
        %s378 = smul.addr %s377, 8
        %s379 = scalar_lea.vmem [#allocation4], %s378
        // Predicated region
        $region53: #{tpu_custom_call.1} parent=51 // pred_check
          %p380 = pneg %p93
        $region54: #{tpu_custom_call.1} parent=51 // pred_check_branch
          %382 = sbr.rel (%p380) target = $region56
        $region55: #{tpu_custom_call.1} parent=51 // pred_region
          %383 = dma.done %s376, 128
        $region56: #{tpu_custom_call.1} parent=51 // pred_fallthru
          _
        // Predicated region
        $region57: #{tpu_custom_call.1} parent=51 // pred_check
          %p384 = pneg %p177
        $region58: #{tpu_custom_call.1} parent=51 // pred_check_branch
          %386 = sbr.rel (%p384) target = $region60
        $region59: #{tpu_custom_call.1} parent=51 // pred_region
          %387 = dma.done [#allocation8], 512
        $region60: #{tpu_custom_call.1} parent=51 // pred_fallthru
          _
        // Predicated region
        $region61: #{tpu_custom_call.1} parent=51 // pred_check
          %p388 = pneg %p198
        $region62: #{tpu_custom_call.1} parent=51 // pred_check_branch
          %390 = sbr.rel (%p388) target = $region64
        $region63: #{tpu_custom_call.1} parent=51 // pred_region
          %391 = dma.done [#allocation8], 512
        $region64: #{tpu_custom_call.1} parent=51 // pred_fallthru
          _
        // Predicated region
        $region65: #{tpu_custom_call.1} parent=51 // pred_check
          %p392 = pneg %p219
        $region66: #{tpu_custom_call.1} parent=51 // pred_check_branch
          %394 = sbr.rel (%p392) target = $region68
        $region67: #{tpu_custom_call.1} parent=51 // pred_region
          %395 = dma.done [#allocation11], 16
        $region68: #{tpu_custom_call.1} parent=51 // pred_fallthru
          _
        %p396 = scmp.lt.s32.totalorder %s36, 1
        %s397 = scalar_select %p396, %s36, 1
        %s398 = smul.addr %s397, 2
        %s399 = smul.addr %s398, 8
        %s400 = scalar_lea.vmem %s0, %s399
        %p401 = pneg %p65
        %p402 = pneg %p62
        %s403 = sand.u32 %s80, 1
        %s404 = scalar_lea.sflag [#allocation5], %s403
        %s405 = sand.u32 %s80, 1
        %s406 = smul.addr %s405, 8
        %s407 = scalar_lea.vmem [#allocation4], %s406
        %p408 = pneg %p93
        %p409 = pneg %p90
        %p410 = pneg %p114
        %p411 = pneg %p111
        %p412 = pneg %p135
        %p413 = pneg %p132
        %p414 = pneg %p156
        %p415 = pneg %p153
        %p416 = pneg %p177
        %p417 = pneg %p174
        %p418 = pneg %p198
        %p419 = pneg %p195
        %p420 = pneg %p219
        %p421 = pneg %p216
        %p422 = pneg %p247
        %p423 = pneg %p244
        %s424 = sand.u32 %s234, 1
        %s425 = scalar_lea.sflag [#allocation6], %s424
        %s426 = sand.u32 %s234, 1
        %s427 = smul.addr %s426, 8
        %s428 = scalar_lea.vmem [#allocation12], %s427
        %p429 = pneg %p275
        %p430 = pneg %p272
        %s431 = sand.u32 %s262, 1
        %s432 = scalar_lea.sflag [#allocation14], %s431
        %s433 = sand.u32 %s262, 1
        %s434 = smul.addr %s433, 16
        %s435 = scalar_lea.vmem [#allocation13], %s434
        %p436 = scmp.lt.s32.totalorder %s36, 1
        %s437 = scalar_select %p436, %s36, 1
        %s438 = smul.addr %s437, 2
        %s439 = smul.addr %s438, 8
        %s440 = scalar_lea.vmem %s0, %s439
        %v441 = vld [vmem:[%s2] sm:$0x1]
        %v442 = vld [vmem:[%s3] sm:$0x1]
        %p443 = scmp.eq.s32.totalorder %s37, 0
        // Predicated region
        $region69: #{tpu_custom_call.1} parent=51 // pred_check
          %p444 = pneg %p443
        $region70: #{tpu_custom_call.1} parent=51 // pred_check_branch
          %446 = sbr.rel (%p444) target = $region72
        $region71: #{tpu_custom_call.1} parent=51 // pred_region
          %v447 = vld [vmem:[%s440] sm:$0xff]
          %v448 = vld [vmem:[%s440 + $0x8] sm:$0xff]
          %vm449 = vcmask 261120
          %v450 = vsel %vm449, %v447, 0.0
          %451 = vadd.xlane.f32.xlu0 %v450
          %v452 = vpop.xlane.xlu0 %451
          %v453 = vsel %vm449, %v448, 0.0
          %454 = vadd.xlane.f32.xlu0 %v453
          %v455 = vpop.xlane.xlu0 %454
          %v456 = vrcp.pop 32.0
          %v457 = vmul.f32 %v452, %v456
          %v458 = vmul.f32 %v455, %v456
          %v459 = vsub.f32 %v447, %v457
          %v460 = vsub.f32 %v448, %v458
          %v461 = vmul.f32 %v459, %v459
          %v462 = vmul.f32 %v460, %v460
          %v463 = vsel %vm449, %v461, 0.0
          %464 = vadd.xlane.f32.xlu0 %v463
          %v465 = vpop.xlane.xlu0 %464
          %v466 = vsel %vm449, %v462, 0.0
          %467 = vadd.xlane.f32.xlu0 %v466
          %v468 = vpop.xlane.xlu0 %467
          %v469 = vmul.f32 %v465, %v456
          %v470 = vmul.f32 %v468, %v456
          %v471 = vadd.f32 %v469, 1e-05
          %v472 = vadd.f32 %v470, 1e-05
          %v473 = vrsqrt.pop %v471
          %v474 = vrsqrt.pop %v472
          %v475 = vmul.f32 %v459, %v473
          %v476 = vmul.f32 %v460, %v474
          %v478 = vlaneseq
          %v479 = vshrl.u32 %v478, 7
          %v480 = vsub.s32 0, %v479
          %v481 = vrot.slane %v441, %v480
          %v483 = vmul.f32 %v475, %v481
          %v484 = vmul.f32 %v476, %v481
          %v486 = vlaneseq
          %v487 = vshrl.u32 %v486, 7
          %v488 = vsub.s32 0, %v487
          %v489 = vrot.slane %v442, %v488
          %v491 = vadd.f32 %v483, %v489
          %v492 = vadd.f32 %v484, %v489
          %v493 = vld [vmem:[#allocation7] sm:$0xff]
          %v494 = vld [vmem:[#allocation7 + $0x8] sm:$0xff]
          %v495 = vld [vmem:[#allocation7 + $0x10] sm:$0xff]
          %v496 = vld [vmem:[#allocation7 + $0x18] sm:$0xff]
          %v498 = vsel %vm449, %v491, 0
          %v501 = vsel %vm449, %v492, 0
          %503 = vmatprep.subr.mxu0 0.0
          %504 = vmatpush1.msra.mxu0 %v493
          %505 = vmatprep.subr.mxu0 0.0
          %506 = vmatpush1.msra.mxu0 %v494
          %507 = vmatprep.subr.mxu0 0.0
          %508 = vmatpush1.msra.mxu0 %v495
          %509 = vmatprep.subr.mxu0 0.0
          %510 = vmatpush1.msra.mxu0 %v496
          %511 = vmatprep.subr.mxu0 0.0
          %512 = vmatpush1.msra.mxu0 0.0
          %513 = vmatprep.subr.mxu0 0.0
          %514 = vmatpush1.msra.mxu0 0.0
          %515 = vmatprep.subr.mxu0 0.0
          %516 = vmatpush1.msra.mxu0 0.0
          %517 = vmatprep.subr.mxu0 0.0
          %518 = vmatpush1.msra.mxu0 0.0
          %519 = vmatprep.subr.mxu0 0.0
          %520 = vmatpush1.msra.mxu0 0.0
          %521 = vmatprep.subr.mxu0 0.0
          %522 = vmatpush1.msra.mxu0 0.0
          %523 = vmatprep.subr.mxu0 0.0
          %524 = vmatpush1.msra.mxu0 0.0
          %525 = vmatprep.subr.mxu0 0.0
          %526 = vmatpush1.msra.mxu0 0.0
          %527 = vmatprep.subr.mxu0 0.0
          %528 = vmatpush1.msra.mxu0 0.0
          %529 = vmatprep.subr.mxu0 0.0
          %530 = vmatpush1.msra.mxu0 0.0
          %531 = vmatprep.subr.mxu0 0.0
          %532 = vmatpush1.msra.mxu0 0.0
          %533 = vmatprep.subr.mxu0 0.0
          %534 = vmatpush1.msra.mxu0 0.0
          %535 = vmatprep.subr.mxu0 0.0
          %536 = vmatpush1.msra.mxu0 0.0
          %537 = vmatprep.subr.mxu0 0.0
          %538 = vmatpush1.msra.mxu0 0.0
          %539 = vmatprep.subr.mxu0 0.0
          %540 = vmatpush1.msra.mxu0 0.0
          %541 = vmatprep.subr.mxu0 0.0
          %542 = vmatpush1.msra.mxu0 0.0
          %543 = vmatprep.subr.mxu0 0.0
          %544 = vmatpush1.msra.mxu0 0.0
          %545 = vmatprep.subr.mxu0 0.0
          %546 = vmatpush1.msra.mxu0 0.0
          %547 = vmatprep.subr.mxu0 0.0
          %548 = vmatpush1.msra.mxu0 0.0
          %549 = vmatprep.subr.mxu0 0.0
          %550 = vmatpush1.msra.mxu0 0.0
          %551 = vmatprep.subr.mxu0 0.0
          %552 = vmatpush1.msra.mxu0 0.0
          %553 = vmatprep.subr.mxu0 0.0
          %554 = vmatpush1.msra.mxu0 0.0
          %555 = vmatprep.subr.mxu0 0.0
          %556 = vmatpush1.msra.mxu0 0.0
          %557 = vmatprep.subr.mxu0 0.0
          %558 = vmatpush1.msra.mxu0 0.0
          %559 = vmatprep.subr.mxu0 0.0
          %560 = vmatpush1.msra.mxu0 0.0
          %561 = vmatprep.subr.mxu0 0.0
          %562 = vmatpush1.msra.mxu0 0.0
          %563 = vmatprep.subr.mxu0 0.0
          %564 = vmatpush1.msra.mxu0 0.0
          %565 = vmatprep.subr.mxu0 0.0
          %566 = vmatpush1.msra.mxu0 0.0
          %567 = vmatprep.mubr.f32.mxu0 0.0
          %568 = vmatmul.mubr.f32.gmra.mrb[0].mxu0 %v498
          %v569 = vpop.f32.mrb[0].mxu0
          %v570 = vadd.f32 0.0, %v569
          %v571 = vpop.f32.mrb[0].mxu0
          %572 = vmatprep.mubr.f32.mxu0 0.0
          %573 = vmatmul.mubr.f32.gmra.mrb[0].mxu0 %v501
          %v574 = vpop.f32.mrb[0].mxu0
          %v575 = vadd.f32 0.0, %v574
          %v576 = vpop.f32.mrb[0].mxu0
          %577 = vdwg.mxu0
          %580 = vrot.lane.b32.xlu0 %v570, 112
          %v581 = vpop.permute.xlu0 %580
          %582 = vrot.lane.b32.xlu0 %v575, 112
          %v583 = vpop.permute.xlu0 %582
          %v586 = vcombine.high %v570, 0.0
          %v588 = vunpack.c.l.s4 1983009808
          %v589 = vunpack.c.0.s8 %v588
          %v590 = vlaneseq
          %v591 = vshrl.u32 %v590, 7
          %v592 = vsub.s32 %v589, %v591
          %v593 = vrot.slane %v570, %v592
          %v595 = vunpack.c.l.s4 1983009808
          %v596 = vunpack.c.0.s8 %v595
          %v597 = vlaneseq
          %v598 = vshrl.u32 %v597, 7
          %v599 = vsub.s32 %v596, %v598
          %v600 = vrot.slane %v586, %v599
          %v601 = vcombine.high %v581, 0.0
          %v603 = vunpack.c.l.s4 1983009808
          %v604 = vunpack.c.0.s8 %v603
          %v605 = vlaneseq
          %v606 = vshrl.u32 %v605, 7
          %v607 = vsub.s32 %v604, %v606
          %v608 = vrot.slane %v581, %v607
          %v610 = vunpack.c.l.s4 1983009808
          %v611 = vunpack.c.0.s8 %v610
          %v612 = vlaneseq
          %v613 = vshrl.u32 %v612, 7
          %v614 = vsub.s32 %v611, %v613
          %v615 = vrot.slane %v601, %v614
          %v616 = vcombine.low %v593, %v608
          %v617 = vcombine.high %v593, %v608
          %v619 = vunpack.c.l.s4 1934713408
          %v620 = vunpack.c.0.s8 %v619
          %v621 = vlaneseq
          %v622 = vshrl.u32 %v621, 7
          %v623 = vsub.s32 %v620, %v622
          %v624 = vrot.slane %v616, %v623
          %v626 = vunpack.c.l.s4 1934713408
          %v627 = vunpack.c.0.s8 %v626
          %v628 = vlaneseq
          %v629 = vshrl.u32 %v628, 7
          %v630 = vsub.s32 %v627, %v629
          %v631 = vrot.slane %v617, %v630
          %v632 = vcombine.low %v600, %v615
          %v633 = vcombine.high %v600, %v615
          %v635 = vunpack.c.l.s4 1934713408
          %v636 = vunpack.c.0.s8 %v635
          %v637 = vlaneseq
          %v638 = vshrl.u32 %v637, 7
          %v639 = vsub.s32 %v636, %v638
          %v640 = vrot.slane %v632, %v639
          %v642 = vunpack.c.l.s4 1934713408
          %v643 = vunpack.c.0.s8 %v642
          %v644 = vlaneseq
          %v645 = vshrl.u32 %v644, 7
          %v646 = vsub.s32 %v643, %v645
          %v647 = vrot.slane %v633, %v646
          %v648 = vcombine.high %v624, 0.0
          %v649 = vcombine.high %v631, 0.0
          %v650 = vcombine.high %v640, 0.0
          %v651 = vcombine.high %v647, 0.0
          %v652 = vcombine.high %v575, 0.0
          %v654 = vunpack.c.l.s4 1983009808
          %v655 = vunpack.c.0.s8 %v654
          %v656 = vlaneseq
          %v657 = vshrl.u32 %v656, 7
          %v658 = vsub.s32 %v655, %v657
          %v659 = vrot.slane %v575, %v658
          %v661 = vunpack.c.l.s4 1983009808
          %v662 = vunpack.c.0.s8 %v661
          %v663 = vlaneseq
          %v664 = vshrl.u32 %v663, 7
          %v665 = vsub.s32 %v662, %v664
          %v666 = vrot.slane %v652, %v665
          %v667 = vcombine.high %v583, 0.0
          %v669 = vunpack.c.l.s4 1983009808
          %v670 = vunpack.c.0.s8 %v669
          %v671 = vlaneseq
          %v672 = vshrl.u32 %v671, 7
          %v673 = vsub.s32 %v670, %v672
          %v674 = vrot.slane %v583, %v673
          %v676 = vunpack.c.l.s4 1983009808
          %v677 = vunpack.c.0.s8 %v676
          %v678 = vlaneseq
          %v679 = vshrl.u32 %v678, 7
          %v680 = vsub.s32 %v677, %v679
          %v681 = vrot.slane %v667, %v680
          %v682 = vcombine.low %v659, %v674
          %v683 = vcombine.high %v659, %v674
          %v685 = vunpack.c.l.s4 1934713408
          %v686 = vunpack.c.0.s8 %v685
          %v687 = vlaneseq
          %v688 = vshrl.u32 %v687, 7
          %v689 = vsub.s32 %v686, %v688
          %v690 = vrot.slane %v682, %v689
          %v692 = vunpack.c.l.s4 1934713408
          %v693 = vunpack.c.0.s8 %v692
          %v694 = vlaneseq
          %v695 = vshrl.u32 %v694, 7
          %v696 = vsub.s32 %v693, %v695
          %v697 = vrot.slane %v683, %v696
          %v698 = vcombine.low %v666, %v681
          %v699 = vcombine.high %v666, %v681
          %v701 = vunpack.c.l.s4 1934713408
          %v702 = vunpack.c.0.s8 %v701
          %v703 = vlaneseq
          %v704 = vshrl.u32 %v703, 7
          %v705 = vsub.s32 %v702, %v704
          %v706 = vrot.slane %v698, %v705
          %v708 = vunpack.c.l.s4 1934713408
          %v709 = vunpack.c.0.s8 %v708
          %v710 = vlaneseq
          %v711 = vshrl.u32 %v710, 7
          %v712 = vsub.s32 %v709, %v711
          %v713 = vrot.slane %v699, %v712
          %v714 = vcombine.high %v690, 0.0
          %v715 = vcombine.high %v697, 0.0
          %v716 = vcombine.high %v706, 0.0
          %v717 = vcombine.high %v713, 0.0
          %v718 = vcombine.low %v624, %v631
          %v720 = vunpack.c.l.s4 1983009808
          %v721 = vunpack.c.0.s8 %v720
          %v722 = vlaneseq
          %v723 = vshrl.u32 %v722, 7
          %v724 = vsub.s32 %v721, %v723
          %v725 = vrot.slane %v718, %v724
          %v726 = vcombine.low %v648, %v649
          %v728 = vunpack.c.l.s4 1983009808
          %v729 = vunpack.c.0.s8 %v728
          %v730 = vlaneseq
          %v731 = vshrl.u32 %v730, 7
          %v732 = vsub.s32 %v729, %v731
          %v733 = vrot.slane %v726, %v732
          %v734 = vcombine.low %v640, %v647
          %v736 = vunpack.c.l.s4 1983009808
          %v737 = vunpack.c.0.s8 %v736
          %v738 = vlaneseq
          %v739 = vshrl.u32 %v738, 7
          %v740 = vsub.s32 %v737, %v739
          %v741 = vrot.slane %v734, %v740
          %v742 = vcombine.low %v650, %v651
          %v744 = vunpack.c.l.s4 1983009808
          %v745 = vunpack.c.0.s8 %v744
          %v746 = vlaneseq
          %v747 = vshrl.u32 %v746, 7
          %v748 = vsub.s32 %v745, %v747
          %v749 = vrot.slane %v742, %v748
          %v750 = vcombine.low %v725, %v733
          %v752 = vunpack.c.l.s4 1934713408
          %v753 = vunpack.c.0.s8 %v752
          %v754 = vlaneseq
          %v755 = vshrl.u32 %v754, 7
          %v756 = vsub.s32 %v753, %v755
          %v757 = vrot.slane %v750, %v756
          %v758 = vcombine.low %v741, %v749
          %v760 = vunpack.c.l.s4 1934713408
          %v761 = vunpack.c.0.s8 %v760
          %v762 = vlaneseq
          %v763 = vshrl.u32 %v762, 7
          %v764 = vsub.s32 %v761, %v763
          %v765 = vrot.slane %v758, %v764
          %v766 = vcombine.low %v757, %v765
          %v767 = vcombine.high %v757, %v765
          %v768 = vcombine.low %v690, %v697
          %v770 = vunpack.c.l.s4 1983009808
          %v771 = vunpack.c.0.s8 %v770
          %v772 = vlaneseq
          %v773 = vshrl.u32 %v772, 7
          %v774 = vsub.s32 %v771, %v773
          %v775 = vrot.slane %v768, %v774
          %v776 = vcombine.low %v714, %v715
          %v778 = vunpack.c.l.s4 1983009808
          %v779 = vunpack.c.0.s8 %v778
          %v780 = vlaneseq
          %v781 = vshrl.u32 %v780, 7
          %v782 = vsub.s32 %v779, %v781
          %v783 = vrot.slane %v776, %v782
          %v784 = vcombine.low %v706, %v713
          %v786 = vunpack.c.l.s4 1983009808
          %v787 = vunpack.c.0.s8 %v786
          %v788 = vlaneseq
          %v789 = vshrl.u32 %v788, 7
          %v790 = vsub.s32 %v787, %v789
          %v791 = vrot.slane %v784, %v790
          %v792 = vcombine.low %v716, %v717
          %v794 = vunpack.c.l.s4 1983009808
          %v795 = vunpack.c.0.s8 %v794
          %v796 = vlaneseq
          %v797 = vshrl.u32 %v796, 7
          %v798 = vsub.s32 %v795, %v797
          %v799 = vrot.slane %v792, %v798
          %v800 = vcombine.low %v775, %v783
          %v802 = vunpack.c.l.s4 1934713408
          %v803 = vunpack.c.0.s8 %v802
          %v804 = vlaneseq
          %v805 = vshrl.u32 %v804, 7
          %v806 = vsub.s32 %v803, %v805
          %v807 = vrot.slane %v800, %v806
          %v808 = vcombine.low %v791, %v799
          %v810 = vunpack.c.l.s4 1934713408
          %v811 = vunpack.c.0.s8 %v810
          %v812 = vlaneseq
          %v813 = vshrl.u32 %v812, 7
          %v814 = vsub.s32 %v811, %v813
          %v815 = vrot.slane %v808, %v814
          %v816 = vcombine.low %v807, %v815
          %v817 = vcombine.high %v807, %v815
          %vm818 = vcmask 130048
          %819 = vst.msk [vmem:[#allocation2] sm:$0xff] %vm818, %v766
          %820 = vst.msk [vmem:[#allocation2 + $0x8] sm:$0xff] %vm818, %v816
          %821 = vst.msk [vmem:[#allocation2 + $0x10] sm:$0xff] %vm818, %v767
          %822 = vst.msk [vmem:[#allocation2 + $0x18] sm:$0xff] %vm818, %v817
          %823 = vrot.lane.b32.xlu0 %v570, 96
          %v824 = vpop.permute.xlu0 %823
          %825 = vrot.lane.b32.xlu0 %v575, 96
          %v826 = vpop.permute.xlu0 %825
          %827 = vrot.lane.b32.xlu0 %v581, 96
          %v828 = vpop.permute.xlu0 %827
          %829 = vrot.lane.b32.xlu0 %v583, 96
          %v830 = vpop.permute.xlu0 %829
          %v835 = vcombine.high %v824, 0.0
          %v837 = vunpack.c.l.s4 1983009808
          %v838 = vunpack.c.0.s8 %v837
          %v839 = vlaneseq
          %v840 = vshrl.u32 %v839, 7
          %v841 = vsub.s32 %v838, %v840
          %v842 = vrot.slane %v824, %v841
          %v844 = vunpack.c.l.s4 1983009808
          %v845 = vunpack.c.0.s8 %v844
          %v846 = vlaneseq
          %v847 = vshrl.u32 %v846, 7
          %v848 = vsub.s32 %v845, %v847
          %v849 = vrot.slane %v835, %v848
          %v850 = vcombine.high %v828, 0.0
          %v852 = vunpack.c.l.s4 1983009808
          %v853 = vunpack.c.0.s8 %v852
          %v854 = vlaneseq
          %v855 = vshrl.u32 %v854, 7
          %v856 = vsub.s32 %v853, %v855
          %v857 = vrot.slane %v828, %v856
          %v859 = vunpack.c.l.s4 1983009808
          %v860 = vunpack.c.0.s8 %v859
          %v861 = vlaneseq
          %v862 = vshrl.u32 %v861, 7
          %v863 = vsub.s32 %v860, %v862
          %v864 = vrot.slane %v850, %v863
          %v865 = vcombine.low %v842, %v857
          %v866 = vcombine.high %v842, %v857
          %v868 = vunpack.c.l.s4 1934713408
          %v869 = vunpack.c.0.s8 %v868
          %v870 = vlaneseq
          %v871 = vshrl.u32 %v870, 7
          %v872 = vsub.s32 %v869, %v871
          %v873 = vrot.slane %v865, %v872
          %v875 = vunpack.c.l.s4 1934713408
          %v876 = vunpack.c.0.s8 %v875
          %v877 = vlaneseq
          %v878 = vshrl.u32 %v877, 7
          %v879 = vsub.s32 %v876, %v878
          %v880 = vrot.slane %v866, %v879
          %v881 = vcombine.low %v849, %v864
          %v882 = vcombine.high %v849, %v864
          %v884 = vunpack.c.l.s4 1934713408
          %v885 = vunpack.c.0.s8 %v884
          %v886 = vlaneseq
          %v887 = vshrl.u32 %v886, 7
          %v888 = vsub.s32 %v885, %v887
          %v889 = vrot.slane %v881, %v888
          %v891 = vunpack.c.l.s4 1934713408
          %v892 = vunpack.c.0.s8 %v891
          %v893 = vlaneseq
          %v894 = vshrl.u32 %v893, 7
          %v895 = vsub.s32 %v892, %v894
          %v896 = vrot.slane %v882, %v895
          %v897 = vcombine.high %v873, 0.0
          %v898 = vcombine.high %v880, 0.0
          %v899 = vcombine.high %v889, 0.0
          %v900 = vcombine.high %v896, 0.0
          %v901 = vcombine.high %v826, 0.0
          %v903 = vunpack.c.l.s4 1983009808
          %v904 = vunpack.c.0.s8 %v903
          %v905 = vlaneseq
          %v906 = vshrl.u32 %v905, 7
          %v907 = vsub.s32 %v904, %v906
          %v908 = vrot.slane %v826, %v907
          %v910 = vunpack.c.l.s4 1983009808
          %v911 = vunpack.c.0.s8 %v910
          %v912 = vlaneseq
          %v913 = vshrl.u32 %v912, 7
          %v914 = vsub.s32 %v911, %v913
          %v915 = vrot.slane %v901, %v914
          %v916 = vcombine.high %v830, 0.0
          %v918 = vunpack.c.l.s4 1983009808
          %v919 = vunpack.c.0.s8 %v918
          %v920 = vlaneseq
          %v921 = vshrl.u32 %v920, 7
          %v922 = vsub.s32 %v919, %v921
          %v923 = vrot.slane %v830, %v922
          %v925 = vunpack.c.l.s4 1983009808
          %v926 = vunpack.c.0.s8 %v925
          %v927 = vlaneseq
          %v928 = vshrl.u32 %v927, 7
          %v929 = vsub.s32 %v926, %v928
          %v930 = vrot.slane %v916, %v929
          %v931 = vcombine.low %v908, %v923
          %v932 = vcombine.high %v908, %v923
          %v934 = vunpack.c.l.s4 1934713408
          %v935 = vunpack.c.0.s8 %v934
          %v936 = vlaneseq
          %v937 = vshrl.u32 %v936, 7
          %v938 = vsub.s32 %v935, %v937
          %v939 = vrot.slane %v931, %v938
          %v941 = vunpack.c.l.s4 1934713408
          %v942 = vunpack.c.0.s8 %v941
          %v943 = vlaneseq
          %v944 = vshrl.u32 %v943, 7
          %v945 = vsub.s32 %v942, %v944
          %v946 = vrot.slane %v932, %v945
          %v947 = vcombine.low %v915, %v930
          %v948 = vcombine.high %v915, %v930
          %v950 = vunpack.c.l.s4 1934713408
          %v951 = vunpack.c.0.s8 %v950
          %v952 = vlaneseq
          %v953 = vshrl.u32 %v952, 7
          %v954 = vsub.s32 %v951, %v953
          %v955 = vrot.slane %v947, %v954
          %v957 = vunpack.c.l.s4 1934713408
          %v958 = vunpack.c.0.s8 %v957
          %v959 = vlaneseq
          %v960 = vshrl.u32 %v959, 7
          %v961 = vsub.s32 %v958, %v960
          %v962 = vrot.slane %v948, %v961
          %v963 = vcombine.high %v939, 0.0
          %v964 = vcombine.high %v946, 0.0
          %v965 = vcombine.high %v955, 0.0
          %v966 = vcombine.high %v962, 0.0
          %v967 = vcombine.low %v873, %v880
          %v969 = vunpack.c.l.s4 1983009808
          %v970 = vunpack.c.0.s8 %v969
          %v971 = vlaneseq
          %v972 = vshrl.u32 %v971, 7
          %v973 = vsub.s32 %v970, %v972
          %v974 = vrot.slane %v967, %v973
          %v975 = vcombine.low %v897, %v898
          %v977 = vunpack.c.l.s4 1983009808
          %v978 = vunpack.c.0.s8 %v977
          %v979 = vlaneseq
          %v980 = vshrl.u32 %v979, 7
          %v981 = vsub.s32 %v978, %v980
          %v982 = vrot.slane %v975, %v981
          %v983 = vcombine.low %v889, %v896
          %v985 = vunpack.c.l.s4 1983009808
          %v986 = vunpack.c.0.s8 %v985
          %v987 = vlaneseq
          %v988 = vshrl.u32 %v987, 7
          %v989 = vsub.s32 %v986, %v988
          %v990 = vrot.slane %v983, %v989
          %v991 = vcombine.low %v899, %v900
          %v993 = vunpack.c.l.s4 1983009808
          %v994 = vunpack.c.0.s8 %v993
          %v995 = vlaneseq
          %v996 = vshrl.u32 %v995, 7
          %v997 = vsub.s32 %v994, %v996
          %v998 = vrot.slane %v991, %v997
          %v999 = vcombine.low %v974, %v982
          %v1001 = vunpack.c.l.s4 1934713408
          %v1002 = vunpack.c.0.s8 %v1001
          %v1003 = vlaneseq
          %v1004 = vshrl.u32 %v1003, 7
          %v1005 = vsub.s32 %v1002, %v1004
          %v1006 = vrot.slane %v999, %v1005
          %v1007 = vcombine.low %v990, %v998
          %v1009 = vunpack.c.l.s4 1934713408
          %v1010 = vunpack.c.0.s8 %v1009
          %v1011 = vlaneseq
          %v1012 = vshrl.u32 %v1011, 7
          %v1013 = vsub.s32 %v1010, %v1012
          %v1014 = vrot.slane %v1007, %v1013
          %v1015 = vcombine.low %v1006, %v1014
          %v1016 = vcombine.high %v1006, %v1014
          %v1017 = vcombine.low %v939, %v946
          %v1019 = vunpack.c.l.s4 1983009808
          %v1020 = vunpack.c.0.s8 %v1019
          %v1021 = vlaneseq
          %v1022 = vshrl.u32 %v1021, 7
          %v1023 = vsub.s32 %v1020, %v1022
          %v1024 = vrot.slane %v1017, %v1023
          %v1025 = vcombine.low %v963, %v964
          %v1027 = vunpack.c.l.s4 1983009808
          %v1028 = vunpack.c.0.s8 %v1027
          %v1029 = vlaneseq
          %v1030 = vshrl.u32 %v1029, 7
          %v1031 = vsub.s32 %v1028, %v1030
          %v1032 = vrot.slane %v1025, %v1031
          %v1033 = vcombine.low %v955, %v962
          %v1035 = vunpack.c.l.s4 1983009808
          %v1036 = vunpack.c.0.s8 %v1035
          %v1037 = vlaneseq
          %v1038 = vshrl.u32 %v1037, 7
          %v1039 = vsub.s32 %v1036, %v1038
          %v1040 = vrot.slane %v1033, %v1039
          %v1041 = vcombine.low %v965, %v966
          %v1043 = vunpack.c.l.s4 1983009808
          %v1044 = vunpack.c.0.s8 %v1043
          %v1045 = vlaneseq
          %v1046 = vshrl.u32 %v1045, 7
          %v1047 = vsub.s32 %v1044, %v1046
          %v1048 = vrot.slane %v1041, %v1047
          %v1049 = vcombine.low %v1024, %v1032
          %v1051 = vunpack.c.l.s4 1934713408
          %v1052 = vunpack.c.0.s8 %v1051
          %v1053 = vlaneseq
          %v1054 = vshrl.u32 %v1053, 7
          %v1055 = vsub.s32 %v1052, %v1054
          %v1056 = vrot.slane %v1049, %v1055
          %v1057 = vcombine.low %v1040, %v1048
          %v1059 = vunpack.c.l.s4 1934713408
          %v1060 = vunpack.c.0.s8 %v1059
          %v1061 = vlaneseq
          %v1062 = vshrl.u32 %v1061, 7
          %v1063 = vsub.s32 %v1060, %v1062
          %v1064 = vrot.slane %v1057, %v1063
          %v1065 = vcombine.low %v1056, %v1064
          %v1066 = vcombine.high %v1056, %v1064
          %1067 = vst.msk [vmem:[#allocation3] sm:$0xff] %vm818, %v1015
          %1068 = vst.msk [vmem:[#allocation3 + $0x8] sm:$0xff] %vm818, %v1065
          %1069 = vst.msk [vmem:[#allocation3 + $0x10] sm:$0xff] %vm818, %v1016
          %1070 = vst.msk [vmem:[#allocation3 + $0x18] sm:$0xff] %vm818, %v1066
        $region72: #{tpu_custom_call.1} parent=51 // pred_fallthru
          _
        %v1071 = vld [vmem:[%s379] sm:$0xff]
        %vm1072 = vcmask 261120
        %v1073 = vsel %vm1072, %v1071, 0.0
        %1074 = vadd.xlane.f32.xlu0 %v1073
        %v1075 = vpop.xlane.xlu0 %1074
        %v1076 = vrcp.pop 32.0
        %v1077 = vmul.f32 %v1075, %v1076
        %v1078 = vsub.f32 %v1071, %v1077
        %v1079 = vmul.f32 %v1078, %v1078
        %v1080 = vsel %vm1072, %v1079, 0.0
        %1081 = vadd.xlane.f32.xlu0 %v1080
        %v1082 = vpop.xlane.xlu0 %1081
        %v1083 = vmul.f32 %v1082, %v1076
        %v1084 = vadd.f32 %v1083, 1e-05
        %v1085 = vrsqrt.pop %v1084
        %v1086 = vmul.f32 %v1078, %v1085
        %v1088 = vlaneseq
        %v1089 = vshrl.u32 %v1088, 7
        %v1090 = vsub.s32 0, %v1089
        %v1091 = vrot.slane %v441, %v1090
        %v1093 = vmul.f32 %v1086, %v1091
        %v1095 = vlaneseq
        %v1096 = vshrl.u32 %v1095, 7
        %v1097 = vsub.s32 0, %v1096
        %v1098 = vrot.slane %v442, %v1097
        %v1100 = vadd.f32 %v1093, %v1098
        %v1101 = vld [vmem:[%s4] sm:$0xff]
        %v1102 = vld [vmem:[%s4 + $0x8] sm:$0xff]
        %v1103 = vld [vmem:[%s4 + $0x10] sm:$0xff]
        %v1104 = vld [vmem:[%s4 + $0x18] sm:$0xff]
        %v1106 = vsel %vm1072, %v1100, 0
        %1108 = vmatprep.subr.mxu0 0.0
        %1109 = vmatpush1.msra.mxu0 %v1101
        %1110 = vmatprep.subr.mxu0 0.0
        %1111 = vmatpush1.msra.mxu0 %v1102
        %1112 = vmatprep.subr.mxu0 0.0
        %1113 = vmatpush1.msra.mxu0 %v1103
        %1114 = vmatprep.subr.mxu0 0.0
        %1115 = vmatpush1.msra.mxu0 %v1104
        %1116 = vmatprep.subr.mxu0 0.0
        %1117 = vmatpush1.msra.mxu0 0.0
        %1118 = vmatprep.subr.mxu0 0.0
        %1119 = vmatpush1.msra.mxu0 0.0
        %1120 = vmatprep.subr.mxu0 0.0
        %1121 = vmatpush1.msra.mxu0 0.0
        %1122 = vmatprep.subr.mxu0 0.0
        %1123 = vmatpush1.msra.mxu0 0.0
        %1124 = vmatprep.subr.mxu0 0.0
        %1125 = vmatpush1.msra.mxu0 0.0
        %1126 = vmatprep.subr.mxu0 0.0
        %1127 = vmatpush1.msra.mxu0 0.0
        %1128 = vmatprep.subr.mxu0 0.0
        %1129 = vmatpush1.msra.mxu0 0.0
        %1130 = vmatprep.subr.mxu0 0.0
        %1131 = vmatpush1.msra.mxu0 0.0
        %1132 = vmatprep.subr.mxu0 0.0
        %1133 = vmatpush1.msra.mxu0 0.0
        %1134 = vmatprep.subr.mxu0 0.0
        %1135 = vmatpush1.msra.mxu0 0.0
        %1136 = vmatprep.subr.mxu0 0.0
        %1137 = vmatpush1.msra.mxu0 0.0
        %1138 = vmatprep.subr.mxu0 0.0
        %1139 = vmatpush1.msra.mxu0 0.0
        %1140 = vmatprep.subr.mxu0 0.0
        %1141 = vmatpush1.msra.mxu0 0.0
        %1142 = vmatprep.subr.mxu0 0.0
        %1143 = vmatpush1.msra.mxu0 0.0
        %1144 = vmatprep.subr.mxu0 0.0
        %1145 = vmatpush1.msra.mxu0 0.0
        %1146 = vmatprep.subr.mxu0 0.0
        %1147 = vmatpush1.msra.mxu0 0.0
        %1148 = vmatprep.subr.mxu0 0.0
        %1149 = vmatpush1.msra.mxu0 0.0
        %1150 = vmatprep.subr.mxu0 0.0
        %1151 = vmatpush1.msra.mxu0 0.0
        %1152 = vmatprep.subr.mxu0 0.0
        %1153 = vmatpush1.msra.mxu0 0.0
        %1154 = vmatprep.subr.mxu0 0.0
        %1155 = vmatpush1.msra.mxu0 0.0
        %1156 = vmatprep.subr.mxu0 0.0
        %1157 = vmatpush1.msra.mxu0 0.0
        %1158 = vmatprep.subr.mxu0 0.0
        %1159 = vmatpush1.msra.mxu0 0.0
        %1160 = vmatprep.subr.mxu0 0.0
        %1161 = vmatpush1.msra.mxu0 0.0
        %1162 = vmatprep.subr.mxu0 0.0
        %1163 = vmatpush1.msra.mxu0 0.0
        %1164 = vmatprep.subr.mxu0 0.0
        %1165 = vmatpush1.msra.mxu0 0.0
        %1166 = vmatprep.subr.mxu0 0.0
        %1167 = vmatpush1.msra.mxu0 0.0
        %1168 = vmatprep.subr.mxu0 0.0
        %1169 = vmatpush1.msra.mxu0 0.0
        %1170 = vmatprep.subr.mxu0 0.0
        %1171 = vmatpush1.msra.mxu0 0.0
        %1172 = vmatprep.mubr.f32.mxu0 0.0
        %1173 = vmatmul.mubr.f32.gmra.mrb[0].mxu0 %v1106
        %v1174 = vpop.f32.mrb[0].mxu0
        %v1175 = vadd.f32 0.0, %v1174
        %v1176 = vpop.f32.mrb[0].mxu0
        %1177 = vdwg.mxu0
        %v1178 = vmul.f32 %v1175, 0.25
        %1180 = vrot.lane.b32.xlu0 %v1178, 112
        %v1181 = vpop.permute.xlu0 %1180
        %v1183 = vcombine.high %v1178, 0.0
        %v1185 = vunpack.c.l.s4 1983009808
        %v1186 = vunpack.c.0.s8 %v1185
        %v1187 = vlaneseq
        %v1188 = vshrl.u32 %v1187, 7
        %v1189 = vsub.s32 %v1186, %v1188
        %v1190 = vrot.slane %v1178, %v1189
        %v1192 = vunpack.c.l.s4 1983009808
        %v1193 = vunpack.c.0.s8 %v1192
        %v1194 = vlaneseq
        %v1195 = vshrl.u32 %v1194, 7
        %v1196 = vsub.s32 %v1193, %v1195
        %v1197 = vrot.slane %v1183, %v1196
        %v1198 = vcombine.high %v1181, 0.0
        %v1200 = vunpack.c.l.s4 1983009808
        %v1201 = vunpack.c.0.s8 %v1200
        %v1202 = vlaneseq
        %v1203 = vshrl.u32 %v1202, 7
        %v1204 = vsub.s32 %v1201, %v1203
        %v1205 = vrot.slane %v1181, %v1204
        %v1207 = vunpack.c.l.s4 1983009808
        %v1208 = vunpack.c.0.s8 %v1207
        %v1209 = vlaneseq
        %v1210 = vshrl.u32 %v1209, 7
        %v1211 = vsub.s32 %v1208, %v1210
        %v1212 = vrot.slane %v1198, %v1211
        %v1213 = vcombine.low %v1190, %v1205
        %v1214 = vcombine.high %v1190, %v1205
        %v1216 = vunpack.c.l.s4 1934713408
        %v1217 = vunpack.c.0.s8 %v1216
        %v1218 = vlaneseq
        %v1219 = vshrl.u32 %v1218, 7
        %v1220 = vsub.s32 %v1217, %v1219
        %v1221 = vrot.slane %v1213, %v1220
        %v1223 = vunpack.c.l.s4 1934713408
        %v1224 = vunpack.c.0.s8 %v1223
        %v1225 = vlaneseq
        %v1226 = vshrl.u32 %v1225, 7
        %v1227 = vsub.s32 %v1224, %v1226
        %v1228 = vrot.slane %v1214, %v1227
        %v1229 = vcombine.low %v1197, %v1212
        %v1230 = vcombine.high %v1197, %v1212
        %v1232 = vunpack.c.l.s4 1934713408
        %v1233 = vunpack.c.0.s8 %v1232
        %v1234 = vlaneseq
        %v1235 = vshrl.u32 %v1234, 7
        %v1236 = vsub.s32 %v1233, %v1235
        %v1237 = vrot.slane %v1229, %v1236
        %v1239 = vunpack.c.l.s4 1934713408
        %v1240 = vunpack.c.0.s8 %v1239
        %v1241 = vlaneseq
        %v1242 = vshrl.u32 %v1241, 7
        %v1243 = vsub.s32 %v1240, %v1242
        %v1244 = vrot.slane %v1230, %v1243
        %v1245 = vcombine.high %v1221, 0.0
        %v1246 = vcombine.high %v1228, 0.0
        %v1247 = vcombine.high %v1237, 0.0
        %v1248 = vcombine.high %v1244, 0.0
        %v1249 = vcombine.low %v1221, %v1228
        %v1251 = vunpack.c.l.s4 1983009808
        %v1252 = vunpack.c.0.s8 %v1251
        %v1253 = vlaneseq
        %v1254 = vshrl.u32 %v1253, 7
        %v1255 = vsub.s32 %v1252, %v1254
        %v1256 = vrot.slane %v1249, %v1255
        %v1257 = vcombine.low %v1245, %v1246
        %v1259 = vunpack.c.l.s4 1983009808
        %v1260 = vunpack.c.0.s8 %v1259
        %v1261 = vlaneseq
        %v1262 = vshrl.u32 %v1261, 7
        %v1263 = vsub.s32 %v1260, %v1262
        %v1264 = vrot.slane %v1257, %v1263
        %v1265 = vcombine.low %v1237, %v1244
        %v1267 = vunpack.c.l.s4 1983009808
        %v1268 = vunpack.c.0.s8 %v1267
        %v1269 = vlaneseq
        %v1270 = vshrl.u32 %v1269, 7
        %v1271 = vsub.s32 %v1268, %v1270
        %v1272 = vrot.slane %v1265, %v1271
        %v1273 = vcombine.low %v1247, %v1248
        %v1275 = vunpack.c.l.s4 1983009808
        %v1276 = vunpack.c.0.s8 %v1275
        %v1277 = vlaneseq
        %v1278 = vshrl.u32 %v1277, 7
        %v1279 = vsub.s32 %v1276, %v1278
        %v1280 = vrot.slane %v1273, %v1279
        %v1281 = vcombine.low %v1256, %v1264
        %v1283 = vunpack.c.l.s4 1934713408
        %v1284 = vunpack.c.0.s8 %v1283
        %v1285 = vlaneseq
        %v1286 = vshrl.u32 %v1285, 7
        %v1287 = vsub.s32 %v1284, %v1286
        %v1288 = vrot.slane %v1281, %v1287
        %v1289 = vcombine.low %v1272, %v1280
        %v1291 = vunpack.c.l.s4 1934713408
        %v1292 = vunpack.c.0.s8 %v1291
        %v1293 = vlaneseq
        %v1294 = vshrl.u32 %v1293, 7
        %v1295 = vsub.s32 %v1292, %v1294
        %v1296 = vrot.slane %v1289, %v1295
        %v1297 = vcombine.low %v1288, %v1296
        %v1298 = vcombine.high %v1288, %v1296
        %v1299 = vld [vmem:[#allocation2] sm:$0xff]
        %v1300 = vld [vmem:[#allocation2 + $0x8] sm:$0xff]
        %v1301 = vld [vmem:[#allocation2 + $0x10] sm:$0xff]
        %v1302 = vld [vmem:[#allocation2 + $0x18] sm:$0xff]
        %v1303 = vld [vmem:[#allocation3] sm:$0xff]
        %v1304 = vld [vmem:[#allocation3 + $0x8] sm:$0xff]
        %v1305 = vld [vmem:[#allocation3 + $0x10] sm:$0xff]
        %v1306 = vld [vmem:[#allocation3 + $0x18] sm:$0xff]
        %vm1307 = vcmask 130048
        %v1309 = vsel %vm1307, %v1297, 0
        %v1312 = vsel %vm1307, %v1299, 0
        %v1315 = vsel %vm1307, %v1300, 0
        %1317 = vmatprep.subr.mxu0 0.0
        %1318 = vmatpush1.xpose.msra.mxu0 %v1312
        %1319 = vmatprep.subr.mxu0 0.0
        %1320 = vmatpush1.xpose.msra.mxu0 %v1315
        %1321 = vmatprep.subr.mxu0 0.0
        %1322 = vmatpush1.xpose.msra.mxu0 0.0
        %1323 = vmatprep.subr.mxu0 0.0
        %1324 = vmatpush1.xpose.msra.mxu0 0.0
        %1325 = vmatprep.subr.mxu0 0.0
        %1326 = vmatpush1.xpose.msra.mxu0 0.0
        %1327 = vmatprep.subr.mxu0 0.0
        %1328 = vmatpush1.xpose.msra.mxu0 0.0
        %1329 = vmatprep.subr.mxu0 0.0
        %1330 = vmatpush1.xpose.msra.mxu0 0.0
        %1331 = vmatprep.subr.mxu0 0.0
        %1332 = vmatpush1.xpose.msra.mxu0 0.0
        %1333 = vmatprep.subr.mxu0 0.0
        %1334 = vmatpush1.xpose.msra.mxu0 0.0
        %1335 = vmatprep.subr.mxu0 0.0
        %1336 = vmatpush1.xpose.msra.mxu0 0.0
        %1337 = vmatprep.subr.mxu0 0.0
        %1338 = vmatpush1.xpose.msra.mxu0 0.0
        %1339 = vmatprep.subr.mxu0 0.0
        %1340 = vmatpush1.xpose.msra.mxu0 0.0
        %1341 = vmatprep.subr.mxu0 0.0
        %1342 = vmatpush1.xpose.msra.mxu0 0.0
        %1343 = vmatprep.subr.mxu0 0.0
        %1344 = vmatpush1.xpose.msra.mxu0 0.0
        %1345 = vmatprep.subr.mxu0 0.0
        %1346 = vmatpush1.xpose.msra.mxu0 0.0
        %1347 = vmatprep.subr.mxu0 0.0
        %1348 = vmatpush1.xpose.msra.mxu0 0.0
        %1349 = vmatprep.subr.mxu0 0.0
        %1350 = vmatpush1.xpose.msra.mxu0 0.0
        %1351 = vmatprep.subr.mxu0 0.0
        %1352 = vmatpush1.xpose.msra.mxu0 0.0
        %1353 = vmatprep.subr.mxu0 0.0
        %1354 = vmatpush1.xpose.msra.mxu0 0.0
        %1355 = vmatprep.subr.mxu0 0.0
        %1356 = vmatpush1.xpose.msra.mxu0 0.0
        %1357 = vmatprep.subr.mxu0 0.0
        %1358 = vmatpush1.xpose.msra.mxu0 0.0
        %1359 = vmatprep.subr.mxu0 0.0
        %1360 = vmatpush1.xpose.msra.mxu0 0.0
        %1361 = vmatprep.subr.mxu0 0.0
        %1362 = vmatpush1.xpose.msra.mxu0 0.0
        %1363 = vmatprep.subr.mxu0 0.0
        %1364 = vmatpush1.xpose.msra.mxu0 0.0
        %1365 = vmatprep.subr.mxu0 0.0
        %1366 = vmatpush1.xpose.msra.mxu0 0.0
        %1367 = vmatprep.subr.mxu0 0.0
        %1368 = vmatpush1.xpose.msra.mxu0 0.0
        %1369 = vmatprep.subr.mxu0 0.0
        %1370 = vmatpush1.xpose.msra.mxu0 0.0
        %1371 = vmatprep.subr.mxu0 0.0
        %1372 = vmatpush1.xpose.msra.mxu0 0.0
        %1373 = vmatprep.subr.mxu0 0.0
        %1374 = vmatpush1.xpose.msra.mxu0 0.0
        %1375 = vmatprep.subr.mxu0 0.0
        %1376 = vmatpush1.xpose.msra.mxu0 0.0
        %1377 = vmatprep.subr.mxu0 0.0
        %1378 = vmatpush1.xpose.msra.mxu0 0.0
        %1379 = vmatprep.subr.mxu0 0.0
        %1380 = vmatpush1.xpose.msra.mxu0 0.0
        %1381 = vmatprep.mubr.f32.mxu0 0.0
        %1382 = vmatmul.mubr.f32.gmra.mrb[0].mxu0 %v1309
        %v1383 = vpop.f32.mrb[0].mxu0
        %v1384 = vadd.f32 0.0, %v1383
        %v1385 = vpop.f32.mrb[0].mxu0
        %1386 = vdwg.mxu0
        %v1388 = vsel %vm1307, %v1298, 0
        %v1391 = vsel %vm1307, %v1301, 0
        %v1394 = vsel %vm1307, %v1302, 0
        %1396 = vmatprep.subr.mxu0 0.0
        %1397 = vmatpush1.xpose.msra.mxu0 %v1391
        %1398 = vmatprep.subr.mxu0 0.0
        %1399 = vmatpush1.xpose.msra.mxu0 %v1394
        %1400 = vmatprep.subr.mxu0 0.0
        %1401 = vmatpush1.xpose.msra.mxu0 0.0
        %1402 = vmatprep.subr.mxu0 0.0
        %1403 = vmatpush1.xpose.msra.mxu0 0.0
        %1404 = vmatprep.subr.mxu0 0.0
        %1405 = vmatpush1.xpose.msra.mxu0 0.0
        %1406 = vmatprep.subr.mxu0 0.0
        %1407 = vmatpush1.xpose.msra.mxu0 0.0
        %1408 = vmatprep.subr.mxu0 0.0
        %1409 = vmatpush1.xpose.msra.mxu0 0.0
        %1410 = vmatprep.subr.mxu0 0.0
        %1411 = vmatpush1.xpose.msra.mxu0 0.0
        %1412 = vmatprep.subr.mxu0 0.0
        %1413 = vmatpush1.xpose.msra.mxu0 0.0
        %1414 = vmatprep.subr.mxu0 0.0
        %1415 = vmatpush1.xpose.msra.mxu0 0.0
        %1416 = vmatprep.subr.mxu0 0.0
        %1417 = vmatpush1.xpose.msra.mxu0 0.0
        %1418 = vmatprep.subr.mxu0 0.0
        %1419 = vmatpush1.xpose.msra.mxu0 0.0
        %1420 = vmatprep.subr.mxu0 0.0
        %1421 = vmatpush1.xpose.msra.mxu0 0.0
        %1422 = vmatprep.subr.mxu0 0.0
        %1423 = vmatpush1.xpose.msra.mxu0 0.0
        %1424 = vmatprep.subr.mxu0 0.0
        %1425 = vmatpush1.xpose.msra.mxu0 0.0
        %1426 = vmatprep.subr.mxu0 0.0
        %1427 = vmatpush1.xpose.msra.mxu0 0.0
        %1428 = vmatprep.subr.mxu0 0.0
        %1429 = vmatpush1.xpose.msra.mxu0 0.0
        %1430 = vmatprep.subr.mxu0 0.0
        %1431 = vmatpush1.xpose.msra.mxu0 0.0
        %1432 = vmatprep.subr.mxu0 0.0
        %1433 = vmatpush1.xpose.msra.mxu0 0.0
        %1434 = vmatprep.subr.mxu0 0.0
        %1435 = vmatpush1.xpose.msra.mxu0 0.0
        %1436 = vmatprep.subr.mxu0 0.0
        %1437 = vmatpush1.xpose.msra.mxu0 0.0
        %1438 = vmatprep.subr.mxu0 0.0
        %1439 = vmatpush1.xpose.msra.mxu0 0.0
        %1440 = vmatprep.subr.mxu0 0.0
        %1441 = vmatpush1.xpose.msra.mxu0 0.0
        %1442 = vmatprep.subr.mxu0 0.0
        %1443 = vmatpush1.xpose.msra.mxu0 0.0
        %1444 = vmatprep.subr.mxu0 0.0
        %1445 = vmatpush1.xpose.msra.mxu0 0.0
        %1446 = vmatprep.subr.mxu0 0.0
        %1447 = vmatpush1.xpose.msra.mxu0 0.0
        %1448 = vmatprep.subr.mxu0 0.0
        %1449 = vmatpush1.xpose.msra.mxu0 0.0
        %1450 = vmatprep.subr.mxu0 0.0
        %1451 = vmatpush1.xpose.msra.mxu0 0.0
        %1452 = vmatprep.subr.mxu0 0.0
        %1453 = vmatpush1.xpose.msra.mxu0 0.0
        %1454 = vmatprep.subr.mxu0 0.0
        %1455 = vmatpush1.xpose.msra.mxu0 0.0
        %1456 = vmatprep.subr.mxu0 0.0
        %1457 = vmatpush1.xpose.msra.mxu0 0.0
        %1458 = vmatprep.subr.mxu0 0.0
        %1459 = vmatpush1.xpose.msra.mxu0 0.0
        %1460 = vmatprep.mubr.f32.mxu0 0.0
        %1461 = vmatmul.mubr.f32.gmra.mrb[0].mxu0 %v1388
        %v1462 = vpop.f32.mrb[0].mxu0
        %v1463 = vadd.f32 0.0, %v1462
        %v1464 = vpop.f32.mrb[0].mxu0
        %1465 = vdwg.mxu0
        %v1466 = vsel %vm1307, %v1384, -inf
        %1467 = vmax.xlane.f32.xlu0 %v1466
        %v1468 = vpop.xlane.xlu0 %1467
        %v1469 = vsel %vm1307, %v1463, -inf
        %1470 = vmax.xlane.f32.xlu0 %v1469
        %v1471 = vpop.xlane.xlu0 %1470
        %v1472 = vsub.f32 %v1384, %v1468
        %v1473 = vsub.f32 %v1463, %v1471
        %v1474 = vmul.f32 %v1472, 1.442695
        %v1475 = vpow.pop %v1474
        %v1476 = vmul.f32 %v1473, 1.442695
        %v1477 = vpow.pop %v1476
        %v1478 = vsel %vm1307, %v1475, 0.0
        %1479 = vadd.xlane.f32.xlu0 %v1478
        %v1480 = vpop.xlane.xlu0 %1479
        %v1481 = vsel %vm1307, %v1477, 0.0
        %1482 = vadd.xlane.f32.xlu0 %v1481
        %v1483 = vpop.xlane.xlu0 %1482
        %v1484 = vrcp.pop %v1480
        %v1485 = vrcp.pop %v1483
        %v1486 = vmul.f32 %v1475, %v1484
        %v1487 = vmul.f32 %v1477, %v1485
        %1488 = vst.msk [vmem:[%s435] sm:$0xff] %vm1307, %v1486
        %1489 = vst.msk [vmem:[%s435 + $0x8] sm:$0xff] %vm1307, %v1487
        %v1491 = vsel %vm1307, %v1486, 0
        %1493 = vmatprep.subr.mxu0 0.0
        %1494 = vmatpush1.msra.mxu0 %v1303
        %1495 = vmatprep.subr.mxu0 0.0
        %1496 = vmatpush1.msra.mxu0 %v1304
        %1497 = vmatprep.subr.mxu0 0.0
        %1498 = vmatpush1.msra.mxu0 0.0
        %1499 = vmatprep.subr.mxu0 0.0
        %1500 = vmatpush1.msra.mxu0 0.0
        %1501 = vmatprep.subr.mxu0 0.0
        %1502 = vmatpush1.msra.mxu0 0.0
        %1503 = vmatprep.subr.mxu0 0.0
        %1504 = vmatpush1.msra.mxu0 0.0
        %1505 = vmatprep.subr.mxu0 0.0
        %1506 = vmatpush1.msra.mxu0 0.0
        %1507 = vmatprep.subr.mxu0 0.0
        %1508 = vmatpush1.msra.mxu0 0.0
        %1509 = vmatprep.subr.mxu0 0.0
        %1510 = vmatpush1.msra.mxu0 0.0
        %1511 = vmatprep.subr.mxu0 0.0
        %1512 = vmatpush1.msra.mxu0 0.0
        %1513 = vmatprep.subr.mxu0 0.0
        %1514 = vmatpush1.msra.mxu0 0.0
        %1515 = vmatprep.subr.mxu0 0.0
        %1516 = vmatpush1.msra.mxu0 0.0
        %1517 = vmatprep.subr.mxu0 0.0
        %1518 = vmatpush1.msra.mxu0 0.0
        %1519 = vmatprep.subr.mxu0 0.0
        %1520 = vmatpush1.msra.mxu0 0.0
        %1521 = vmatprep.subr.mxu0 0.0
        %1522 = vmatpush1.msra.mxu0 0.0
        %1523 = vmatprep.subr.mxu0 0.0
        %1524 = vmatpush1.msra.mxu0 0.0
        %1525 = vmatprep.subr.mxu0 0.0
        %1526 = vmatpush1.msra.mxu0 0.0
        %1527 = vmatprep.subr.mxu0 0.0
        %1528 = vmatpush1.msra.mxu0 0.0
        %1529 = vmatprep.subr.mxu0 0.0
        %1530 = vmatpush1.msra.mxu0 0.0
        %1531 = vmatprep.subr.mxu0 0.0
        %1532 = vmatpush1.msra.mxu0 0.0
        %1533 = vmatprep.subr.mxu0 0.0
        %1534 = vmatpush1.msra.mxu0 0.0
        %1535 = vmatprep.subr.mxu0 0.0
        %1536 = vmatpush1.msra.mxu0 0.0
        %1537 = vmatprep.subr.mxu0 0.0
        %1538 = vmatpush1.msra.mxu0 0.0
        %1539 = vmatprep.subr.mxu0 0.0
        %1540 = vmatpush1.msra.mxu0 0.0
        %1541 = vmatprep.subr.mxu0 0.0
        %1542 = vmatpush1.msra.mxu0 0.0
        %1543 = vmatprep.subr.mxu0 0.0
        %1544 = vmatpush1.msra.mxu0 0.0
        %1545 = vmatprep.subr.mxu0 0.0
        %1546 = vmatpush1.msra.mxu0 0.0
        %1547 = vmatprep.subr.mxu0 0.0
        %1548 = vmatpush1.msra.mxu0 0.0
        %1549 = vmatprep.subr.mxu0 0.0
        %1550 = vmatpush1.msra.mxu0 0.0
        %1551 = vmatprep.subr.mxu0 0.0
        %1552 = vmatpush1.msra.mxu0 0.0
        %1553 = vmatprep.subr.mxu0 0.0
        %1554 = vmatpush1.msra.mxu0 0.0
        %1555 = vmatprep.subr.mxu0 0.0
        %1556 = vmatpush1.msra.mxu0 0.0
        %1557 = vmatprep.mubr.f32.mxu0 0.0
        %1558 = vmatmul.mubr.f32.gmra.mrb[0].mxu0 %v1491
        %v1559 = vpop.f32.mrb[0].mxu0
        %v1560 = vadd.f32 0.0, %v1559
        %v1561 = vpop.f32.mrb[0].mxu0
        %1562 = vdwg.mxu0
        %v1564 = vsel %vm1307, %v1487, 0
        %1566 = vmatprep.subr.mxu0 0.0
        %1567 = vmatpush1.msra.mxu0 %v1305
        %1568 = vmatprep.subr.mxu0 0.0
        %1569 = vmatpush1.msra.mxu0 %v1306
        %1570 = vmatprep.subr.mxu0 0.0
        %1571 = vmatpush1.msra.mxu0 0.0
        %1572 = vmatprep.subr.mxu0 0.0
        %1573 = vmatpush1.msra.mxu0 0.0
        %1574 = vmatprep.subr.mxu0 0.0
        %1575 = vmatpush1.msra.mxu0 0.0
        %1576 = vmatprep.subr.mxu0 0.0
        %1577 = vmatpush1.msra.mxu0 0.0
        %1578 = vmatprep.subr.mxu0 0.0
        %1579 = vmatpush1.msra.mxu0 0.0
        %1580 = vmatprep.subr.mxu0 0.0
        %1581 = vmatpush1.msra.mxu0 0.0
        %1582 = vmatprep.subr.mxu0 0.0
        %1583 = vmatpush1.msra.mxu0 0.0
        %1584 = vmatprep.subr.mxu0 0.0
        %1585 = vmatpush1.msra.mxu0 0.0
        %1586 = vmatprep.subr.mxu0 0.0
        %1587 = vmatpush1.msra.mxu0 0.0
        %1588 = vmatprep.subr.mxu0 0.0
        %1589 = vmatpush1.msra.mxu0 0.0
        %1590 = vmatprep.subr.mxu0 0.0
        %1591 = vmatpush1.msra.mxu0 0.0
        %1592 = vmatprep.subr.mxu0 0.0
        %1593 = vmatpush1.msra.mxu0 0.0
        %1594 = vmatprep.subr.mxu0 0.0
        %1595 = vmatpush1.msra.mxu0 0.0
        %1596 = vmatprep.subr.mxu0 0.0
        %1597 = vmatpush1.msra.mxu0 0.0
        %1598 = vmatprep.subr.mxu0 0.0
        %1599 = vmatpush1.msra.mxu0 0.0
        %1600 = vmatprep.subr.mxu0 0.0
        %1601 = vmatpush1.msra.mxu0 0.0
        %1602 = vmatprep.subr.mxu0 0.0
        %1603 = vmatpush1.msra.mxu0 0.0
        %1604 = vmatprep.subr.mxu0 0.0
        %1605 = vmatpush1.msra.mxu0 0.0
        %1606 = vmatprep.subr.mxu0 0.0
        %1607 = vmatpush1.msra.mxu0 0.0
        %1608 = vmatprep.subr.mxu0 0.0
        %1609 = vmatpush1.msra.mxu0 0.0
        %1610 = vmatprep.subr.mxu0 0.0
        %1611 = vmatpush1.msra.mxu0 0.0
        %1612 = vmatprep.subr.mxu0 0.0
        %1613 = vmatpush1.msra.mxu0 0.0
        %1614 = vmatprep.subr.mxu0 0.0
        %1615 = vmatpush1.msra.mxu0 0.0
        %1616 = vmatprep.subr.mxu0 0.0
        %1617 = vmatpush1.msra.mxu0 0.0
        %1618 = vmatprep.subr.mxu0 0.0
        %1619 = vmatpush1.msra.mxu0 0.0
        %1620 = vmatprep.subr.mxu0 0.0
        %1621 = vmatpush1.msra.mxu0 0.0
        %1622 = vmatprep.subr.mxu0 0.0
        %1623 = vmatpush1.msra.mxu0 0.0
        %1624 = vmatprep.subr.mxu0 0.0
        %1625 = vmatpush1.msra.mxu0 0.0
        %1626 = vmatprep.subr.mxu0 0.0
        %1627 = vmatpush1.msra.mxu0 0.0
        %1628 = vmatprep.subr.mxu0 0.0
        %1629 = vmatpush1.msra.mxu0 0.0
        %1630 = vmatprep.mubr.f32.mxu0 0.0
        %1631 = vmatmul.mubr.f32.gmra.mrb[0].mxu0 %v1564
        %v1632 = vpop.f32.mrb[0].mxu0
        %v1633 = vadd.f32 0.0, %v1632
        %v1634 = vpop.f32.mrb[0].mxu0
        %1635 = vdwg.mxu0
        %v1636 = vld [vmem:[#allocation9] sm:$0xff]
        %v1637 = vld [vmem:[#allocation9 + $0x8] sm:$0xff]
        %v1638 = vld [vmem:[#allocation9 + $0x10] sm:$0xff]
        %v1639 = vld [vmem:[#allocation9 + $0x18] sm:$0xff]
        %v1641 = vsel %vm1307, %v1560, 0
        %1643 = vmatprep.subr.mxu0 0.0
        %1644 = vmatpush1.msra.mxu0 %v1636
        %1645 = vmatprep.subr.mxu0 0.0
        %1646 = vmatpush1.msra.mxu0 %v1637
        %1647 = vmatprep.subr.mxu0 0.0
        %1648 = vmatpush1.msra.mxu0 0.0
        %1649 = vmatprep.subr.mxu0 0.0
        %1650 = vmatpush1.msra.mxu0 0.0
        %1651 = vmatprep.subr.mxu0 0.0
        %1652 = vmatpush1.msra.mxu0 0.0
        %1653 = vmatprep.subr.mxu0 0.0
        %1654 = vmatpush1.msra.mxu0 0.0
        %1655 = vmatprep.subr.mxu0 0.0
        %1656 = vmatpush1.msra.mxu0 0.0
        %1657 = vmatprep.subr.mxu0 0.0
        %1658 = vmatpush1.msra.mxu0 0.0
        %1659 = vmatprep.subr.mxu0 0.0
        %1660 = vmatpush1.msra.mxu0 0.0
        %1661 = vmatprep.subr.mxu0 0.0
        %1662 = vmatpush1.msra.mxu0 0.0
        %1663 = vmatprep.subr.mxu0 0.0
        %1664 = vmatpush1.msra.mxu0 0.0
        %1665 = vmatprep.subr.mxu0 0.0
        %1666 = vmatpush1.msra.mxu0 0.0
        %1667 = vmatprep.subr.mxu0 0.0
        %1668 = vmatpush1.msra.mxu0 0.0
        %1669 = vmatprep.subr.mxu0 0.0
        %1670 = vmatpush1.msra.mxu0 0.0
        %1671 = vmatprep.subr.mxu0 0.0
        %1672 = vmatpush1.msra.mxu0 0.0
        %1673 = vmatprep.subr.mxu0 0.0
        %1674 = vmatpush1.msra.mxu0 0.0
        %1675 = vmatprep.subr.mxu0 0.0
        %1676 = vmatpush1.msra.mxu0 0.0
        %1677 = vmatprep.subr.mxu0 0.0
        %1678 = vmatpush1.msra.mxu0 0.0
        %1679 = vmatprep.subr.mxu0 0.0
        %1680 = vmatpush1.msra.mxu0 0.0
        %1681 = vmatprep.subr.mxu0 0.0
        %1682 = vmatpush1.msra.mxu0 0.0
        %1683 = vmatprep.subr.mxu0 0.0
        %1684 = vmatpush1.msra.mxu0 0.0
        %1685 = vmatprep.subr.mxu0 0.0
        %1686 = vmatpush1.msra.mxu0 0.0
        %1687 = vmatprep.subr.mxu0 0.0
        %1688 = vmatpush1.msra.mxu0 0.0
        %1689 = vmatprep.subr.mxu0 0.0
        %1690 = vmatpush1.msra.mxu0 0.0
        %1691 = vmatprep.subr.mxu0 0.0
        %1692 = vmatpush1.msra.mxu0 0.0
        %1693 = vmatprep.subr.mxu0 0.0
        %1694 = vmatpush1.msra.mxu0 0.0
        %1695 = vmatprep.subr.mxu0 0.0
        %1696 = vmatpush1.msra.mxu0 0.0
        %1697 = vmatprep.subr.mxu0 0.0
        %1698 = vmatpush1.msra.mxu0 0.0
        %1699 = vmatprep.subr.mxu0 0.0
        %1700 = vmatpush1.msra.mxu0 0.0
        %1701 = vmatprep.subr.mxu0 0.0
        %1702 = vmatpush1.msra.mxu0 0.0
        %1703 = vmatprep.subr.mxu0 0.0
        %1704 = vmatpush1.msra.mxu0 0.0
        %1705 = vmatprep.subr.mxu0 0.0
        %1706 = vmatpush1.msra.mxu0 0.0
        %1707 = vmatprep.mubr.f32.mxu0 0.0
        %1708 = vmatmul.mubr.f32.gmra.mrb[0].mxu0 %v1641
        %v1709 = vpop.f32.mrb[0].mxu0
        %v1710 = vadd.f32 0.0, %v1709
        %v1711 = vpop.f32.mrb[0].mxu0
        %1712 = vdwg.mxu0
        %v1714 = vsel %vm1307, %v1633, 0
        %1716 = vmatprep.subr.mxu0 0.0
        %1717 = vmatpush1.msra.mxu0 %v1638
        %1718 = vmatprep.subr.mxu0 0.0
        %1719 = vmatpush1.msra.mxu0 %v1639
        %1720 = vmatprep.subr.mxu0 0.0
        %1721 = vmatpush1.msra.mxu0 0.0
        %1722 = vmatprep.subr.mxu0 0.0
        %1723 = vmatpush1.msra.mxu0 0.0
        %1724 = vmatprep.subr.mxu0 0.0
        %1725 = vmatpush1.msra.mxu0 0.0
        %1726 = vmatprep.subr.mxu0 0.0
        %1727 = vmatpush1.msra.mxu0 0.0
        %1728 = vmatprep.subr.mxu0 0.0
        %1729 = vmatpush1.msra.mxu0 0.0
        %1730 = vmatprep.subr.mxu0 0.0
        %1731 = vmatpush1.msra.mxu0 0.0
        %1732 = vmatprep.subr.mxu0 0.0
        %1733 = vmatpush1.msra.mxu0 0.0
        %1734 = vmatprep.subr.mxu0 0.0
        %1735 = vmatpush1.msra.mxu0 0.0
        %1736 = vmatprep.subr.mxu0 0.0
        %1737 = vmatpush1.msra.mxu0 0.0
        %1738 = vmatprep.subr.mxu0 0.0
        %1739 = vmatpush1.msra.mxu0 0.0
        %1740 = vmatprep.subr.mxu0 0.0
        %1741 = vmatpush1.msra.mxu0 0.0
        %1742 = vmatprep.subr.mxu0 0.0
        %1743 = vmatpush1.msra.mxu0 0.0
        %1744 = vmatprep.subr.mxu0 0.0
        %1745 = vmatpush1.msra.mxu0 0.0
        %1746 = vmatprep.subr.mxu0 0.0
        %1747 = vmatpush1.msra.mxu0 0.0
        %1748 = vmatprep.subr.mxu0 0.0
        %1749 = vmatpush1.msra.mxu0 0.0
        %1750 = vmatprep.subr.mxu0 0.0
        %1751 = vmatpush1.msra.mxu0 0.0
        %1752 = vmatprep.subr.mxu0 0.0
        %1753 = vmatpush1.msra.mxu0 0.0
        %1754 = vmatprep.subr.mxu0 0.0
        %1755 = vmatpush1.msra.mxu0 0.0
        %1756 = vmatprep.subr.mxu0 0.0
        %1757 = vmatpush1.msra.mxu0 0.0
        %1758 = vmatprep.subr.mxu0 0.0
        %1759 = vmatpush1.msra.mxu0 0.0
        %1760 = vmatprep.subr.mxu0 0.0
        %1761 = vmatpush1.msra.mxu0 0.0
        %1762 = vmatprep.subr.mxu0 0.0
        %1763 = vmatpush1.msra.mxu0 0.0
        %1764 = vmatprep.subr.mxu0 0.0
        %1765 = vmatpush1.msra.mxu0 0.0
        %1766 = vmatprep.subr.mxu0 0.0
        %1767 = vmatpush1.msra.mxu0 0.0
        %1768 = vmatprep.subr.mxu0 0.0
        %1769 = vmatpush1.msra.mxu0 0.0
        %1770 = vmatprep.subr.mxu0 0.0
        %1771 = vmatpush1.msra.mxu0 0.0
        %1772 = vmatprep.subr.mxu0 0.0
        %1773 = vmatpush1.msra.mxu0 0.0
        %1774 = vmatprep.subr.mxu0 0.0
        %1775 = vmatpush1.msra.mxu0 0.0
        %1776 = vmatprep.subr.mxu0 0.0
        %1777 = vmatpush1.msra.mxu0 0.0
        %1778 = vmatprep.subr.mxu0 0.0
        %1779 = vmatpush1.msra.mxu0 0.0
        %1780 = vmatprep.mubr.f32.mxu0 0.0
        %1781 = vmatmul.mubr.f32.gmra.mrb[0].mxu0 %v1714
        %v1782 = vpop.f32.mrb[0].mxu0
        %v1783 = vadd.f32 0.0, %v1782
        %v1784 = vpop.f32.mrb[0].mxu0
        %1785 = vdwg.mxu0
        %v1786 = vsel %vm1072, %v1710, 0.0
        %v1787 = vsel %vm1072, %v1783, 0.0
        %v1788 = vadd.f32 %v1786, %v1787
        %v1789 = vadd.f32 %v1788, 0.0
        %v1790 = vld [vmem:[#allocation10] sm:$0x1]
        %v1792 = vlaneseq
        %v1793 = vshrl.u32 %v1792, 7
        %v1794 = vsub.s32 0, %v1793
        %v1795 = vrot.slane %v1790, %v1794
        %v1797 = vadd.f32 %v1789, %v1795
        %v1798 = vadd.f32 %v1071, %v1797
        %1799 = vst.msk [vmem:[%s428] sm:$0xff] %vm1072, %v1798
        %s1800 = sand.u32 %s234, 1
        %s1801 = scalar_lea.sflag [#allocation6], %s1800
        %s1802 = sand.u32 %s234, 1
        %s1803 = smul.addr %s1802, 8
        %s1804 = scalar_lea.vmem [#allocation12], %s1803
        %s1805 = sand.u32 %s262, 1
        %s1806 = scalar_lea.sflag [#allocation14], %s1805
        %s1807 = sand.u32 %s262, 1
        %s1808 = smul.addr %s1807, 16
        %s1809 = scalar_lea.vmem [#allocation13], %s1808
        // Predicated region
        $region73: #{tpu_custom_call.1} parent=51 // pred_check
          %p1810 = pneg %p244
        $region74: #{tpu_custom_call.1} parent=51 // pred_check_branch
          %1812 = sbr.rel (%p1810) target = $region76
        $region75: #{tpu_custom_call.1} parent=51 // pred_region
          %s1814 = ssub.s32 128, 128
          %1815 = vsyncadd %s1801, %s1814
          %s1816 = smul.addr %s36, 2
          %s1817 = sadd.s32 %s37, %s1816
          %s1818 = smul.addr %s1817, 128
          %s1819 = scalar_lea.hbm %s8, %s1818
          %s1821 = sshll.u32 %s1804, 4
          %s1822 = int_to_ptr.vmem [resolvable:$true] %s1821
          %1824 = dma.vmem_to_hbm [thread:$0]  %s1822, 128, %s1819, %s1801
        $region76: #{tpu_custom_call.1} parent=51 // pred_fallthru
          _
        // Predicated region
        $region77: #{tpu_custom_call.1} parent=51 // pred_check
          %p1825 = pneg %p272
        $region78: #{tpu_custom_call.1} parent=51 // pred_check_branch
          %1827 = sbr.rel (%p1825) target = $region80
        $region79: #{tpu_custom_call.1} parent=51 // pred_region
          %s1829 = ssub.s32 256, 256
          %1830 = vsyncadd %s1806, %s1829
          %s1831 = smul.addr %s36, 4
          %s1832 = sadd.s32 %s37, %s1831
          %s1833 = smul.addr %s1832, 128
          %s1834 = scalar_lea.hbm %s9, %s1833
          %s1835 = sshll.u32 %s1809, 4
          %s1836 = int_to_ptr.vmem [resolvable:$true] %s1835
          %1841 = dma.vmem_to_hbm [thread:$0]  %s1836, 256, %s1834, %s1806, 128, 256, 8
        $region80: #{tpu_custom_call.1} parent=51 // pred_fallthru
          _
      $region52: #{tpu_custom_call.1} parent=5 // pred_fallthru
        _
      %p1842 = scmp.le.s32.totalorder 2, %s27
      // Predicated region
      $region81: #{tpu_custom_call.1} parent=5 // pred_check
        %p1843 = pneg %p1842
      $region82: #{tpu_custom_call.1} parent=5 // pred_check_branch
        %1845 = sbr.rel (%p1843) target = $region84
      $region83: #{tpu_custom_call.1} parent=5 // pred_region
        %s1846 = ssub.s32 %s27, 2
        // Predicated region
        $region85: #{tpu_custom_call.1} parent=83 // pred_check
          %p1847 = pneg %p250
        $region86: #{tpu_custom_call.1} parent=83 // pred_check_branch
          %1849 = sbr.rel (%p1847) target = $region88
        $region87: #{tpu_custom_call.1} parent=83 // pred_region
          %s1850 = sand.u32 %s235, 1
          %s1851 = scalar_lea.sflag [#allocation6], %s1850
          %s1852 = sand.u32 %s235, 1
          %s1853 = smul.addr %s1852, 8
          %s1854 = scalar_lea.vmem [#allocation12], %s1853
          %1855 = dma.done %s1851, 128
        $region88: #{tpu_custom_call.1} parent=83 // pred_fallthru
          _
        // Predicated region
        $region89: #{tpu_custom_call.1} parent=83 // pred_check
          %p1856 = pneg %p278
        $region90: #{tpu_custom_call.1} parent=83 // pred_check_branch
          %1858 = sbr.rel (%p1856) target = $region92
        $region91: #{tpu_custom_call.1} parent=83 // pred_region
          %s1859 = sand.u32 %s263, 1
          %s1860 = scalar_lea.sflag [#allocation14], %s1859
          %s1861 = sand.u32 %s263, 1
          %s1862 = smul.addr %s1861, 16
          %s1863 = scalar_lea.vmem [#allocation13], %s1862
          %1864 = dma.done %s1860, 256
        $region92: #{tpu_custom_call.1} parent=83 // pred_fallthru
          _
      $region84: #{tpu_custom_call.1} parent=5 // pred_fallthru
        _
    $region6: #{tpu_custom_call.1} parent=1 // loop_footer
      %s31 = sadd.s32 1, %s27
    $region7: #{tpu_custom_call.1} parent=1 // loop_footer_branch
      %26 = sbr.rel target = $region3
    $region8: #{tpu_custom_call.1} parent=1 // loop_exit
      _
    %1865 = vsyncpa [#allocation5], 1
    %s1866 = scalar_lea.sflag [#allocation5], 1
    %1867 = vsyncpa %s1866, 1
    %1868 = vsyncpa [#allocation8], 1
    %1869 = vsyncpa [#allocation11], 1
    %1870 = vsyncpa [#allocation6], 1
    %s1871 = scalar_lea.sflag [#allocation6], 1
    %1872 = vsyncpa %s1871, 1
    %1873 = vsyncpa [#allocation14], 1
    %s1874 = scalar_lea.sflag [#allocation14], 1
    %1875 = vsyncpa %s1874, 1

// kernel: tpu_custom_call.1
$region0: #{tpu_custom_call.1}
  #allocation0 [shape = 'u32[]', space=smem, size = 0x4, offset = 0x4, fixed_abs, tag = 'smem constant byte address 0x4 - core index']
  #allocation1 [shape = 'u32[144,128]{1,0:T(1,128)}', space=vmem, size = 0x12000, scoped, tag = 'internal scratch']
  #allocation2 [shape = 'f32[2,16,16]{2,1,0:T(8,128)}', space=vmem, size = 0x4000, scoped, tag = 'scratch operand']
  #allocation3 [shape = 'f32[2,16,16]{2,1,0:T(8,128)}', space=vmem, size = 0x4000, scoped, tag = 'scratch operand']
  %s0 = inlined_call_operand.vmem [shape: f32[2,16,32], index: 0, kind: input, shape index: {}]
  %s1 = inlined_call_operand.hbm [shape: f32[2,16,32], index: 1, kind: input, shape index: {}, may-alias: {1,8}]
  %s2 = inlined_call_operand.vmem [shape: f32[1,32], index: 2, kind: input, shape index: {}]
  %s3 = inlined_call_operand.vmem [shape: f32[1,32], index: 3, kind: input, shape index: {}]
  %s4 = inlined_call_operand.vmem [shape: f32[32,32], index: 4, kind: input, shape index: {}]
  %s5 = inlined_call_operand.hbm [shape: f32[32,64], index: 5, kind: input, shape index: {}]
  %s6 = inlined_call_operand.hbm [shape: f32[2,16,32], index: 6, kind: input, shape index: {}]
  %s7 = inlined_call_operand.hbm [shape: f32[1,32], index: 7, kind: input, shape index: {}]
  %s8 = inlined_call_operand.hbm [shape: f32[2,16,32], index: 8, kind: output, shape index: {0}, may-alias: {1,8}]
  %s9 = inlined_call_operand.hbm [shape: f32[2,2,16,16], index: 9, kind: output, shape index: {1}]
  %10 = xla_tuple %s8, %s9
  %s11 = sld [smem:[#allocation0]]
  $region93: #{tpu_custom_call.1} parent=0
    _
  %s13 = ssub.s32 1, %s11
  %s14 = scalar_select 0, %s13, %s11
  $region1: #{tpu_custom_call.1} parent=0
    #allocation4 [shape = 'u8[8192]{0}', space=vmem, size = 0x2000, scoped, tag = 'input window, operand 1']
    #allocation5 [shape = 's32[2]{0}', space=sflag, size = 0x8, scoped, tag = 'scoped memory for tpu_custom_call.1']
    #allocation6 [shape = 's32[2]{0}', space=sflag, size = 0x8, scoped, tag = 'scoped memory for tpu_custom_call.1']
    #allocation7 [shape = 'u8[16384]{0}', space=vmem, size = 0x4000, scoped, tag = 'input window, operand 5, single buffered']
    #allocation8 [shape = 's32[1]{0}', space=sflag, size = 0x4, scoped, tag = 'scoped memory for tpu_custom_call.1']
    #allocation9 [shape = 'u8[16384]{0}', space=vmem, size = 0x4000, scoped, tag = 'input window, operand 6, single buffered']
    #allocation10 [shape = 'u8[512]{0}', space=vmem, size = 0x400, scoped, tag = 'input window, operand 7, single buffered']
    #allocation11 [shape = 's32[1]{0}', space=sflag, size = 0x4, scoped, tag = 'scoped memory for tpu_custom_call.1']
    #allocation12 [shape = 'u8[8192]{0}', space=vmem, size = 0x2000, scoped, tag = 'output window, operand 0']
    #allocation13 [shape = 'u8[16384]{0}', space=vmem, size = 0x4000, scoped, tag = 'output window, operand 1']
    #allocation14 [shape = 's32[2]{0}', space=sflag, size = 0x8, scoped, tag = 'scoped memory for tpu_custom_call.1']
    %15 = vsyncpa [#allocation5], 0
    %s16 = scalar_lea.sflag [#allocation5], 1
    %17 = vsyncpa %s16, 0
    %18 = vsyncpa [#allocation8], 0
    %19 = vsyncpa [#allocation11], 0
    %20 = vsyncpa [#allocation6], 0
    %s21 = scalar_lea.sflag [#allocation6], 1
    %22 = vsyncpa %s21, 0
    %23 = vsyncpa [#allocation14], 0
    %s24 = scalar_lea.sflag [#allocation14], 1
    %25 = vsyncpa %s24, 0
    loop: start=0, step=1, limit=6
    $region2: #{tpu_custom_call.1} parent=1 // loop_pre_header
      _
    $region3: #{tpu_custom_call.1} parent=1 // loop_header
      %s27 = sphi 0, %s31
      %p28 = scmp.ge.s32.totalorder %s27, 6
      %s34 = sphi 0, %s46
      %s35 = sphi 0, %s42
      %s36 = sphi 0, %s34
      %s37 = sphi 0, %s35
      %s38 = sphi 0, %s36
      %s39 = sphi 0, %s37
      %s49 = sphi 0, %s51
      %s52 = sphi 0, %s49
      %s53 = sphi 0, %s52
      %s69 = sphi 0, %s53
      %s77 = sphi 0, %s79
      %s80 = sphi 0, %s77
      %s81 = sphi 0, %s80
      %s97 = sphi 0, %s81
      %s101 = sphi 0, %s101
      %s103 = sphi 0, %s101
      %s104 = sphi 0, %s103
      %s118 = sphi 0, %s104
      %s122 = sphi 0, %s122
      %s124 = sphi 0, %s122
      %s125 = sphi 0, %s124
      %s139 = sphi 0, %s125
      %s143 = sphi 0, %s143
      %s145 = sphi 0, %s143
      %s146 = sphi 0, %s145
      %s160 = sphi 0, %s146
      %s164 = sphi 0, %s164
      %s166 = sphi 0, %s164
      %s167 = sphi 0, %s166
      %s181 = sphi 0, %s167
      %s185 = sphi 0, %s185
      %s187 = sphi 0, %s185
      %s188 = sphi 0, %s187
      %s202 = sphi 0, %s188
      %s206 = sphi 0, %s206
      %s208 = sphi 0, %s206
      %s209 = sphi 0, %s208
      %s223 = sphi 0, %s209
      %s231 = sphi 0, %s233
      %s234 = sphi 0, %s231
      %s235 = sphi 0, %s234
      %s251 = sphi 0, %s235
      %s259 = sphi 0, %s261
      %s262 = sphi 0, %s259
      %s263 = sphi 0, %s262
      %s279 = sphi 0, %s263
    $region4: #{tpu_custom_call.1} parent=1 // loop_header_branch
      %30 = sbr.rel (%p28) target = $region8
    $region5: #{tpu_custom_call.1} parent=1 // loop_body
      %s32 = ssub.s32 %s27, 1
      %s33 = ssub.s32 %s27, 2
      %s40 = sadd.s32 1, %s35
      %p41 = scmp.ge.s32.totalorder %s40, 2
      %s42 = scalar_select %p41, 0, %s40
      %s43 = sadd.s32 1, %s34
      %s44 = scalar_select %p41, %s43, %s34
      %p45 = scmp.ge.s32.totalorder %s44, 2
      %s46 = scalar_select %p45, 0, %s44
      %s47 = ssub.s32 %s34, %s46
      %p48 = scmp.eq.s32.totalorder %s47, 0
      %s50 = sadd.s32 %s49, 1
      %s51 = scalar_select %p48, %s49, %s50
      %p54 = pneg %p48
      %p55 = scmp.eq.s32.totalorder %s27, 3
      %p56 = por %p54, %p55
      %p57 = scmp.ne.s32.totalorder %s49, %s52
      %p58 = scmp.eq.s32.totalorder %s27, 0
      %p59 = por %p57, %p58
      %p60 = scmp.ne.s32.totalorder %s49, %s52
      %p61 = scmp.eq.s32.totalorder %s32, 3
      %p62 = por %p60, %p61
      %p63 = scmp.ne.s32.totalorder %s52, %s53
      %p64 = scmp.eq.s32.totalorder %s32, 0
      %p65 = por %p63, %p64
      %p66 = scmp.ne.s32.totalorder %s52, %s53
      %p67 = scmp.eq.s32.totalorder %s33, 3
      %p68 = por %p66, %p67
      %p70 = scmp.ne.s32.totalorder %s53, %s69
      %p71 = scmp.eq.s32.totalorder %s33, 0
      %p72 = por %p70, %p71
      %s73 = ssub.s32 %s34, %s46
      %s74 = ssub.s32 %s35, %s42
      %s75 = sor.u32 %s73, %s74
      %p76 = scmp.eq.s32.totalorder %s75, 0
      %s78 = sadd.s32 %s77, 1
      %s79 = scalar_select %p76, %s77, %s78
      %p82 = pneg %p76
      %p83 = scmp.eq.s32.totalorder %s27, 3
      %p84 = por %p82, %p83
      %p85 = scmp.ne.s32.totalorder %s77, %s80
      %p86 = scmp.eq.s32.totalorder %s27, 0
      %p87 = por %p85, %p86
      %p88 = scmp.ne.s32.totalorder %s77, %s80
      %p89 = scmp.eq.s32.totalorder %s32, 3
      %p90 = por %p88, %p89
      %p91 = scmp.ne.s32.totalorder %s80, %s81
      %p92 = scmp.eq.s32.totalorder %s32, 0
      %p93 = por %p91, %p92
      %p94 = scmp.ne.s32.totalorder %s80, %s81
      %p95 = scmp.eq.s32.totalorder %s33, 3
      %p96 = por %p94, %p95
      %p98 = scmp.ne.s32.totalorder %s81, %s97
      %p99 = scmp.eq.s32.totalorder %s33, 0
      %p100 = por %p98, %p99
      %s102 = sadd.s32 %s101, 1
      %p105 = scmp.eq.s32.totalorder %s27, 3
      %p106 = scmp.ne.s32.totalorder %s101, %s103
      %p107 = scmp.eq.s32.totalorder %s27, 0
      %p108 = por %p106, %p107
      %p109 = scmp.ne.s32.totalorder %s101, %s103
      %p110 = scmp.eq.s32.totalorder %s32, 3
      %p111 = por %p109, %p110
      %p112 = scmp.ne.s32.totalorder %s103, %s104
      %p113 = scmp.eq.s32.totalorder %s32, 0
      %p114 = por %p112, %p113
      %p115 = scmp.ne.s32.totalorder %s103, %s104
      %p116 = scmp.eq.s32.totalorder %s33, 3
      %p117 = por %p115, %p116
      %p119 = scmp.ne.s32.totalorder %s104, %s118
      %p120 = scmp.eq.s32.totalorder %s33, 0
      %p121 = por %p119, %p120
      %s123 = sadd.s32 %s122, 1
      %p126 = scmp.eq.s32.totalorder %s27, 3
      %p127 = scmp.ne.s32.totalorder %s122, %s124
      %p128 = scmp.eq.s32.totalorder %s27, 0
      %p129 = por %p127, %p128
      %p130 = scmp.ne.s32.totalorder %s122, %s124
      %p131 = scmp.eq.s32.totalorder %s32, 3
      %p132 = por %p130, %p131
      %p133 = scmp.ne.s32.totalorder %s124, %s125
      %p134 = scmp.eq.s32.totalorder %s32, 0
      %p135 = por %p133, %p134
      %p136 = scmp.ne.s32.totalorder %s124, %s125
      %p137 = scmp.eq.s32.totalorder %s33, 3
      %p138 = por %p136, %p137
      %p140 = scmp.ne.s32.totalorder %s125, %s139
      %p141 = scmp.eq.s32.totalorder %s33, 0
      %p142 = por %p140, %p141
      %s144 = sadd.s32 %s143, 1
      %p147 = scmp.eq.s32.totalorder %s27, 3
      %p148 = scmp.ne.s32.totalorder %s143, %s145
      %p149 = scmp.eq.s32.totalorder %s27, 0
      %p150 = por %p148, %p149
      %p151 = scmp.ne.s32.totalorder %s143, %s145
      %p152 = scmp.eq.s32.totalorder %s32, 3
      %p153 = por %p151, %p152
      %p154 = scmp.ne.s32.totalorder %s145, %s146
      %p155 = scmp.eq.s32.totalorder %s32, 0
      %p156 = por %p154, %p155
      %p157 = scmp.ne.s32.totalorder %s145, %s146
      %p158 = scmp.eq.s32.totalorder %s33, 3
      %p159 = por %p157, %p158
      %p161 = scmp.ne.s32.totalorder %s146, %s160
      %p162 = scmp.eq.s32.totalorder %s33, 0
      %p163 = por %p161, %p162
      %s165 = sadd.s32 %s164, 1
      %p168 = scmp.eq.s32.totalorder %s27, 3
      %p169 = scmp.ne.s32.totalorder %s164, %s166
      %p170 = scmp.eq.s32.totalorder %s27, 0
      %p171 = por %p169, %p170
      %p172 = scmp.ne.s32.totalorder %s164, %s166
      %p173 = scmp.eq.s32.totalorder %s32, 3
      %p174 = por %p172, %p173
      %p175 = scmp.ne.s32.totalorder %s166, %s167
      %p176 = scmp.eq.s32.totalorder %s32, 0
      %p177 = por %p175, %p176
      %p178 = scmp.ne.s32.totalorder %s166, %s167
      %p179 = scmp.eq.s32.totalorder %s33, 3
      %p180 = por %p178, %p179
      %p182 = scmp.ne.s32.totalorder %s167, %s181
      %p183 = scmp.eq.s32.totalorder %s33, 0
      %p184 = por %p182, %p183
      %s186 = sadd.s32 %s185, 1
      %p189 = scmp.eq.s32.totalorder %s27, 3
      %p190 = scmp.ne.s32.totalorder %s185, %s187
      %p191 = scmp.eq.s32.totalorder %s27, 0
      %p192 = por %p190, %p191
      %p193 = scmp.ne.s32.totalorder %s185, %s187
      %p194 = scmp.eq.s32.totalorder %s32, 3
      %p195 = por %p193, %p194
      %p196 = scmp.ne.s32.totalorder %s187, %s188
      %p197 = scmp.eq.s32.totalorder %s32, 0
      %p198 = por %p196, %p197
      %p199 = scmp.ne.s32.totalorder %s187, %s188
      %p200 = scmp.eq.s32.totalorder %s33, 3
      %p201 = por %p199, %p200
      %p203 = scmp.ne.s32.totalorder %s188, %s202
      %p204 = scmp.eq.s32.totalorder %s33, 0
      %p205 = por %p203, %p204
      %s207 = sadd.s32 %s206, 1
      %p210 = scmp.eq.s32.totalorder %s27, 3
      %p211 = scmp.ne.s32.totalorder %s206, %s208
      %p212 = scmp.eq.s32.totalorder %s27, 0
      %p213 = por %p211, %p212
      %p214 = scmp.ne.s32.totalorder %s206, %s208
      %p215 = scmp.eq.s32.totalorder %s32, 3
      %p216 = por %p214, %p215
      %p217 = scmp.ne.s32.totalorder %s208, %s209
      %p218 = scmp.eq.s32.totalorder %s32, 0
      %p219 = por %p217, %p218
      %p220 = scmp.ne.s32.totalorder %s208, %s209
      %p221 = scmp.eq.s32.totalorder %s33, 3
      %p222 = por %p220, %p221
      %p224 = scmp.ne.s32.totalorder %s209, %s223
      %p225 = scmp.eq.s32.totalorder %s33, 0
      %p226 = por %p224, %p225
      %s227 = ssub.s32 %s34, %s46
      %s228 = ssub.s32 %s35, %s42
      %s229 = sor.u32 %s227, %s228
      %p230 = scmp.eq.s32.totalorder %s229, 0
      %s232 = sadd.s32 %s231, 1
      %s233 = scalar_select %p230, %s231, %s232
      %p236 = pneg %p230
      %p237 = scmp.eq.s32.totalorder %s27, 3
      %p238 = por %p236, %p237
      %p239 = scmp.ne.s32.totalorder %s231, %s234
      %p240 = scmp.eq.s32.totalorder %s27, 0
      %p241 = por %p239, %p240
      %p242 = scmp.ne.s32.totalorder %s231, %s234
      %p243 = scmp.eq.s32.totalorder %s32, 3
      %p244 = por %p242, %p243
      %p245 = scmp.ne.s32.totalorder %s234, %s235
      %p246 = scmp.eq.s32.totalorder %s32, 0
      %p247 = por %p245, %p246
      %p248 = scmp.ne.s32.totalorder %s234, %s235
      %p249 = scmp.eq.s32.totalorder %s33, 3
      %p250 = por %p248, %p249
      %p252 = scmp.ne.s32.totalorder %s235, %s251
      %p253 = scmp.eq.s32.totalorder %s33, 0
      %p254 = por %p252, %p253
      %s255 = ssub.s32 %s34, %s46
      %s256 = ssub.s32 %s35, %s42
      %s257 = sor.u32 %s255, %s256
      %p258 = scmp.eq.s32.totalorder %s257, 0
      %s260 = sadd.s32 %s259, 1
      %s261 = scalar_select %p258, %s259, %s260
      %p264 = pneg %p258
      %p265 = scmp.eq.s32.totalorder %s27, 3
      %p266 = por %p264, %p265
      %p267 = scmp.ne.s32.totalorder %s259, %s262
      %p268 = scmp.eq.s32.totalorder %s27, 0
      %p269 = por %p267, %p268
      %p270 = scmp.ne.s32.totalorder %s259, %s262
      %p271 = scmp.eq.s32.totalorder %s32, 3
      %p272 = por %p270, %p271
      %p273 = scmp.ne.s32.totalorder %s262, %s263
      %p274 = scmp.eq.s32.totalorder %s32, 0
      %p275 = por %p273, %p274
      %p276 = scmp.ne.s32.totalorder %s262, %s263
      %p277 = scmp.eq.s32.totalorder %s33, 3
      %p278 = por %p276, %p277
      %p280 = scmp.ne.s32.totalorder %s263, %s279
      %p281 = scmp.eq.s32.totalorder %s33, 0
      %p282 = por %p280, %p281
      %p283 = scmp.le.s32.totalorder 1, %s27
      %p284 = scmp.lt.s32.totalorder %s27, 5
      %p285 = pnand %p283, %p284
      %p286 = pneg %p285
      // Predicated region
      $region9: #{tpu_custom_call.1} parent=5 // pred_check
        _
      $region10: #{tpu_custom_call.1} parent=5 // pred_check_branch
        %288 = sbr.rel (%p285) target = $region12
      $region11: #{tpu_custom_call.1} parent=5 // pred_region
        %s289 = ssub.s32 %s27, 1
        // Predicated region
        $region13: #{tpu_custom_call.1} parent=11 // pred_check
          %p290 = pneg %p114
        $region14: #{tpu_custom_call.1} parent=11 // pred_check_branch
          %292 = sbr.rel (%p290) target = $region16
        $region15: #{tpu_custom_call.1} parent=11 // pred_region
          _
        $region16: #{tpu_custom_call.1} parent=11 // pred_fallthru
          _
        // Predicated region
        $region17: #{tpu_custom_call.1} parent=11 // pred_check
          %p293 = pneg %p135
        $region18: #{tpu_custom_call.1} parent=11 // pred_check_branch
          %295 = sbr.rel (%p293) target = $region20
        $region19: #{tpu_custom_call.1} parent=11 // pred_region
          _
        $region20: #{tpu_custom_call.1} parent=11 // pred_fallthru
          _
        // Predicated region
        $region21: #{tpu_custom_call.1} parent=11 // pred_check
          %p296 = pneg %p156
        $region22: #{tpu_custom_call.1} parent=11 // pred_check_branch
          %298 = sbr.rel (%p296) target = $region24
        $region23: #{tpu_custom_call.1} parent=11 // pred_region
          _
        $region24: #{tpu_custom_call.1} parent=11 // pred_fallthru
          _
        // Predicated region
        $region25: #{tpu_custom_call.1} parent=11 // pred_check
          %p299 = pneg %p177
        $region26: #{tpu_custom_call.1} parent=11 // pred_check_branch
          %301 = sbr.rel (%p299) target = $region28
        $region27: #{tpu_custom_call.1} parent=11 // pred_region
          %s303 = ssub.s32 512, 512
          %304 = vsyncadd [#allocation8], %s303
          %s305 = sshll.u32 [#allocation7], 4
          %s306 = int_to_ptr.vmem [resolvable:$true] %s305
          %311 = dma.hbm_to_vmem [thread:$0]  %s5, 512, %s306, [#allocation8], 128, 128, 8
        $region28: #{tpu_custom_call.1} parent=11 // pred_fallthru
          _
        // Predicated region
        $region29: #{tpu_custom_call.1} parent=11 // pred_check
          %p312 = pneg %p198
        $region30: #{tpu_custom_call.1} parent=11 // pred_check_branch
          %314 = sbr.rel (%p312) target = $region32
        $region31: #{tpu_custom_call.1} parent=11 // pred_region
          %s316 = ssub.s32 512, 512
          %317 = vsyncadd [#allocation8], %s316
          %s318 = sshll.u32 [#allocation9], 4
          %s319 = int_to_ptr.vmem [resolvable:$true] %s318
          %324 = dma.hbm_to_vmem [thread:$0]  %s6, 512, %s319, [#allocation8], 128, 128, 8
        $region32: #{tpu_custom_call.1} parent=11 // pred_fallthru
          _
        // Predicated region
        $region33: #{tpu_custom_call.1} parent=11 // pred_check
          %p325 = pneg %p219
        $region34: #{tpu_custom_call.1} parent=11 // pred_check_branch
          %327 = sbr.rel (%p325) target = $region36
        $region35: #{tpu_custom_call.1} parent=11 // pred_region
          %s329 = ssub.s32 16, 16
          %330 = vsyncadd [#allocation11], %s329
          %s332 = sshll.u32 [#allocation10], 4
          %s333 = int_to_ptr.vmem [resolvable:$true] %s332
          %335 = dma.hbm_to_vmem [thread:$0]  %s7, 16, %s333, [#allocation11]
        $region36: #{tpu_custom_call.1} parent=11 // pred_fallthru
          _
      $region12: #{tpu_custom_call.1} parent=5 // pred_fallthru
        _
      %p336 = scmp.lt.s32.totalorder %s27, 4
      // Predicated region
      $region37: #{tpu_custom_call.1} parent=5 // pred_check
        %p337 = pneg %p336
      $region38: #{tpu_custom_call.1} parent=5 // pred_check_branch
        %339 = sbr.rel (%p337) target = $region40
      $region39: #{tpu_custom_call.1} parent=5 // pred_region
        // Predicated region
        $region41: #{tpu_custom_call.1} parent=39 // pred_check
          %p340 = pneg %p59
        $region42: #{tpu_custom_call.1} parent=39 // pred_check_branch
          %342 = sbr.rel (%p340) target = $region44
        $region43: #{tpu_custom_call.1} parent=39 // pred_region
          %p343 = scmp.lt.s32.totalorder %s34, 1
          %s344 = scalar_select %p343, %s34, 1
          %s345 = smul.addr %s344, 2
          %s346 = smul.addr %s345, 8
          %s347 = scalar_lea.vmem %s0, %s346
        $region44: #{tpu_custom_call.1} parent=39 // pred_fallthru
          _
        // Predicated region
        $region45: #{tpu_custom_call.1} parent=39 // pred_check
          %p348 = pneg %p87
        $region46: #{tpu_custom_call.1} parent=39 // pred_check_branch
          %350 = sbr.rel (%p348) target = $region48
        $region47: #{tpu_custom_call.1} parent=39 // pred_region
          %s351 = sand.u32 %s77, 1
          %s352 = scalar_lea.sflag [#allocation5], %s351
          %s353 = sand.u32 %s77, 1
          %s354 = smul.addr %s353, 8
          %s355 = scalar_lea.vmem [#allocation4], %s354
          %s357 = ssub.s32 128, 128
          %358 = vsyncadd %s352, %s357
          %s359 = smul.addr %s34, 2
          %s360 = sadd.s32 %s35, %s359
          %s361 = smul.addr %s360, 128
          %s362 = scalar_lea.hbm %s1, %s361
          %s364 = sshll.u32 %s355, 4
          %s365 = int_to_ptr.vmem [resolvable:$true] %s364
          %367 = dma.hbm_to_vmem [thread:$0]  %s362, 128, %s365, %s352
        $region48: #{tpu_custom_call.1} parent=39 // pred_fallthru
          _
      $region40: #{tpu_custom_call.1} parent=5 // pred_fallthru
        _
      %p368 = scmp.le.s32.totalorder 1, %s27
      %p369 = scmp.lt.s32.totalorder %s27, 5
      %p370 = pnand %p368, %p369
      %p371 = pneg %p370
      // Predicated region
      $region49: #{tpu_custom_call.1} parent=5 // pred_check
        _
      $region50: #{tpu_custom_call.1} parent=5 // pred_check_branch
        %373 = sbr.rel (%p370) target = $region52
      $region51: #{tpu_custom_call.1} parent=5 // pred_region
        %s374 = ssub.s32 %s27, 1
        %s375 = sand.u32 %s80, 1
        %s376 = scalar_lea.sflag [#allocation5], %s375
        %s377 = sand.u32 %s80, 1
        %s378 = smul.addr %s377, 8
        %s379 = scalar_lea.vmem [#allocation4], %s378
        // Predicated region
        $region53: #{tpu_custom_call.1} parent=51 // pred_check
          %p380 = pneg %p93
        $region54: #{tpu_custom_call.1} parent=51 // pred_check_branch
          %382 = sbr.rel (%p380) target = $region56
        $region55: #{tpu_custom_call.1} parent=51 // pred_region
          %383 = dma.done %s376, 128
        $region56: #{tpu_custom_call.1} parent=51 // pred_fallthru
          _
        // Predicated region
        $region57: #{tpu_custom_call.1} parent=51 // pred_check
          %p384 = pneg %p177
        $region58: #{tpu_custom_call.1} parent=51 // pred_check_branch
          %386 = sbr.rel (%p384) target = $region60
        $region59: #{tpu_custom_call.1} parent=51 // pred_region
          %387 = dma.done [#allocation8], 512
        $region60: #{tpu_custom_call.1} parent=51 // pred_fallthru
          _
        // Predicated region
        $region61: #{tpu_custom_call.1} parent=51 // pred_check
          %p388 = pneg %p198
        $region62: #{tpu_custom_call.1} parent=51 // pred_check_branch
          %390 = sbr.rel (%p388) target = $region64
        $region63: #{tpu_custom_call.1} parent=51 // pred_region
          %391 = dma.done [#allocation8], 512
        $region64: #{tpu_custom_call.1} parent=51 // pred_fallthru
          _
        // Predicated region
        $region65: #{tpu_custom_call.1} parent=51 // pred_check
          %p392 = pneg %p219
        $region66: #{tpu_custom_call.1} parent=51 // pred_check_branch
          %394 = sbr.rel (%p392) target = $region68
        $region67: #{tpu_custom_call.1} parent=51 // pred_region
          %395 = dma.done [#allocation11], 16
        $region68: #{tpu_custom_call.1} parent=51 // pred_fallthru
          _
        %p396 = scmp.lt.s32.totalorder %s36, 1
        %s397 = scalar_select %p396, %s36, 1
        %s398 = smul.addr %s397, 2
        %s399 = smul.addr %s398, 8
        %s400 = scalar_lea.vmem %s0, %s399
        %p401 = pneg %p65
        %p402 = pneg %p62
        %s403 = sand.u32 %s80, 1
        %s404 = scalar_lea.sflag [#allocation5], %s403
        %s405 = sand.u32 %s80, 1
        %s406 = smul.addr %s405, 8
        %s407 = scalar_lea.vmem [#allocation4], %s406
        %p408 = pneg %p93
        %p409 = pneg %p90
        %p410 = pneg %p114
        %p411 = pneg %p111
        %p412 = pneg %p135
        %p413 = pneg %p132
        %p414 = pneg %p156
        %p415 = pneg %p153
        %p416 = pneg %p177
        %p417 = pneg %p174
        %p418 = pneg %p198
        %p419 = pneg %p195
        %p420 = pneg %p219
        %p421 = pneg %p216
        %p422 = pneg %p247
        %p423 = pneg %p244
        %s424 = sand.u32 %s234, 1
        %s425 = scalar_lea.sflag [#allocation6], %s424
        %s426 = sand.u32 %s234, 1
        %s427 = smul.addr %s426, 8
        %s428 = scalar_lea.vmem [#allocation12], %s427
        %p429 = pneg %p275
        %p430 = pneg %p272
        %s431 = sand.u32 %s262, 1
        %s432 = scalar_lea.sflag [#allocation14], %s431
        %s433 = sand.u32 %s262, 1
        %s434 = smul.addr %s433, 16
        %s435 = scalar_lea.vmem [#allocation13], %s434
        %p436 = scmp.lt.s32.totalorder %s36, 1
        %s437 = scalar_select %p436, %s36, 1
        %s438 = smul.addr %s437, 2
        %s439 = smul.addr %s438, 8
        %s440 = scalar_lea.vmem %s0, %s439
        %v441 = vld [vmem:[%s2] sm:$0x1]
        %v442 = vld [vmem:[%s3] sm:$0x1]
        %p443 = scmp.eq.s32.totalorder %s37, 0
        // Predicated region
        $region69: #{tpu_custom_call.1} parent=51 // pred_check
          %p444 = pneg %p443
        $region70: #{tpu_custom_call.1} parent=51 // pred_check_branch
          %446 = sbr.rel (%p444) target = $region72
        $region71: #{tpu_custom_call.1} parent=51 // pred_region
          %v447 = vld [vmem:[%s440] sm:$0xff]
          %v448 = vld [vmem:[%s440 + $0x8] sm:$0xff]
          %vm449 = vcmask 261120
          %v450 = vsel %vm449, %v447, 0.0
          %451 = vadd.xlane.f32.xlu0 %v450
          %v452 = vpop.xlane.xlu0 %451
          %v453 = vsel %vm449, %v448, 0.0
          %454 = vadd.xlane.f32.xlu0 %v453
          %v455 = vpop.xlane.xlu0 %454
          %v456 = vrcp.pop 32.0
          %v457 = vmul.f32 %v452, %v456
          %v458 = vmul.f32 %v455, %v456
          %v459 = vsub.f32 %v447, %v457
          %v460 = vsub.f32 %v448, %v458
          %v461 = vmul.f32 %v459, %v459
          %v462 = vmul.f32 %v460, %v460
          %v463 = vsel %vm449, %v461, 0.0
          %464 = vadd.xlane.f32.xlu0 %v463
          %v465 = vpop.xlane.xlu0 %464
          %v466 = vsel %vm449, %v462, 0.0
          %467 = vadd.xlane.f32.xlu0 %v466
          %v468 = vpop.xlane.xlu0 %467
          %v469 = vmul.f32 %v465, %v456
          %v470 = vmul.f32 %v468, %v456
          %v471 = vadd.f32 %v469, 1e-05
          %v472 = vadd.f32 %v470, 1e-05
          %v473 = vrsqrt.pop %v471
          %v474 = vrsqrt.pop %v472
          %v475 = vmul.f32 %v459, %v473
          %v476 = vmul.f32 %v460, %v474
          %v478 = vlaneseq
          %v479 = vshrl.u32 %v478, 7
          %v480 = vsub.s32 0, %v479
          %v481 = vrot.slane %v441, %v480
          %v483 = vmul.f32 %v475, %v481
          %v484 = vmul.f32 %v476, %v481
          %v486 = vlaneseq
          %v487 = vshrl.u32 %v486, 7
          %v488 = vsub.s32 0, %v487
          %v489 = vrot.slane %v442, %v488
          %v491 = vadd.f32 %v483, %v489
          %v492 = vadd.f32 %v484, %v489
          %v493 = vld [vmem:[#allocation7] sm:$0xff]
          %v494 = vld [vmem:[#allocation7 + $0x8] sm:$0xff]
          %v495 = vld [vmem:[#allocation7 + $0x10] sm:$0xff]
          %v496 = vld [vmem:[#allocation7 + $0x18] sm:$0xff]
          %v498 = vsel %vm449, %v491, 0
          %v501 = vsel %vm449, %v492, 0
          %503 = vmatprep.subr.mxu0 0.0
          %504 = vmatpush1.msra.mxu0 %v493
          %505 = vmatprep.subr.mxu0 0.0
          %506 = vmatpush1.msra.mxu0 %v494
          %507 = vmatprep.subr.mxu0 0.0
          %508 = vmatpush1.msra.mxu0 %v495
          %509 = vmatprep.subr.mxu0 0.0
          %510 = vmatpush1.msra.mxu0 %v496
          %511 = vmatprep.subr.mxu0 0.0
          %512 = vmatpush1.msra.mxu0 0.0
          %513 = vmatprep.subr.mxu0 0.0
          %514 = vmatpush1.msra.mxu0 0.0
          %515 = vmatprep.subr.mxu0 0.0
          %516 = vmatpush1.msra.mxu0 0.0
          %517 = vmatprep.subr.mxu0 0.0
          %518 = vmatpush1.msra.mxu0 0.0
          %519 = vmatprep.subr.mxu0 0.0
          %520 = vmatpush1.msra.mxu0 0.0
          %521 = vmatprep.subr.mxu0 0.0
          %522 = vmatpush1.msra.mxu0 0.0
          %523 = vmatprep.subr.mxu0 0.0
          %524 = vmatpush1.msra.mxu0 0.0
          %525 = vmatprep.subr.mxu0 0.0
          %526 = vmatpush1.msra.mxu0 0.0
          %527 = vmatprep.subr.mxu0 0.0
          %528 = vmatpush1.msra.mxu0 0.0
          %529 = vmatprep.subr.mxu0 0.0
          %530 = vmatpush1.msra.mxu0 0.0
          %531 = vmatprep.subr.mxu0 0.0
          %532 = vmatpush1.msra.mxu0 0.0
          %533 = vmatprep.subr.mxu0 0.0
          %534 = vmatpush1.msra.mxu0 0.0
          %535 = vmatprep.subr.mxu0 0.0
          %536 = vmatpush1.msra.mxu0 0.0
          %537 = vmatprep.subr.mxu0 0.0
          %538 = vmatpush1.msra.mxu0 0.0
          %539 = vmatprep.subr.mxu0 0.0
          %540 = vmatpush1.msra.mxu0 0.0
          %541 = vmatprep.subr.mxu0 0.0
          %542 = vmatpush1.msra.mxu0 0.0
          %543 = vmatprep.subr.mxu0 0.0
          %544 = vmatpush1.msra.mxu0 0.0
          %545 = vmatprep.subr.mxu0 0.0
          %546 = vmatpush1.msra.mxu0 0.0
          %547 = vmatprep.subr.mxu0 0.0
          %548 = vmatpush1.msra.mxu0 0.0
          %549 = vmatprep.subr.mxu0 0.0
          %550 = vmatpush1.msra.mxu0 0.0
          %551 = vmatprep.subr.mxu0 0.0
          %552 = vmatpush1.msra.mxu0 0.0
          %553 = vmatprep.subr.mxu0 0.0
          %554 = vmatpush1.msra.mxu0 0.0
          %555 = vmatprep.subr.mxu0 0.0
          %556 = vmatpush1.msra.mxu0 0.0
          %557 = vmatprep.subr.mxu0 0.0
          %558 = vmatpush1.msra.mxu0 0.0
          %559 = vmatprep.subr.mxu0 0.0
          %560 = vmatpush1.msra.mxu0 0.0
          %561 = vmatprep.subr.mxu0 0.0
          %562 = vmatpush1.msra.mxu0 0.0
          %563 = vmatprep.subr.mxu0 0.0
          %564 = vmatpush1.msra.mxu0 0.0
          %565 = vmatprep.subr.mxu0 0.0
          %566 = vmatpush1.msra.mxu0 0.0
          %567 = vmatprep.mubr.f32.mxu0 0.0
          %568 = vmatmul.mubr.f32.gmra.mrb[0].mxu0 %v498
          %v569 = vpop.f32.mrb[0].mxu0
          %v570 = vadd.f32 0.0, %v569
          %v571 = vpop.f32.mrb[0].mxu0
          %572 = vmatprep.mubr.f32.mxu0 0.0
          %573 = vmatmul.mubr.f32.gmra.mrb[0].mxu0 %v501
          %v574 = vpop.f32.mrb[0].mxu0
          %v575 = vadd.f32 0.0, %v574
          %v576 = vpop.f32.mrb[0].mxu0
          %577 = vdwg.mxu0
          %580 = vrot.lane.b32.xlu0 %v570, 112
          %v581 = vpop.permute.xlu0 %580
          %582 = vrot.lane.b32.xlu0 %v575, 112
          %v583 = vpop.permute.xlu0 %582
          %v586 = vcombine.high %v570, 0.0
          %v588 = vunpack.c.l.s4 1983009808
          %v589 = vunpack.c.0.s8 %v588
          %v590 = vlaneseq
          %v591 = vshrl.u32 %v590, 7
          %v592 = vsub.s32 %v589, %v591
          %v593 = vrot.slane %v570, %v592
          %v595 = vunpack.c.l.s4 1983009808
          %v596 = vunpack.c.0.s8 %v595
          %v597 = vlaneseq
          %v598 = vshrl.u32 %v597, 7
          %v599 = vsub.s32 %v596, %v598
          %v600 = vrot.slane %v586, %v599
          %v601 = vcombine.high %v581, 0.0
          %v603 = vunpack.c.l.s4 1983009808
          %v604 = vunpack.c.0.s8 %v603
          %v605 = vlaneseq
          %v606 = vshrl.u32 %v605, 7
          %v607 = vsub.s32 %v604, %v606
          %v608 = vrot.slane %v581, %v607
          %v610 = vunpack.c.l.s4 1983009808
          %v611 = vunpack.c.0.s8 %v610
          %v612 = vlaneseq
          %v613 = vshrl.u32 %v612, 7
          %v614 = vsub.s32 %v611, %v613
          %v615 = vrot.slane %v601, %v614
          %v616 = vcombine.low %v593, %v608
          %v617 = vcombine.high %v593, %v608
          %v619 = vunpack.c.l.s4 1934713408
          %v620 = vunpack.c.0.s8 %v619
          %v621 = vlaneseq
          %v622 = vshrl.u32 %v621, 7
          %v623 = vsub.s32 %v620, %v622
          %v624 = vrot.slane %v616, %v623
          %v626 = vunpack.c.l.s4 1934713408
          %v627 = vunpack.c.0.s8 %v626
          %v628 = vlaneseq
          %v629 = vshrl.u32 %v628, 7
          %v630 = vsub.s32 %v627, %v629
          %v631 = vrot.slane %v617, %v630
          %v632 = vcombine.low %v600, %v615
          %v633 = vcombine.high %v600, %v615
          %v635 = vunpack.c.l.s4 1934713408
          %v636 = vunpack.c.0.s8 %v635
          %v637 = vlaneseq
          %v638 = vshrl.u32 %v637, 7
          %v639 = vsub.s32 %v636, %v638
          %v640 = vrot.slane %v632, %v639
          %v642 = vunpack.c.l.s4 1934713408
          %v643 = vunpack.c.0.s8 %v642
          %v644 = vlaneseq
          %v645 = vshrl.u32 %v644, 7
          %v646 = vsub.s32 %v643, %v645
          %v647 = vrot.slane %v633, %v646
          %v648 = vcombine.high %v624, 0.0
          %v649 = vcombine.high %v631, 0.0
          %v650 = vcombine.high %v640, 0.0
          %v651 = vcombine.high %v647, 0.0
          %v652 = vcombine.high %v575, 0.0
          %v654 = vunpack.c.l.s4 1983009808
          %v655 = vunpack.c.0.s8 %v654
          %v656 = vlaneseq
          %v657 = vshrl.u32 %v656, 7
          %v658 = vsub.s32 %v655, %v657
          %v659 = vrot.slane %v575, %v658
          %v661 = vunpack.c.l.s4 1983009808
          %v662 = vunpack.c.0.s8 %v661
          %v663 = vlaneseq
          %v664 = vshrl.u32 %v663, 7
          %v665 = vsub.s32 %v662, %v664
          %v666 = vrot.slane %v652, %v665
          %v667 = vcombine.high %v583, 0.0
          %v669 = vunpack.c.l.s4 1983009808
          %v670 = vunpack.c.0.s8 %v669
          %v671 = vlaneseq
          %v672 = vshrl.u32 %v671, 7
          %v673 = vsub.s32 %v670, %v672
          %v674 = vrot.slane %v583, %v673
          %v676 = vunpack.c.l.s4 1983009808
          %v677 = vunpack.c.0.s8 %v676
          %v678 = vlaneseq
          %v679 = vshrl.u32 %v678, 7
          %v680 = vsub.s32 %v677, %v679
          %v681 = vrot.slane %v667, %v680
          %v682 = vcombine.low %v659, %v674
          %v683 = vcombine.high %v659, %v674
          %v685 = vunpack.c.l.s4 1934713408
          %v686 = vunpack.c.0.s8 %v685
          %v687 = vlaneseq
          %v688 = vshrl.u32 %v687, 7
          %v689 = vsub.s32 %v686, %v688
          %v690 = vrot.slane %v682, %v689
          %v692 = vunpack.c.l.s4 1934713408
          %v693 = vunpack.c.0.s8 %v692
          %v694 = vlaneseq
          %v695 = vshrl.u32 %v694, 7
          %v696 = vsub.s32 %v693, %v695
          %v697 = vrot.slane %v683, %v696
          %v698 = vcombine.low %v666, %v681
          %v699 = vcombine.high %v666, %v681
          %v701 = vunpack.c.l.s4 1934713408
          %v702 = vunpack.c.0.s8 %v701
          %v703 = vlaneseq
          %v704 = vshrl.u32 %v703, 7
          %v705 = vsub.s32 %v702, %v704
          %v706 = vrot.slane %v698, %v705
          %v708 = vunpack.c.l.s4 1934713408
          %v709 = vunpack.c.0.s8 %v708
          %v710 = vlaneseq
          %v711 = vshrl.u32 %v710, 7
          %v712 = vsub.s32 %v709, %v711
          %v713 = vrot.slane %v699, %v712
          %v714 = vcombine.high %v690, 0.0
          %v715 = vcombine.high %v697, 0.0
          %v716 = vcombine.high %v706, 0.0
          %v717 = vcombine.high %v713, 0.0
          %v718 = vcombine.low %v624, %v631
          %v720 = vunpack.c.l.s4 1983009808
          %v721 = vunpack.c.0.s8 %v720
          %v722 = vlaneseq
          %v723 = vshrl.u32 %v722, 7
          %v724 = vsub.s32 %v721, %v723
          %v725 = vrot.slane %v718, %v724
          %v726 = vcombine.low %v648, %v649
          %v728 = vunpack.c.l.s4 1983009808
          %v729 = vunpack.c.0.s8 %v728
          %v730 = vlaneseq
          %v731 = vshrl.u32 %v730, 7
          %v732 = vsub.s32 %v729, %v731
          %v733 = vrot.slane %v726, %v732
          %v734 = vcombine.low %v640, %v647
          %v736 = vunpack.c.l.s4 1983009808
          %v737 = vunpack.c.0.s8 %v736
          %v738 = vlaneseq
          %v739 = vshrl.u32 %v738, 7
          %v740 = vsub.s32 %v737, %v739
          %v741 = vrot.slane %v734, %v740
          %v742 = vcombine.low %v650, %v651
          %v744 = vunpack.c.l.s4 1983009808
          %v745 = vunpack.c.0.s8 %v744
          %v746 = vlaneseq
          %v747 = vshrl.u32 %v746, 7
          %v748 = vsub.s32 %v745, %v747
          %v749 = vrot.slane %v742, %v748
          %v750 = vcombine.low %v725, %v733
          %v752 = vunpack.c.l.s4 1934713408
          %v753 = vunpack.c.0.s8 %v752
          %v754 = vlaneseq
          %v755 = vshrl.u32 %v754, 7
          %v756 = vsub.s32 %v753, %v755
          %v757 = vrot.slane %v750, %v756
          %v758 = vcombine.low %v741, %v749
          %v760 = vunpack.c.l.s4 1934713408
          %v761 = vunpack.c.0.s8 %v760
          %v762 = vlaneseq
          %v763 = vshrl.u32 %v762, 7
          %v764 = vsub.s32 %v761, %v763
          %v765 = vrot.slane %v758, %v764
          %v766 = vcombine.low %v757, %v765
          %v767 = vcombine.high %v757, %v765
          %v768 = vcombine.low %v690, %v697
          %v770 = vunpack.c.l.s4 1983009808
          %v771 = vunpack.c.0.s8 %v770
          %v772 = vlaneseq
          %v773 = vshrl.u32 %v772, 7
          %v774 = vsub.s32 %v771, %v773
          %v775 = vrot.slane %v768, %v774
          %v776 = vcombine.low %v714, %v715
          %v778 = vunpack.c.l.s4 1983009808
          %v779 = vunpack.c.0.s8 %v778
          %v780 = vlaneseq
          %v781 = vshrl.u32 %v780, 7
          %v782 = vsub.s32 %v779, %v781
          %v783 = vrot.slane %v776, %v782
          %v784 = vcombine.low %v706, %v713
          %v786 = vunpack.c.l.s4 1983009808
          %v787 = vunpack.c.0.s8 %v786
          %v788 = vlaneseq
          %v789 = vshrl.u32 %v788, 7
          %v790 = vsub.s32 %v787, %v789
          %v791 = vrot.slane %v784, %v790
          %v792 = vcombine.low %v716, %v717
          %v794 = vunpack.c.l.s4 1983009808
          %v795 = vunpack.c.0.s8 %v794
          %v796 = vlaneseq
          %v797 = vshrl.u32 %v796, 7
          %v798 = vsub.s32 %v795, %v797
          %v799 = vrot.slane %v792, %v798
          %v800 = vcombine.low %v775, %v783
          %v802 = vunpack.c.l.s4 1934713408
          %v803 = vunpack.c.0.s8 %v802
          %v804 = vlaneseq
          %v805 = vshrl.u32 %v804, 7
          %v806 = vsub.s32 %v803, %v805
          %v807 = vrot.slane %v800, %v806
          %v808 = vcombine.low %v791, %v799
          %v810 = vunpack.c.l.s4 1934713408
          %v811 = vunpack.c.0.s8 %v810
          %v812 = vlaneseq
          %v813 = vshrl.u32 %v812, 7
          %v814 = vsub.s32 %v811, %v813
          %v815 = vrot.slane %v808, %v814
          %v816 = vcombine.low %v807, %v815
          %v817 = vcombine.high %v807, %v815
          %vm818 = vcmask 130048
          %819 = vst.msk [vmem:[#allocation2] sm:$0xff] %vm818, %v766
          %820 = vst.msk [vmem:[#allocation2 + $0x8] sm:$0xff] %vm818, %v816
          %821 = vst.msk [vmem:[#allocation2 + $0x10] sm:$0xff] %vm818, %v767
          %822 = vst.msk [vmem:[#allocation2 + $0x18] sm:$0xff] %vm818, %v817
          %823 = vrot.lane.b32.xlu0 %v570, 96
          %v824 = vpop.permute.xlu0 %823
          %825 = vrot.lane.b32.xlu0 %v575, 96
          %v826 = vpop.permute.xlu0 %825
          %827 = vrot.lane.b32.xlu0 %v581, 96
          %v828 = vpop.permute.xlu0 %827
          %829 = vrot.lane.b32.xlu0 %v583, 96
          %v830 = vpop.permute.xlu0 %829
          %v835 = vcombine.high %v824, 0.0
          %v837 = vunpack.c.l.s4 1983009808
          %v838 = vunpack.c.0.s8 %v837
          %v839 = vlaneseq
          %v840 = vshrl.u32 %v839, 7
          %v841 = vsub.s32 %v838, %v840
          %v842 = vrot.slane %v824, %v841
          %v844 = vunpack.c.l.s4 1983009808
          %v845 = vunpack.c.0.s8 %v844
          %v846 = vlaneseq
          %v847 = vshrl.u32 %v846, 7
          %v848 = vsub.s32 %v845, %v847
          %v849 = vrot.slane %v835, %v848
          %v850 = vcombine.high %v828, 0.0
          %v852 = vunpack.c.l.s4 1983009808
          %v853 = vunpack.c.0.s8 %v852
          %v854 = vlaneseq
          %v855 = vshrl.u32 %v854, 7
          %v856 = vsub.s32 %v853, %v855
          %v857 = vrot.slane %v828, %v856
          %v859 = vunpack.c.l.s4 1983009808
          %v860 = vunpack.c.0.s8 %v859
          %v861 = vlaneseq
          %v862 = vshrl.u32 %v861, 7
          %v863 = vsub.s32 %v860, %v862
          %v864 = vrot.slane %v850, %v863
          %v865 = vcombine.low %v842, %v857
          %v866 = vcombine.high %v842, %v857
          %v868 = vunpack.c.l.s4 1934713408
          %v869 = vunpack.c.0.s8 %v868
          %v870 = vlaneseq
          %v871 = vshrl.u32 %v870, 7
          %v872 = vsub.s32 %v869, %v871
          %v873 = vrot.slane %v865, %v872
          %v875 = vunpack.c.l.s4 1934713408
          %v876 = vunpack.c.0.s8 %v875
          %v877 = vlaneseq
          %v878 = vshrl.u32 %v877, 7
          %v879 = vsub.s32 %v876, %v878
          %v880 = vrot.slane %v866, %v879
          %v881 = vcombine.low %v849, %v864
          %v882 = vcombine.high %v849, %v864
          %v884 = vunpack.c.l.s4 1934713408
          %v885 = vunpack.c.0.s8 %v884
          %v886 = vlaneseq
          %v887 = vshrl.u32 %v886, 7
          %v888 = vsub.s32 %v885, %v887
          %v889 = vrot.slane %v881, %v888
          %v891 = vunpack.c.l.s4 1934713408
          %v892 = vunpack.c.0.s8 %v891
          %v893 = vlaneseq
          %v894 = vshrl.u32 %v893, 7
          %v895 = vsub.s32 %v892, %v894
          %v896 = vrot.slane %v882, %v895
          %v897 = vcombine.high %v873, 0.0
          %v898 = vcombine.high %v880, 0.0
          %v899 = vcombine.high %v889, 0.0
          %v900 = vcombine.high %v896, 0.0
          %v901 = vcombine.high %v826, 0.0
          %v903 = vunpack.c.l.s4 1983009808
          %v904 = vunpack.c.0.s8 %v903
          %v905 = vlaneseq
          %v906 = vshrl.u32 %v905, 7
          %v907 = vsub.s32 %v904, %v906
          %v908 = vrot.slane %v826, %v907
          %v910 = vunpack.c.l.s4 1983009808
          %v911 = vunpack.c.0.s8 %v910
          %v912 = vlaneseq
          %v913 = vshrl.u32 %v912, 7
          %v914 = vsub.s32 %v911, %v913
          %v915 = vrot.slane %v901, %v914
          %v916 = vcombine.high %v830, 0.0
          %v918 = vunpack.c.l.s4 1983009808
          %v919 = vunpack.c.0.s8 %v918
          %v920 = vlaneseq
          %v921 = vshrl.u32 %v920, 7
          %v922 = vsub.s32 %v919, %v921
          %v923 = vrot.slane %v830, %v922
          %v925 = vunpack.c.l.s4 1983009808
          %v926 = vunpack.c.0.s8 %v925
          %v927 = vlaneseq
          %v928 = vshrl.u32 %v927, 7
          %v929 = vsub.s32 %v926, %v928
          %v930 = vrot.slane %v916, %v929
          %v931 = vcombine.low %v908, %v923
          %v932 = vcombine.high %v908, %v923
          %v934 = vunpack.c.l.s4 1934713408
          %v935 = vunpack.c.0.s8 %v934
          %v936 = vlaneseq
          %v937 = vshrl.u32 %v936, 7
          %v938 = vsub.s32 %v935, %v937
          %v939 = vrot.slane %v931, %v938
          %v941 = vunpack.c.l.s4 1934713408
          %v942 = vunpack.c.0.s8 %v941
          %v943 = vlaneseq
          %v944 = vshrl.u32 %v943, 7
          %v945 = vsub.s32 %v942, %v944
          %v946 = vrot.slane %v932, %v945
          %v947 = vcombine.low %v915, %v930
          %v948 = vcombine.high %v915, %v930
          %v950 = vunpack.c.l.s4 1934713408
          %v951 = vunpack.c.0.s8 %v950
          %v952 = vlaneseq
          %v953 = vshrl.u32 %v952, 7
          %v954 = vsub.s32 %v951, %v953
          %v955 = vrot.slane %v947, %v954
          %v957 = vunpack.c.l.s4 1934713408
          %v958 = vunpack.c.0.s8 %v957
          %v959 = vlaneseq
          %v960 = vshrl.u32 %v959, 7
          %v961 = vsub.s32 %v958, %v960
          %v962 = vrot.slane %v948, %v961
          %v963 = vcombine.high %v939, 0.0
          %v964 = vcombine.high %v946, 0.0
          %v965 = vcombine.high %v955, 0.0
          %v966 = vcombine.high %v962, 0.0
          %v967 = vcombine.low %v873, %v880
          %v969 = vunpack.c.l.s4 1983009808
          %v970 = vunpack.c.0.s8 %v969
          %v971 = vlaneseq
          %v972 = vshrl.u32 %v971, 7
          %v973 = vsub.s32 %v970, %v972
          %v974 = vrot.slane %v967, %v973
          %v975 = vcombine.low %v897, %v898
          %v977 = vunpack.c.l.s4 1983009808
          %v978 = vunpack.c.0.s8 %v977
          %v979 = vlaneseq
          %v980 = vshrl.u32 %v979, 7
          %v981 = vsub.s32 %v978, %v980
          %v982 = vrot.slane %v975, %v981
          %v983 = vcombine.low %v889, %v896
          %v985 = vunpack.c.l.s4 1983009808
          %v986 = vunpack.c.0.s8 %v985
          %v987 = vlaneseq
          %v988 = vshrl.u32 %v987, 7
          %v989 = vsub.s32 %v986, %v988
          %v990 = vrot.slane %v983, %v989
          %v991 = vcombine.low %v899, %v900
          %v993 = vunpack.c.l.s4 1983009808
          %v994 = vunpack.c.0.s8 %v993
          %v995 = vlaneseq
          %v996 = vshrl.u32 %v995, 7
          %v997 = vsub.s32 %v994, %v996
          %v998 = vrot.slane %v991, %v997
          %v999 = vcombine.low %v974, %v982
          %v1001 = vunpack.c.l.s4 1934713408
          %v1002 = vunpack.c.0.s8 %v1001
          %v1003 = vlaneseq
          %v1004 = vshrl.u32 %v1003, 7
          %v1005 = vsub.s32 %v1002, %v1004
          %v1006 = vrot.slane %v999, %v1005
          %v1007 = vcombine.low %v990, %v998
          %v1009 = vunpack.c.l.s4 1934713408
          %v1010 = vunpack.c.0.s8 %v1009
          %v1011 = vlaneseq
          %v1012 = vshrl.u32 %v1011, 7
          %v1013 = vsub.s32 %v1010, %v1012
          %v1014 = vrot.slane %v1007, %v1013
          %v1015 = vcombine.low %v1006, %v1014
          %v1016 = vcombine.high %v1006, %v1014
          %v1017 = vcombine.low %v939, %v946
          %v1019 = vunpack.c.l.s4 1983009808
          %v1020 = vunpack.c.0.s8 %v1019
          %v1021 = vlaneseq
          %v1022 = vshrl.u32 %v1021, 7
          %v1023 = vsub.s32 %v1020, %v1022
          %v1024 = vrot.slane %v1017, %v1023
          %v1025 = vcombine.low %v963, %v964
          %v1027 = vunpack.c.l.s4 1983009808
          %v1028 = vunpack.c.0.s8 %v1027
          %v1029 = vlaneseq
          %v1030 = vshrl.u32 %v1029, 7
          %v1031 = vsub.s32 %v1028, %v1030
          %v1032 = vrot.slane %v1025, %v1031
          %v1033 = vcombine.low %v955, %v962
          %v1035 = vunpack.c.l.s4 1983009808
          %v1036 = vunpack.c.0.s8 %v1035
          %v1037 = vlaneseq
          %v1038 = vshrl.u32 %v1037, 7
          %v1039 = vsub.s32 %v1036, %v1038
          %v1040 = vrot.slane %v1033, %v1039
          %v1041 = vcombine.low %v965, %v966
          %v1043 = vunpack.c.l.s4 1983009808
          %v1044 = vunpack.c.0.s8 %v1043
          %v1045 = vlaneseq
          %v1046 = vshrl.u32 %v1045, 7
          %v1047 = vsub.s32 %v1044, %v1046
          %v1048 = vrot.slane %v1041, %v1047
          %v1049 = vcombine.low %v1024, %v1032
          %v1051 = vunpack.c.l.s4 1934713408
          %v1052 = vunpack.c.0.s8 %v1051
          %v1053 = vlaneseq
          %v1054 = vshrl.u32 %v1053, 7
          %v1055 = vsub.s32 %v1052, %v1054
          %v1056 = vrot.slane %v1049, %v1055
          %v1057 = vcombine.low %v1040, %v1048
          %v1059 = vunpack.c.l.s4 1934713408
          %v1060 = vunpack.c.0.s8 %v1059
          %v1061 = vlaneseq
          %v1062 = vshrl.u32 %v1061, 7
          %v1063 = vsub.s32 %v1060, %v1062
          %v1064 = vrot.slane %v1057, %v1063
          %v1065 = vcombine.low %v1056, %v1064
          %v1066 = vcombine.high %v1056, %v1064
          %1067 = vst.msk [vmem:[#allocation3] sm:$0xff] %vm818, %v1015
          %1068 = vst.msk [vmem:[#allocation3 + $0x8] sm:$0xff] %vm818, %v1065
          %1069 = vst.msk [vmem:[#allocation3 + $0x10] sm:$0xff] %vm818, %v1016
          %1070 = vst.msk [vmem:[#allocation3 + $0x18] sm:$0xff] %vm818, %v1066
        $region72: #{tpu_custom_call.1} parent=51 // pred_fallthru
          _
        %v1071 = vld [vmem:[%s379] sm:$0xff]
        %vm1072 = vcmask 261120
        %v1073 = vsel %vm1072, %v1071, 0.0
        %1074 = vadd.xlane.f32.xlu0 %v1073
        %v1075 = vpop.xlane.xlu0 %1074
        %v1076 = vrcp.pop 32.0
        %v1077 = vmul.f32 %v1075, %v1076
        %v1078 = vsub.f32 %v1071, %v1077
        %v1079 = vmul.f32 %v1078, %v1078
        %v1080 = vsel %vm1072, %v1079, 0.0
        %1081 = vadd.xlane.f32.xlu0 %v1080
        %v1082 = vpop.xlane.xlu0 %1081
        %v1083 = vmul.f32 %v1082, %v1076
        %v1084 = vadd.f32 %v1083, 1e-05
        %v1085 = vrsqrt.pop %v1084
        %v1086 = vmul.f32 %v1078, %v1085
        %v1088 = vlaneseq
        %v1089 = vshrl.u32 %v1088, 7
        %v1090 = vsub.s32 0, %v1089
        %v1091 = vrot.slane %v441, %v1090
        %v1093 = vmul.f32 %v1086, %v1091
        %v1095 = vlaneseq
        %v1096 = vshrl.u32 %v1095, 7
        %v1097 = vsub.s32 0, %v1096
        %v1098 = vrot.slane %v442, %v1097
        %v1100 = vadd.f32 %v1093, %v1098
        %v1101 = vld [vmem:[%s4] sm:$0xff]
        %v1102 = vld [vmem:[%s4 + $0x8] sm:$0xff]
        %v1103 = vld [vmem:[%s4 + $0x10] sm:$0xff]
        %v1104 = vld [vmem:[%s4 + $0x18] sm:$0xff]
        %v1106 = vsel %vm1072, %v1100, 0
        %1108 = vmatprep.subr.mxu0 0.0
        %1109 = vmatpush1.msra.mxu0 %v1101
        %1110 = vmatprep.subr.mxu0 0.0
        %1111 = vmatpush1.msra.mxu0 %v1102
        %1112 = vmatprep.subr.mxu0 0.0
        %1113 = vmatpush1.msra.mxu0 %v1103
        %1114 = vmatprep.subr.mxu0 0.0
        %1115 = vmatpush1.msra.mxu0 %v1104
        %1116 = vmatprep.subr.mxu0 0.0
        %1117 = vmatpush1.msra.mxu0 0.0
        %1118 = vmatprep.subr.mxu0 0.0
        %1119 = vmatpush1.msra.mxu0 0.0
        %1120 = vmatprep.subr.mxu0 0.0
        %1121 = vmatpush1.msra.mxu0 0.0
        %1122 = vmatprep.subr.mxu0 0.0
        %1123 = vmatpush1.msra.mxu0 0.0
        %1124 = vmatprep.subr.mxu0 0.0
        %1125 = vmatpush1.msra.mxu0 0.0
        %1126 = vmatprep.subr.mxu0 0.0
        %1127 = vmatpush1.msra.mxu0 0.0
        %1128 = vmatprep.subr.mxu0 0.0
        %1129 = vmatpush1.msra.mxu0 0.0
        %1130 = vmatprep.subr.mxu0 0.0
        %1131 = vmatpush1.msra.mxu0 0.0
        %1132 = vmatprep.subr.mxu0 0.0
        %1133 = vmatpush1.msra.mxu0 0.0
        %1134 = vmatprep.subr.mxu0 0.0
        %1135 = vmatpush1.msra.mxu0 0.0
        %1136 = vmatprep.subr.mxu0 0.0
        %1137 = vmatpush1.msra.mxu0 0.0
        %1138 = vmatprep.subr.mxu0 0.0
        %1139 = vmatpush1.msra.mxu0 0.0
        %1140 = vmatprep.subr.mxu0 0.0
        %1141 = vmatpush1.msra.mxu0 0.0
        %1142 = vmatprep.subr.mxu0 0.0
        %1143 = vmatpush1.msra.mxu0 0.0
        %1144 = vmatprep.subr.mxu0 0.0
        %1145 = vmatpush1.msra.mxu0 0.0
        %1146 = vmatprep.subr.mxu0 0.0
        %1147 = vmatpush1.msra.mxu0 0.0
        %1148 = vmatprep.subr.mxu0 0.0
        %1149 = vmatpush1.msra.mxu0 0.0
        %1150 = vmatprep.subr.mxu0 0.0
        %1151 = vmatpush1.msra.mxu0 0.0
        %1152 = vmatprep.subr.mxu0 0.0
        %1153 = vmatpush1.msra.mxu0 0.0
        %1154 = vmatprep.subr.mxu0 0.0
        %1155 = vmatpush1.msra.mxu0 0.0
        %1156 = vmatprep.subr.mxu0 0.0
        %1157 = vmatpush1.msra.mxu0 0.0
        %1158 = vmatprep.subr.mxu0 0.0
        %1159 = vmatpush1.msra.mxu0 0.0
        %1160 = vmatprep.subr.mxu0 0.0
        %1161 = vmatpush1.msra.mxu0 0.0
        %1162 = vmatprep.subr.mxu0 0.0
        %1163 = vmatpush1.msra.mxu0 0.0
        %1164 = vmatprep.subr.mxu0 0.0
        %1165 = vmatpush1.msra.mxu0 0.0
        %1166 = vmatprep.subr.mxu0 0.0
        %1167 = vmatpush1.msra.mxu0 0.0
        %1168 = vmatprep.subr.mxu0 0.0
        %1169 = vmatpush1.msra.mxu0 0.0
        %1170 = vmatprep.subr.mxu0 0.0
        %1171 = vmatpush1.msra.mxu0 0.0
        %1172 = vmatprep.mubr.f32.mxu0 0.0
        %1173 = vmatmul.mubr.f32.gmra.mrb[0].mxu0 %v1106
        %v1174 = vpop.f32.mrb[0].mxu0
        %v1175 = vadd.f32 0.0, %v1174
        %v1176 = vpop.f32.mrb[0].mxu0
        %1177 = vdwg.mxu0
        %v1178 = vmul.f32 %v1175, 0.25
        %1180 = vrot.lane.b32.xlu0 %v1178, 112
        %v1181 = vpop.permute.xlu0 %1180
        %v1183 = vcombine.high %v1178, 0.0
        %v1185 = vunpack.c.l.s4 1983009808
        %v1186 = vunpack.c.0.s8 %v1185
        %v1187 = vlaneseq
        %v1188 = vshrl.u32 %v1187, 7
        %v1189 = vsub.s32 %v1186, %v1188
        %v1190 = vrot.slane %v1178, %v1189
        %v1192 = vunpack.c.l.s4 1983009808
        %v1193 = vunpack.c.0.s8 %v1192
        %v1194 = vlaneseq
        %v1195 = vshrl.u32 %v1194, 7
        %v1196 = vsub.s32 %v1193, %v1195
        %v1197 = vrot.slane %v1183, %v1196
        %v1198 = vcombine.high %v1181, 0.0
        %v1200 = vunpack.c.l.s4 1983009808
        %v1201 = vunpack.c.0.s8 %v1200
        %v1202 = vlaneseq
        %v1203 = vshrl.u32 %v1202, 7
        %v1204 = vsub.s32 %v1201, %v1203
        %v1205 = vrot.slane %v1181, %v1204
        %v1207 = vunpack.c.l.s4 1983009808
        %v1208 = vunpack.c.0.s8 %v1207
        %v1209 = vlaneseq
        %v1210 = vshrl.u32 %v1209, 7
        %v1211 = vsub.s32 %v1208, %v1210
        %v1212 = vrot.slane %v1198, %v1211
        %v1213 = vcombine.low %v1190, %v1205
        %v1214 = vcombine.high %v1190, %v1205
        %v1216 = vunpack.c.l.s4 1934713408
        %v1217 = vunpack.c.0.s8 %v1216
        %v1218 = vlaneseq
        %v1219 = vshrl.u32 %v1218, 7
        %v1220 = vsub.s32 %v1217, %v1219
        %v1221 = vrot.slane %v1213, %v1220
        %v1223 = vunpack.c.l.s4 1934713408
        %v1224 = vunpack.c.0.s8 %v1223
        %v1225 = vlaneseq
        %v1226 = vshrl.u32 %v1225, 7
        %v1227 = vsub.s32 %v1224, %v1226
        %v1228 = vrot.slane %v1214, %v1227
        %v1229 = vcombine.low %v1197, %v1212
        %v1230 = vcombine.high %v1197, %v1212
        %v1232 = vunpack.c.l.s4 1934713408
        %v1233 = vunpack.c.0.s8 %v1232
        %v1234 = vlaneseq
        %v1235 = vshrl.u32 %v1234, 7
        %v1236 = vsub.s32 %v1233, %v1235
        %v1237 = vrot.slane %v1229, %v1236
        %v1239 = vunpack.c.l.s4 1934713408
        %v1240 = vunpack.c.0.s8 %v1239
        %v1241 = vlaneseq
        %v1242 = vshrl.u32 %v1241, 7
        %v1243 = vsub.s32 %v1240, %v1242
        %v1244 = vrot.slane %v1230, %v1243
        %v1245 = vcombine.high %v1221, 0.0
        %v1246 = vcombine.high %v1228, 0.0
        %v1247 = vcombine.high %v1237, 0.0
        %v1248 = vcombine.high %v1244, 0.0
        %v1249 = vcombine.low %v1221, %v1228
        %v1251 = vunpack.c.l.s4 1983009808
        %v1252 = vunpack.c.0.s8 %v1251
        %v1253 = vlaneseq
        %v1254 = vshrl.u32 %v1253, 7
        %v1255 = vsub.s32 %v1252, %v1254
        %v1256 = vrot.slane %v1249, %v1255
        %v1257 = vcombine.low %v1245, %v1246
        %v1259 = vunpack.c.l.s4 1983009808
        %v1260 = vunpack.c.0.s8 %v1259
        %v1261 = vlaneseq
        %v1262 = vshrl.u32 %v1261, 7
        %v1263 = vsub.s32 %v1260, %v1262
        %v1264 = vrot.slane %v1257, %v1263
        %v1265 = vcombine.low %v1237, %v1244
        %v1267 = vunpack.c.l.s4 1983009808
        %v1268 = vunpack.c.0.s8 %v1267
        %v1269 = vlaneseq
        %v1270 = vshrl.u32 %v1269, 7
        %v1271 = vsub.s32 %v1268, %v1270
        %v1272 = vrot.slane %v1265, %v1271
        %v1273 = vcombine.low %v1247, %v1248
        %v1275 = vunpack.c.l.s4 1983009808
        %v1276 = vunpack.c.0.s8 %v1275
        %v1277 = vlaneseq
        %v1278 = vshrl.u32 %v1277, 7
        %v1279 = vsub.s32 %v1276, %v1278
        %v1280 = vrot.slane %v1273, %v1279
        %v1281 = vcombine.low %v1256, %v1264
        %v1283 = vunpack.c.l.s4 1934713408
        %v1284 = vunpack.c.0.s8 %v1283
        %v1285 = vlaneseq
        %v1286 = vshrl.u32 %v1285, 7
        %v1287 = vsub.s32 %v1284, %v1286
        %v1288 = vrot.slane %v1281, %v1287
        %v1289 = vcombine.low %v1272, %v1280
        %v1291 = vunpack.c.l.s4 1934713408
        %v1292 = vunpack.c.0.s8 %v1291
        %v1293 = vlaneseq
        %v1294 = vshrl.u32 %v1293, 7
        %v1295 = vsub.s32 %v1292, %v1294
        %v1296 = vrot.slane %v1289, %v1295
        %v1297 = vcombine.low %v1288, %v1296
        %v1298 = vcombine.high %v1288, %v1296
        %v1299 = vld [vmem:[#allocation2] sm:$0xff]
        %v1300 = vld [vmem:[#allocation2 + $0x8] sm:$0xff]
        %v1301 = vld [vmem:[#allocation2 + $0x10] sm:$0xff]
        %v1302 = vld [vmem:[#allocation2 + $0x18] sm:$0xff]
        %v1303 = vld [vmem:[#allocation3] sm:$0xff]
        %v1304 = vld [vmem:[#allocation3 + $0x8] sm:$0xff]
        %v1305 = vld [vmem:[#allocation3 + $0x10] sm:$0xff]
        %v1306 = vld [vmem:[#allocation3 + $0x18] sm:$0xff]
        %vm1307 = vcmask 130048
        %v1309 = vsel %vm1307, %v1297, 0
        %v1312 = vsel %vm1307, %v1299, 0
        %v1315 = vsel %vm1307, %v1300, 0
        %1317 = vmatprep.subr.mxu0 0.0
        %1318 = vmatpush1.xpose.msra.mxu0 %v1312
        %1319 = vmatprep.subr.mxu0 0.0
        %1320 = vmatpush1.xpose.msra.mxu0 %v1315
        %1321 = vmatprep.subr.mxu0 0.0
        %1322 = vmatpush1.xpose.msra.mxu0 0.0
        %1323 = vmatprep.subr.mxu0 0.0
        %1324 = vmatpush1.xpose.msra.mxu0 0.0
        %1325 = vmatprep.subr.mxu0 0.0
        %1326 = vmatpush1.xpose.msra.mxu0 0.0
        %1327 = vmatprep.subr.mxu0 0.0
        %1328 = vmatpush1.xpose.msra.mxu0 0.0
        %1329 = vmatprep.subr.mxu0 0.0
        %1330 = vmatpush1.xpose.msra.mxu0 0.0
        %1331 = vmatprep.subr.mxu0 0.0
        %1332 = vmatpush1.xpose.msra.mxu0 0.0
        %1333 = vmatprep.subr.mxu0 0.0
        %1334 = vmatpush1.xpose.msra.mxu0 0.0
        %1335 = vmatprep.subr.mxu0 0.0
        %1336 = vmatpush1.xpose.msra.mxu0 0.0
        %1337 = vmatprep.subr.mxu0 0.0
        %1338 = vmatpush1.xpose.msra.mxu0 0.0
        %1339 = vmatprep.subr.mxu0 0.0
        %1340 = vmatpush1.xpose.msra.mxu0 0.0
        %1341 = vmatprep.subr.mxu0 0.0
        %1342 = vmatpush1.xpose.msra.mxu0 0.0
        %1343 = vmatprep.subr.mxu0 0.0
        %1344 = vmatpush1.xpose.msra.mxu0 0.0
        %1345 = vmatprep.subr.mxu0 0.0
        %1346 = vmatpush1.xpose.msra.mxu0 0.0
        %1347 = vmatprep.subr.mxu0 0.0
        %1348 = vmatpush1.xpose.msra.mxu0 0.0
        %1349 = vmatprep.subr.mxu0 0.0
        %1350 = vmatpush1.xpose.msra.mxu0 0.0
        %1351 = vmatprep.subr.mxu0 0.0
        %1352 = vmatpush1.xpose.msra.mxu0 0.0
        %1353 = vmatprep.subr.mxu0 0.0
        %1354 = vmatpush1.xpose.msra.mxu0 0.0
        %1355 = vmatprep.subr.mxu0 0.0
        %1356 = vmatpush1.xpose.msra.mxu0 0.0
        %1357 = vmatprep.subr.mxu0 0.0
        %1358 = vmatpush1.xpose.msra.mxu0 0.0
        %1359 = vmatprep.subr.mxu0 0.0
        %1360 = vmatpush1.xpose.msra.mxu0 0.0
        %1361 = vmatprep.subr.mxu0 0.0
        %1362 = vmatpush1.xpose.msra.mxu0 0.0
        %1363 = vmatprep.subr.mxu0 0.0
        %1364 = vmatpush1.xpose.msra.mxu0 0.0
        %1365 = vmatprep.subr.mxu0 0.0
        %1366 = vmatpush1.xpose.msra.mxu0 0.0
        %1367 = vmatprep.subr.mxu0 0.0
        %1368 = vmatpush1.xpose.msra.mxu0 0.0
        %1369 = vmatprep.subr.mxu0 0.0
        %1370 = vmatpush1.xpose.msra.mxu0 0.0
        %1371 = vmatprep.subr.mxu0 0.0
        %1372 = vmatpush1.xpose.msra.mxu0 0.0
        %1373 = vmatprep.subr.mxu0 0.0
        %1374 = vmatpush1.xpose.msra.mxu0 0.0
        %1375 = vmatprep.subr.mxu0 0.0
        %1376 = vmatpush1.xpose.msra.mxu0 0.0
        %1377 = vmatprep.subr.mxu0 0.0
        %1378 = vmatpush1.xpose.msra.mxu0 0.0
        %1379 = vmatprep.subr.mxu0 0.0
        %1380 = vmatpush1.xpose.msra.mxu0 0.0
        %1381 = vmatprep.mubr.f32.mxu0 0.0
        %1382 = vmatmul.mubr.f32.gmra.mrb[0].mxu0 %v1309
        %v1383 = vpop.f32.mrb[0].mxu0
        %v1384 = vadd.f32 0.0, %v1383
        %v1385 = vpop.f32.mrb[0].mxu0
        %1386 = vdwg.mxu0
        %v1388 = vsel %vm1307, %v1298, 0
        %v1391 = vsel %vm1307, %v1301, 0
        %v1394 = vsel %vm1307, %v1302, 0
        %1396 = vmatprep.subr.mxu0 0.0
        %1397 = vmatpush1.xpose.msra.mxu0 %v1391
        %1398 = vmatprep.subr.mxu0 0.0
        %1399 = vmatpush1.xpose.msra.mxu0 %v1394
        %1400 = vmatprep.subr.mxu0 0.0
        %1401 = vmatpush1.xpose.msra.mxu0 0.0
        %1402 = vmatprep.subr.mxu0 0.0
        %1403 = vmatpush1.xpose.msra.mxu0 0.0
        %1404 = vmatprep.subr.mxu0 0.0
        %1405 = vmatpush1.xpose.msra.mxu0 0.0
        %1406 = vmatprep.subr.mxu0 0.0
        %1407 = vmatpush1.xpose.msra.mxu0 0.0
        %1408 = vmatprep.subr.mxu0 0.0
        %1409 = vmatpush1.xpose.msra.mxu0 0.0
        %1410 = vmatprep.subr.mxu0 0.0
        %1411 = vmatpush1.xpose.msra.mxu0 0.0
        %1412 = vmatprep.subr.mxu0 0.0
        %1413 = vmatpush1.xpose.msra.mxu0 0.0
        %1414 = vmatprep.subr.mxu0 0.0
        %1415 = vmatpush1.xpose.msra.mxu0 0.0
        %1416 = vmatprep.subr.mxu0 0.0
        %1417 = vmatpush1.xpose.msra.mxu0 0.0
        %1418 = vmatprep.subr.mxu0 0.0
        %1419 = vmatpush1.xpose.msra.mxu0 0.0
        %1420 = vmatprep.subr.mxu0 0.0
        %1421 = vmatpush1.xpose.msra.mxu0 0.0
        %1422 = vmatprep.subr.mxu0 0.0
        %1423 = vmatpush1.xpose.msra.mxu0 0.0
        %1424 = vmatprep.subr.mxu0 0.0
        %1425 = vmatpush1.xpose.msra.mxu0 0.0
        %1426 = vmatprep.subr.mxu0 0.0
        %1427 = vmatpush1.xpose.msra.mxu0 0.0
        %1428 = vmatprep.subr.mxu0 0.0
        %1429 = vmatpush1.xpose.msra.mxu0 0.0
        %1430 = vmatprep.subr.mxu0 0.0
        %1431 = vmatpush1.xpose.msra.mxu0 0.0
        %1432 = vmatprep.subr.mxu0 0.0
        %1433 = vmatpush1.xpose.msra.mxu0 0.0
        %1434 = vmatprep.subr.mxu0 0.0
        %1435 = vmatpush1.xpose.msra.mxu0 0.0
        %1436 = vmatprep.subr.mxu0 0.0
        %1437 = vmatpush1.xpose.msra.mxu0 0.0
        %1438 = vmatprep.subr.mxu0 0.0
        %1439 = vmatpush1.xpose.msra.mxu0 0.0
        %1440 = vmatprep.subr.mxu0 0.0
        %1441 = vmatpush1.xpose.msra.mxu0 0.0
        %1442 = vmatprep.subr.mxu0 0.0
        %1443 = vmatpush1.xpose.msra.mxu0 0.0
        %1444 = vmatprep.subr.mxu0 0.0
        %1445 = vmatpush1.xpose.msra.mxu0 0.0
        %1446 = vmatprep.subr.mxu0 0.0
        %1447 = vmatpush1.xpose.msra.mxu0 0.0
        %1448 = vmatprep.subr.mxu0 0.0
        %1449 = vmatpush1.xpose.msra.mxu0 0.0
        %1450 = vmatprep.subr.mxu0 0.0
        %1451 = vmatpush1.xpose.msra.mxu0 0.0
        %1452 = vmatprep.subr.mxu0 0.0
        %1453 = vmatpush1.xpose.msra.mxu0 0.0
        %1454 = vmatprep.subr.mxu0 0.0
        %1455 = vmatpush1.xpose.msra.mxu0 0.0
        %1456 = vmatprep.subr.mxu0 0.0
        %1457 = vmatpush1.xpose.msra.mxu0 0.0
        %1458 = vmatprep.subr.mxu0 0.0
        %1459 = vmatpush1.xpose.msra.mxu0 0.0
        %1460 = vmatprep.mubr.f32.mxu0 0.0
        %1461 = vmatmul.mubr.f32.gmra.mrb[0].mxu0 %v1388
        %v1462 = vpop.f32.mrb[0].mxu0
        %v1463 = vadd.f32 0.0, %v1462
        %v1464 = vpop.f32.mrb[0].mxu0
        %1465 = vdwg.mxu0
        %v1466 = vsel %vm1307, %v1384, -inf
        %1467 = vmax.xlane.f32.xlu0 %v1466
        %v1468 = vpop.xlane.xlu0 %1467
        %v1469 = vsel %vm1307, %v1463, -inf
        %1470 = vmax.xlane.f32.xlu0 %v1469
        %v1471 = vpop.xlane.xlu0 %1470
        %v1472 = vsub.f32 %v1384, %v1468
        %v1473 = vsub.f32 %v1463, %v1471
        %v1474 = vmul.f32 %v1472, 1.442695
        %v1475 = vpow.pop %v1474
        %v1476 = vmul.f32 %v1473, 1.442695
        %v1477 = vpow.pop %v1476
        %v1478 = vsel %vm1307, %v1475, 0.0
        %1479 = vadd.xlane.f32.xlu0 %v1478
        %v1480 = vpop.xlane.xlu0 %1479
        %v1481 = vsel %vm1307, %v1477, 0.0
        %1482 = vadd.xlane.f32.xlu0 %v1481
        %v1483 = vpop.xlane.xlu0 %1482
        %v1484 = vrcp.pop %v1480
        %v1485 = vrcp.pop %v1483
        %v1486 = vmul.f32 %v1475, %v1484
        %v1487 = vmul.f32 %v1477, %v1485
        %1488 = vst.msk [vmem:[%s435] sm:$0xff] %vm1307, %v1486
        %1489 = vst.msk [vmem:[%s435 + $0x8] sm:$0xff] %vm1307, %v1487
        %v1491 = vsel %vm1307, %v1486, 0
        %1493 = vmatprep.subr.mxu0 0.0
        %1494 = vmatpush1.msra.mxu0 %v1303
        %1495 = vmatprep.subr.mxu0 0.0
        %1496 = vmatpush1.msra.mxu0 %v1304
        %1497 = vmatprep.subr.mxu0 0.0
        %1498 = vmatpush1.msra.mxu0 0.0
        %1499 = vmatprep.subr.mxu0 0.0
        %1500 = vmatpush1.msra.mxu0 0.0
        %1501 = vmatprep.subr.mxu0 0.0
        %1502 = vmatpush1.msra.mxu0 0.0
        %1503 = vmatprep.subr.mxu0 0.0
        %1504 = vmatpush1.msra.mxu0 0.0
        %1505 = vmatprep.subr.mxu0 0.0
        %1506 = vmatpush1.msra.mxu0 0.0
        %1507 = vmatprep.subr.mxu0 0.0
        %1508 = vmatpush1.msra.mxu0 0.0
        %1509 = vmatprep.subr.mxu0 0.0
        %1510 = vmatpush1.msra.mxu0 0.0
        %1511 = vmatprep.subr.mxu0 0.0
        %1512 = vmatpush1.msra.mxu0 0.0
        %1513 = vmatprep.subr.mxu0 0.0
        %1514 = vmatpush1.msra.mxu0 0.0
        %1515 = vmatprep.subr.mxu0 0.0
        %1516 = vmatpush1.msra.mxu0 0.0
        %1517 = vmatprep.subr.mxu0 0.0
        %1518 = vmatpush1.msra.mxu0 0.0
        %1519 = vmatprep.subr.mxu0 0.0
        %1520 = vmatpush1.msra.mxu0 0.0
        %1521 = vmatprep.subr.mxu0 0.0
        %1522 = vmatpush1.msra.mxu0 0.0
        %1523 = vmatprep.subr.mxu0 0.0
        %1524 = vmatpush1.msra.mxu0 0.0
        %1525 = vmatprep.subr.mxu0 0.0
        %1526 = vmatpush1.msra.mxu0 0.0
        %1527 = vmatprep.subr.mxu0 0.0
        %1528 = vmatpush1.msra.mxu0 0.0
        %1529 = vmatprep.subr.mxu0 0.0
        %1530 = vmatpush1.msra.mxu0 0.0
        %1531 = vmatprep.subr.mxu0 0.0
        %1532 = vmatpush1.msra.mxu0 0.0
        %1533 = vmatprep.subr.mxu0 0.0
        %1534 = vmatpush1.msra.mxu0 0.0
        %1535 = vmatprep.subr.mxu0 0.0
        %1536 = vmatpush1.msra.mxu0 0.0
        %1537 = vmatprep.subr.mxu0 0.0
        %1538 = vmatpush1.msra.mxu0 0.0
        %1539 = vmatprep.subr.mxu0 0.0
        %1540 = vmatpush1.msra.mxu0 0.0
        %1541 = vmatprep.subr.mxu0 0.0
        %1542 = vmatpush1.msra.mxu0 0.0
        %1543 = vmatprep.subr.mxu0 0.0
        %1544 = vmatpush1.msra.mxu0 0.0
        %1545 = vmatprep.subr.mxu0 0.0
        %1546 = vmatpush1.msra.mxu0 0.0
        %1547 = vmatprep.subr.mxu0 0.0
        %1548 = vmatpush1.msra.mxu0 0.0
        %1549 = vmatprep.subr.mxu0 0.0
        %1550 = vmatpush1.msra.mxu0 0.0
        %1551 = vmatprep.subr.mxu0 0.0
        %1552 = vmatpush1.msra.mxu0 0.0
        %1553 = vmatprep.subr.mxu0 0.0
        %1554 = vmatpush1.msra.mxu0 0.0
        %1555 = vmatprep.subr.mxu0 0.0
        %1556 = vmatpush1.msra.mxu0 0.0
        %1557 = vmatprep.mubr.f32.mxu0 0.0
        %1558 = vmatmul.mubr.f32.gmra.mrb[0].mxu0 %v1491
        %v1559 = vpop.f32.mrb[0].mxu0
        %v1560 = vadd.f32 0.0, %v1559
        %v1561 = vpop.f32.mrb[0].mxu0
        %1562 = vdwg.mxu0
        %v1564 = vsel %vm1307, %v1487, 0
        %1566 = vmatprep.subr.mxu0 0.0
        %1567 = vmatpush1.msra.mxu0 %v1305
        %1568 = vmatprep.subr.mxu0 0.0
        %1569 = vmatpush1.msra.mxu0 %v1306
        %1570 = vmatprep.subr.mxu0 0.0
        %1571 = vmatpush1.msra.mxu0 0.0
        %1572 = vmatprep.subr.mxu0 0.0
        %1573 = vmatpush1.msra.mxu0 0.0
        %1574 = vmatprep.subr.mxu0 0.0
        %1575 = vmatpush1.msra.mxu0 0.0
        %1576 = vmatprep.subr.mxu0 0.0
        %1577 = vmatpush1.msra.mxu0 0.0
        %1578 = vmatprep.subr.mxu0 0.0
        %1579 = vmatpush1.msra.mxu0 0.0
        %1580 = vmatprep.subr.mxu0 0.0
        %1581 = vmatpush1.msra.mxu0 0.0
        %1582 = vmatprep.subr.mxu0 0.0
        %1583 = vmatpush1.msra.mxu0 0.0
        %1584 = vmatprep.subr.mxu0 0.0
        %1585 = vmatpush1.msra.mxu0 0.0
        %1586 = vmatprep.subr.mxu0 0.0
        %1587 = vmatpush1.msra.mxu0 0.0
        %1588 = vmatprep.subr.mxu0 0.0
        %1589 = vmatpush1.msra.mxu0 0.0
        %1590 = vmatprep.subr.mxu0 0.0
        %1591 = vmatpush1.msra.mxu0 0.0
        %1592 = vmatprep.subr.mxu0 0.0
        %1593 = vmatpush1.msra.mxu0 0.0
        %1594 = vmatprep.subr.mxu0 0.0
        %1595 = vmatpush1.msra.mxu0 0.0
        %1596 = vmatprep.subr.mxu0 0.0
        %1597 = vmatpush1.msra.mxu0 0.0
        %1598 = vmatprep.subr.mxu0 0.0
        %1599 = vmatpush1.msra.mxu0 0.0
        %1600 = vmatprep.subr.mxu0 0.0
        %1601 = vmatpush1.msra.mxu0 0.0
        %1602 = vmatprep.subr.mxu0 0.0
        %1603 = vmatpush1.msra.mxu0 0.0
        %1604 = vmatprep.subr.mxu0 0.0
        %1605 = vmatpush1.msra.mxu0 0.0
        %1606 = vmatprep.subr.mxu0 0.0
        %1607 = vmatpush1.msra.mxu0 0.0
        %1608 = vmatprep.subr.mxu0 0.0
        %1609 = vmatpush1.msra.mxu0 0.0
        %1610 = vmatprep.subr.mxu0 0.0
        %1611 = vmatpush1.msra.mxu0 0.0
        %1612 = vmatprep.subr.mxu0 0.0
        %1613 = vmatpush1.msra.mxu0 0.0
        %1614 = vmatprep.subr.mxu0 0.0
        %1615 = vmatpush1.msra.mxu0 0.0
        %1616 = vmatprep.subr.mxu0 0.0
        %1617 = vmatpush1.msra.mxu0 0.0
        %1618 = vmatprep.subr.mxu0 0.0
        %1619 = vmatpush1.msra.mxu0 0.0
        %1620 = vmatprep.subr.mxu0 0.0
        %1621 = vmatpush1.msra.mxu0 0.0
        %1622 = vmatprep.subr.mxu0 0.0
        %1623 = vmatpush1.msra.mxu0 0.0
        %1624 = vmatprep.subr.mxu0 0.0
        %1625 = vmatpush1.msra.mxu0 0.0
        %1626 = vmatprep.subr.mxu0 0.0
        %1627 = vmatpush1.msra.mxu0 0.0
        %1628 = vmatprep.subr.mxu0 0.0
        %1629 = vmatpush1.msra.mxu0 0.0
        %1630 = vmatprep.mubr.f32.mxu0 0.0
        %1631 = vmatmul.mubr.f32.gmra.mrb[0].mxu0 %v1564
        %v1632 = vpop.f32.mrb[0].mxu0
        %v1633 = vadd.f32 0.0, %v1632
        %v1634 = vpop.f32.mrb[0].mxu0
        %1635 = vdwg.mxu0
        %v1636 = vld [vmem:[#allocation9] sm:$0xff]
        %v1637 = vld [vmem:[#allocation9 + $0x8] sm:$0xff]
        %v1638 = vld [vmem:[#allocation9 + $0x10] sm:$0xff]
        %v1639 = vld [vmem:[#allocation9 + $0x18] sm:$0xff]
        %v1641 = vsel %vm1307, %v1560, 0
        %1643 = vmatprep.subr.mxu0 0.0
        %1644 = vmatpush1.msra.mxu0 %v1636
        %1645 = vmatprep.subr.mxu0 0.0
        %1646 = vmatpush1.msra.mxu0 %v1637
        %1647 = vmatprep.subr.mxu0 0.0
        %1648 = vmatpush1.msra.mxu0 0.0
        %1649 = vmatprep.subr.mxu0 0.0
        %1650 = vmatpush1.msra.mxu0 0.0
        %1651 = vmatprep.subr.mxu0 0.0
        %1652 = vmatpush1.msra.mxu0 0.0
        %1653 = vmatprep.subr.mxu0 0.0
        %1654 = vmatpush1.msra.mxu0 0.0
        %1655 = vmatprep.subr.mxu0 0.0
        %1656 = vmatpush1.msra.mxu0 0.0
        %1657 = vmatprep.subr.mxu0 0.0
        %1658 = vmatpush1.msra.mxu0 0.0
        %1659 = vmatprep.subr.mxu0 0.0
        %1660 = vmatpush1.msra.mxu0 0.0
        %1661 = vmatprep.subr.mxu0 0.0
        %1662 = vmatpush1.msra.mxu0 0.0
        %1663 = vmatprep.subr.mxu0 0.0
        %1664 = vmatpush1.msra.mxu0 0.0
        %1665 = vmatprep.subr.mxu0 0.0
        %1666 = vmatpush1.msra.mxu0 0.0
        %1667 = vmatprep.subr.mxu0 0.0
        %1668 = vmatpush1.msra.mxu0 0.0
        %1669 = vmatprep.subr.mxu0 0.0
        %1670 = vmatpush1.msra.mxu0 0.0
        %1671 = vmatprep.subr.mxu0 0.0
        %1672 = vmatpush1.msra.mxu0 0.0
        %1673 = vmatprep.subr.mxu0 0.0
        %1674 = vmatpush1.msra.mxu0 0.0
        %1675 = vmatprep.subr.mxu0 0.0
        %1676 = vmatpush1.msra.mxu0 0.0
        %1677 = vmatprep.subr.mxu0 0.0
        %1678 = vmatpush1.msra.mxu0 0.0
        %1679 = vmatprep.subr.mxu0 0.0
        %1680 = vmatpush1.msra.mxu0 0.0
        %1681 = vmatprep.subr.mxu0 0.0
        %1682 = vmatpush1.msra.mxu0 0.0
        %1683 = vmatprep.subr.mxu0 0.0
        %1684 = vmatpush1.msra.mxu0 0.0
        %1685 = vmatprep.subr.mxu0 0.0
        %1686 = vmatpush1.msra.mxu0 0.0
        %1687 = vmatprep.subr.mxu0 0.0
        %1688 = vmatpush1.msra.mxu0 0.0
        %1689 = vmatprep.subr.mxu0 0.0
        %1690 = vmatpush1.msra.mxu0 0.0
        %1691 = vmatprep.subr.mxu0 0.0
        %1692 = vmatpush1.msra.mxu0 0.0
        %1693 = vmatprep.subr.mxu0 0.0
        %1694 = vmatpush1.msra.mxu0 0.0
        %1695 = vmatprep.subr.mxu0 0.0
        %1696 = vmatpush1.msra.mxu0 0.0
        %1697 = vmatprep.subr.mxu0 0.0
        %1698 = vmatpush1.msra.mxu0 0.0
        %1699 = vmatprep.subr.mxu0 0.0
        %1700 = vmatpush1.msra.mxu0 0.0
        %1701 = vmatprep.subr.mxu0 0.0
        %1702 = vmatpush1.msra.mxu0 0.0
        %1703 = vmatprep.subr.mxu0 0.0
        %1704 = vmatpush1.msra.mxu0 0.0
        %1705 = vmatprep.subr.mxu0 0.0
        %1706 = vmatpush1.msra.mxu0 0.0
        %1707 = vmatprep.mubr.f32.mxu0 0.0
        %1708 = vmatmul.mubr.f32.gmra.mrb[0].mxu0 %v1641
        %v1709 = vpop.f32.mrb[0].mxu0
        %v1710 = vadd.f32 0.0, %v1709
        %v1711 = vpop.f32.mrb[0].mxu0
        %1712 = vdwg.mxu0
        %v1714 = vsel %vm1307, %v1633, 0
        %1716 = vmatprep.subr.mxu0 0.0
        %1717 = vmatpush1.msra.mxu0 %v1638
        %1718 = vmatprep.subr.mxu0 0.0
        %1719 = vmatpush1.msra.mxu0 %v1639
        %1720 = vmatprep.subr.mxu0 0.0
        %1721 = vmatpush1.msra.mxu0 0.0
        %1722 = vmatprep.subr.mxu0 0.0
        %1723 = vmatpush1.msra.mxu0 0.0
        %1724 = vmatprep.subr.mxu0 0.0
        %1725 = vmatpush1.msra.mxu0 0.0
        %1726 = vmatprep.subr.mxu0 0.0
        %1727 = vmatpush1.msra.mxu0 0.0
        %1728 = vmatprep.subr.mxu0 0.0
        %1729 = vmatpush1.msra.mxu0 0.0
        %1730 = vmatprep.subr.mxu0 0.0
        %1731 = vmatpush1.msra.mxu0 0.0
        %1732 = vmatprep.subr.mxu0 0.0
        %1733 = vmatpush1.msra.mxu0 0.0
        %1734 = vmatprep.subr.mxu0 0.0
        %1735 = vmatpush1.msra.mxu0 0.0
        %1736 = vmatprep.subr.mxu0 0.0
        %1737 = vmatpush1.msra.mxu0 0.0
        %1738 = vmatprep.subr.mxu0 0.0
        %1739 = vmatpush1.msra.mxu0 0.0
        %1740 = vmatprep.subr.mxu0 0.0
        %1741 = vmatpush1.msra.mxu0 0.0
        %1742 = vmatprep.subr.mxu0 0.0
        %1743 = vmatpush1.msra.mxu0 0.0
        %1744 = vmatprep.subr.mxu0 0.0
        %1745 = vmatpush1.msra.mxu0 0.0
        %1746 = vmatprep.subr.mxu0 0.0
        %1747 = vmatpush1.msra.mxu0 0.0
        %1748 = vmatprep.subr.mxu0 0.0
        %1749 = vmatpush1.msra.mxu0 0.0
        %1750 = vmatprep.subr.mxu0 0.0
        %1751 = vmatpush1.msra.mxu0 0.0
        %1752 = vmatprep.subr.mxu0 0.0
        %1753 = vmatpush1.msra.mxu0 0.0
        %1754 = vmatprep.subr.mxu0 0.0
        %1755 = vmatpush1.msra.mxu0 0.0
        %1756 = vmatprep.subr.mxu0 0.0
        %1757 = vmatpush1.msra.mxu0 0.0
        %1758 = vmatprep.subr.mxu0 0.0
        %1759 = vmatpush1.msra.mxu0 0.0
        %1760 = vmatprep.subr.mxu0 0.0
        %1761 = vmatpush1.msra.mxu0 0.0
        %1762 = vmatprep.subr.mxu0 0.0
        %1763 = vmatpush1.msra.mxu0 0.0
        %1764 = vmatprep.subr.mxu0 0.0
        %1765 = vmatpush1.msra.mxu0 0.0
        %1766 = vmatprep.subr.mxu0 0.0
        %1767 = vmatpush1.msra.mxu0 0.0
        %1768 = vmatprep.subr.mxu0 0.0
        %1769 = vmatpush1.msra.mxu0 0.0
        %1770 = vmatprep.subr.mxu0 0.0
        %1771 = vmatpush1.msra.mxu0 0.0
        %1772 = vmatprep.subr.mxu0 0.0
        %1773 = vmatpush1.msra.mxu0 0.0
        %1774 = vmatprep.subr.mxu0 0.0
        %1775 = vmatpush1.msra.mxu0 0.0
        %1776 = vmatprep.subr.mxu0 0.0
        %1777 = vmatpush1.msra.mxu0 0.0
        %1778 = vmatprep.subr.mxu0 0.0
        %1779 = vmatpush1.msra.mxu0 0.0
        %1780 = vmatprep.mubr.f32.mxu0 0.0
        %1781 = vmatmul.mubr.f32.gmra.mrb[0].mxu0 %v1714
        %v1782 = vpop.f32.mrb[0].mxu0
        %v1783 = vadd.f32 0.0, %v1782
        %v1784 = vpop.f32.mrb[0].mxu0
        %1785 = vdwg.mxu0
        %v1786 = vsel %vm1072, %v1710, 0.0
        %v1787 = vsel %vm1072, %v1783, 0.0
        %v1788 = vadd.f32 %v1786, %v1787
        %v1789 = vadd.f32 %v1788, 0.0
        %v1790 = vld [vmem:[#allocation10] sm:$0x1]
        %v1792 = vlaneseq
        %v1793 = vshrl.u32 %v1792, 7
        %v1794 = vsub.s32 0, %v1793
        %v1795 = vrot.slane %v1790, %v1794
        %v1797 = vadd.f32 %v1789, %v1795
        %v1798 = vadd.f32 %v1071, %v1797
        %1799 = vst.msk [vmem:[%s428] sm:$0xff] %vm1072, %v1798
        %s1800 = sand.u32 %s234, 1
        %s1801 = scalar_lea.sflag [#allocation6], %s1800
        %s1802 = sand.u32 %s234, 1
        %s1803 = smul.addr %s1802, 8
        %s1804 = scalar_lea.vmem [#allocation12], %s1803
        %s1805 = sand.u32 %s262, 1
        %s1806 = scalar_lea.sflag [#allocation14], %s1805
        %s1807 = sand.u32 %s262, 1
        %s1808 = smul.addr %s1807, 16
        %s1809 = scalar_lea.vmem [#allocation13], %s1808
        // Predicated region
        $region73: #{tpu_custom_call.1} parent=51 // pred_check
          %p1810 = pneg %p244
        $region74: #{tpu_custom_call.1} parent=51 // pred_check_branch
          %1812 = sbr.rel (%p1810) target = $region76
        $region75: #{tpu_custom_call.1} parent=51 // pred_region
          %s1814 = ssub.s32 128, 128
          %1815 = vsyncadd %s1801, %s1814
          %s1816 = smul.addr %s36, 2
          %s1817 = sadd.s32 %s37, %s1816
          %s1818 = smul.addr %s1817, 128
          %s1819 = scalar_lea.hbm %s8, %s1818
          %s1821 = sshll.u32 %s1804, 4
          %s1822 = int_to_ptr.vmem [resolvable:$true] %s1821
          %1824 = dma.vmem_to_hbm [thread:$0]  %s1822, 128, %s1819, %s1801
        $region76: #{tpu_custom_call.1} parent=51 // pred_fallthru
          _
        // Predicated region
        $region77: #{tpu_custom_call.1} parent=51 // pred_check
          %p1825 = pneg %p272
        $region78: #{tpu_custom_call.1} parent=51 // pred_check_branch
          %1827 = sbr.rel (%p1825) target = $region80
        $region79: #{tpu_custom_call.1} parent=51 // pred_region
          %s1829 = ssub.s32 256, 256
          %1830 = vsyncadd %s1806, %s1829
          %s1831 = smul.addr %s36, 4
          %s1832 = sadd.s32 %s37, %s1831
          %s1833 = smul.addr %s1832, 128
          %s1834 = scalar_lea.hbm %s9, %s1833
          %s1835 = sshll.u32 %s1809, 4
          %s1836 = int_to_ptr.vmem [resolvable:$true] %s1835
          %1841 = dma.vmem_to_hbm [thread:$0]  %s1836, 256, %s1834, %s1806, 128, 256, 8
        $region80: #{tpu_custom_call.1} parent=51 // pred_fallthru
          _
      $region52: #{tpu_custom_call.1} parent=5 // pred_fallthru
        _
      %p1842 = scmp.le.s32.totalorder 2, %s27
      // Predicated region
      $region81: #{tpu_custom_call.1} parent=5 // pred_check
        %p1843 = pneg %p1842
      $region82: #{tpu_custom_call.1} parent=5 // pred_check_branch
        %1845 = sbr.rel (%p1843) target = $region84
      $region83: #{tpu_custom_call.1} parent=5 // pred_region
        %s1846 = ssub.s32 %s27, 2
        // Predicated region
        $region85: #{tpu_custom_call.1} parent=83 // pred_check
          %p1847 = pneg %p250
        $region86: #{tpu_custom_call.1} parent=83 // pred_check_branch
          %1849 = sbr.rel (%p1847) target = $region88
        $region87: #{tpu_custom_call.1} parent=83 // pred_region
          %s1850 = sand.u32 %s235, 1
          %s1851 = scalar_lea.sflag [#allocation6], %s1850
          %s1852 = sand.u32 %s235, 1
          %s1853 = smul.addr %s1852, 8
          %s1854 = scalar_lea.vmem [#allocation12], %s1853
          %1855 = dma.done %s1851, 128
        $region88: #{tpu_custom_call.1} parent=83 // pred_fallthru
          _
        // Predicated region
        $region89: #{tpu_custom_call.1} parent=83 // pred_check
          %p1856 = pneg %p278
        $region90: #{tpu_custom_call.1} parent=83 // pred_check_branch
          %1858 = sbr.rel (%p1856) target = $region92
        $region91: #{tpu_custom_call.1} parent=83 // pred_region
          %s1859 = sand.u32 %s263, 1
          %s1860 = scalar_lea.sflag [#allocation14], %s1859
          %s1861 = sand.u32 %s263, 1
          %s1862 = smul.addr %s1861, 16
          %s1863 = scalar_lea.vmem [#allocation13], %s1862
          %1864 = dma.done %s1860, 256
        $region92: #{tpu_custom_call.1} parent=83 // pred_fallthru
          _
      $region84: #{tpu_custom_call.1} parent=5 // pred_fallthru
        _
    $region6: #{tpu_custom_call.1} parent=1 // loop_footer
      %s31 = sadd.s32 1, %s27
    $region7: #{tpu_custom_call.1} parent=1 // loop_footer_branch
      %26 = sbr.rel target = $region3
    $region8: #{tpu_custom_call.1} parent=1 // loop_exit
      _
    %1865 = vsyncpa [#allocation5], 1
    %s1866 = scalar_lea.sflag [#allocation5], 1
    %1867 = vsyncpa %s1866, 1
    %1868 = vsyncpa [#allocation8], 1
    %1869 = vsyncpa [#allocation11], 1
    %1870 = vsyncpa [#allocation6], 1
    %s1871 = scalar_lea.sflag [#allocation6], 1
    %1872 = vsyncpa %s1871, 1
    %1873 = vsyncpa [#allocation14], 1
    %s1874 = scalar_lea.sflag [#allocation14], 1
    %1875 = vsyncpa %s1874, 1

</llo_original>
